<compile_context>
chip_gen: v6e
topology: v6e:2x2x1
jax: 0.10.0
libtpu: 0.0.40
codegen_flags: <defaults>
</compile_context>

<pallas_src>
import math

import jax
import jax.numpy as jnp
from jax import lax
from jax.experimental import pallas as pl
from jax.experimental.pallas import tpu as pltpu

MAIN_HID = 96
GROUPS = 4
GCH = MAIN_HID // GROUPS          # 24 channels / group
HEADS = 2
HEAD_DIM = 48                     # Hopfield hidden_size per head
HEAD_PAD = 128                    # per-head slab padded to a full 128-lane group
OUT_DIM = 5
EMB2_CH = 18
PS_HID = 48                       # HopfieldConvNet hid_channels
PS_GIN = MAIN_HID // GROUPS       # 24
PS_GHID = PS_HID // GROUPS        # 12

KERNEL_PARAM_ORDER = (
    "fp_w", "fp_b", "gn_g", "gn_b", "gn_oh", "gn_oht",
    "a1_wqkv", "a1_bqkv", "a1_bo",
    "a2_wqkv", "a2_bqkv", "a2_bo",
    "ps_w1", "ps_b1", "ps_w2", "ps_b2",
    "sc1_w", "sc1_b", "bn1_s", "bn1_t",
    "sc2_wa", "sc2_wb", "sc2_b", "bn2_s", "bn2_t",
    "out_w", "out_b",
    "ffl0_b", "rz",
)
SMEM_PARAMS = ("ffl0_b", "rz")


def _mm(a, b):
    return jnp.dot(a, b, preferred_element_type=jnp.float32)


def _mm_nt(a, b):
    # a @ b.T without materializing the transpose
    return lax.dot_general(a, b, (((1,), (1,)), ((), ())),
                           preferred_element_type=jnp.float32)


def _kernel(emb_ref, bpp_ref, emb2_ref, trow_ref, tcol_ref,
            fp_w_ref, fp_b_ref, gn_g_ref, gn_b_ref, gn_oh_ref, gn_oht_ref,
            a1_wqkv_ref, a1_bqkv_ref, a1_bo_ref,
            a2_wqkv_ref, a2_bqkv_ref, a2_bo_ref,
            ps_w1_ref, ps_b1_ref, ps_w2_ref, ps_b2_ref,
            sc1_w_ref, sc1_b_ref, bn1_s_ref, bn1_t_ref,
            sc2_wa_ref, sc2_wb_ref, sc2_b_ref, bn2_s_ref, bn2_t_ref,
            out_w_ref, out_b_ref,
            ffl0_b_ref, rz_ref,
            y_ref):
    f32 = jnp.float32
    bf16 = jnp.bfloat16
    L = bpp_ref.shape[1]

    # ---------- bpp preprocessing: log-shift + fixed 3x3 conv -----------------
    # [[2,7,2],[10,40,10],[2,7,2]] == [1,5,1]^T ⊗ [2,7,2] + 5·delta_center,
    # realized as two banded bf16 matmuls (band matrices prebuilt in the wrapper).
    bpp_log = jnp.log(bpp_ref[0] + 1e-5) + 4.5                     # (L, L) f32
    inner = _mm(bpp_log.astype(bf16), tcol_ref[...])               # x @ [2,7,2] band
    mask1 = (_mm(trow_ref[...], inner.astype(bf16))                # [1,5,1] band @ .
             + 5.0 * bpp_log + ffl0_b_ref[0])
    mask0 = bpp_log

    # ---------- FirstProject (block-diagonal grouped 1x1 conv) + ReLU ---------
    y = _mm(emb_ref[0], fp_w_ref[...]) + fp_b_ref[...]             # (L, 96) f32
    y = jnp.maximum(y, 0.0)

    # ---------- GroupNorm(4, 96): channel sums -> one-hot group reduce --------
    s1 = jnp.sum(y, axis=0, keepdims=True)                         # (1, 96)
    s2 = jnp.sum(y * y, axis=0, keepdims=True)                     # (1, 96)
    inv_n = 1.0 / float(L * GCH)
    g_mu = _mm(s1, gn_oh_ref[...]) * inv_n                         # (1, 4)
    g_ex2 = _mm(s2, gn_oh_ref[...]) * inv_n                        # (1, 4)
    g_inv = lax.rsqrt(g_ex2 - g_mu * g_mu + 1e-5)                  # (1, 4)
    mu_c = _mm(g_mu, gn_oht_ref[...])                              # (1, 96)
    is_c = _mm(g_inv, gn_oht_ref[...])                             # (1, 96)
    emb_n = (y - mu_c) * (is_c * gn_g_ref[...]) + gn_b_ref[...]
    # dropout(0.15) -> identity at inference

    # TODO(synk): hflayers Hopfield internals (pattern layer-norms, update loop)
    # unavailable; with update_steps_max=1 implemented as masked 2-head attention
    # with an extra zero-association slot.  Per-head Wo is folded into Wv so each
    # head output is p @ vo directly.
    def hopfield(x, wqkv_ref, bqkv_ref, bo_ref, m0, m1):
        # fused projection: [q0|q1|k0|k1|vo0|vo1], each slab padded to 128 lanes
        qkv = (_mm(x.astype(bf16), wqkv_ref[...])
               + bqkv_ref[...]).astype(bf16)                       # (L, 768) bf16
        acc = jnp.zeros((L, HEAD_PAD), f32)
        for h, msk in enumerate((m0, m1)):
            qh = qkv[:, h * HEAD_PAD:(h + 1) * HEAD_PAD]
            kh = qkv[:, (HEADS + h) * HEAD_PAD:(HEADS + h + 1) * HEAD_PAD]
            voh = qkv[:, (2 * HEADS + h) * HEAD_PAD:
                         (2 * HEADS + h + 1) * HEAD_PAD]
            logits = _mm_nt(qh, kh) + msk                          # (L, L) f32 (q pre-scaled)
            # add_zero_association: softmax over [logits, 0]; the zero slot only
            # contributes exp(-m) to the denominator.
            m = jnp.maximum(jnp.max(logits, axis=-1, keepdims=True), 0.0)
            e = jnp.exp(logits - m)
            denom = jnp.sum(e, axis=-1, keepdims=True) + jnp.exp(-m)
            p = e * pl.reciprocal(denom, approx=True)
            acc = acc + _mm(p.astype(bf16), voh)                   # (L, 128)
        return acc[:, :MAIN_HID] + bo_ref[...]                     # (L, 96)

    rz0 = rz_ref[0]
    rz1 = rz_ref[1]
    rz2 = rz_ref[2]
    rz3 = rz_ref[3]

    # ---------- SelfAttn1 residual --------------------------------------------
    x = emb_n + rz0 * hopfield(emb_n, a1_wqkv_ref, a1_bqkv_ref, a1_bo_ref,
                               mask0, mask1)

    # ---------- PatternSearch residual ----------------------------------------
    # TODO(synk): HopfieldConvNet definition unavailable; approximated as a
    # block-diagonal (grouped) pointwise 96->48 leaky_relu -> 48->96 block.
    h1 = _mm(x.astype(bf16), ps_w1_ref[...]) + ps_b1_ref[...]      # (L, 48)
    h1 = jnp.where(h1 > 0, h1, 0.01 * h1)
    ps = _mm(h1.astype(bf16), ps_w2_ref[...]) + ps_b2_ref[...]     # (L, 96)
    x = x + rz1 * ps

    # ---------- SelfAttn2 residual (association mask / 5) ---------------------
    x = x + rz2 * hopfield(x, a2_wqkv_ref, a2_bqkv_ref, a2_bo_ref,
                           mask0 * 0.2, mask1 * 0.2)

    # ---------- SimpleConv1 -> ReLU -> BN1 (folded) ----------------------------
    h = jnp.maximum(_mm(x.astype(bf16), sc1_w_ref[...]) + sc1_b_ref[...], 0.0)
    h = h * bn1_s_ref[...] + bn1_t_ref[...]                        # dropout -> id

    # ---------- SimpleConv2 on [h, emb2] without the 114-lane concat -----------
    h2 = (_mm(h.astype(bf16), sc2_wa_ref[...]) +
          _mm(emb2_ref[0], sc2_wb_ref[...]) + sc2_b_ref[...])
    h2 = jnp.maximum(h2, 0.0)
    h2 = h2 * bn2_s_ref[...] + bn2_t_ref[...]
    xf = h + rz3 * h2

    # ---------- OutProjection, written lane-dense as (5, L) --------------------
    yt = _mm_nt(out_w_ref[...], xf.astype(bf16)) + out_b_ref[...]  # (5, L)
    y_ref[0] = yt.astype(y_ref.dtype)


# --------------------------------------------------------------------------- #
# Wrapper: weight packing + pallas_call
# --------------------------------------------------------------------------- #
def _block_diag(w):
    """(G, cin, cout) grouped 1x1-conv weight -> dense block-diagonal (G*cin, G*cout)."""
    g, ci, co = w.shape
    m = jnp.zeros((g * ci, g * co), jnp.float32)
    for k in range(g):
        m = m.at[k * ci:(k + 1) * ci, k * co:(k + 1) * co].set(w[k])
    return m


def pack_params(p):
    """Convert module-layout parameters into the fused / padded kernel layout."""
    f32, bf16 = jnp.float32, jnp.bfloat16
    kp = {}
    kp["fp_w"] = _block_diag(p["fp_w"]).astype(bf16)               # (96, 96)
    kp["fp_b"] = p["fp_b"].astype(f32)                             # (1, 96)
    kp["gn_g"] = p["gn_g"].astype(f32)
    kp["gn_b"] = p["gn_b"].astype(f32)

    # one-hot channel->group matrices for the GroupNorm reduce / broadcast
    gid = jnp.arange(MAIN_HID) // GCH
    oh = (gid[:, None] == jnp.arange(GROUPS)[None, :]).astype(f32)
    kp["gn_oh"] = oh                                               # (96, 4)
    kp["gn_oht"] = jnp.transpose(oh)                               # (4, 96)

    scale = 1.0 / math.sqrt(float(HEAD_DIM))
    for name in ("a1", "a2"):
        wqkv = p[f"{name}_wqkv"].astype(f32)                       # (3, 96, 96)
        bqkv = p[f"{name}_bqkv"].astype(f32)                       # (3, 1, 96)
        wo = p[f"{name}_wo"].astype(f32)                           # (96, 96)
        wf = jnp.zeros((MAIN_HID, 3 * HEADS * HEAD_PAD), f32)      # (96, 768)
        bf_ = jnp.zeros((1, 3 * HEADS * HEAD_PAD), f32)            # (1, 768)
        for h in range(HEADS):
            sl = slice(h * HEAD_DIM, (h + 1) * HEAD_DIM)
            wo_h = wo[sl, :]                                       # (48, 96)
            # query slab (1/sqrt(d) folded in)
            off_q = h * HEAD_PAD
            wf = wf.at[:, off_q:off_q + HEAD_DIM].set(wqkv[0][:, sl] * scale)
            bf_ = bf_.at[:, off_q:off_q + HEAD_DIM].set(bqkv[0][:, sl] * scale)
            # key slab
            off_k = (HEADS + h) * HEAD_PAD
            wf = wf.at[:, off_k:off_k + HEAD_DIM].set(wqkv[1][:, sl])
            bf_ = bf_.at[:, off_k:off_k + HEAD_DIM].set(bqkv[1][:, sl])
            # value slab with Wo folded in: vo = x @ (Wv_h @ Wo_h) + (bv_h @ Wo_h)
            off_v = (2 * HEADS + h) * HEAD_PAD
            wf = wf.at[:, off_v:off_v + MAIN_HID].set(wqkv[2][:, sl] @ wo_h)
            bf_ = bf_.at[:, off_v:off_v + MAIN_HID].set(bqkv[2][:, sl] @ wo_h)
        kp[f"{name}_wqkv"] = wf.astype(bf16)                       # (96, 768)
        kp[f"{name}_bqkv"] = bf_                                   # (1, 768) f32
        kp[f"{name}_bo"] = p[f"{name}_bo"].astype(f32)             # (1, 96)

    kp["ps_w1"] = _block_diag(p["ps_w1"]).astype(bf16)             # (96, 48)
    kp["ps_b1"] = p["ps_b1"].astype(f32)
    kp["ps_w2"] = _block_diag(p["ps_w2"]).astype(bf16)             # (48, 96)
    kp["ps_b2"] = p["ps_b2"].astype(f32)
    kp["sc1_w"] = p["sc1_w"].astype(bf16)
    kp["sc1_b"] = p["sc1_b"].astype(f32)
    kp["bn1_s"] = p["bn1_s"].astype(f32)
    kp["bn1_t"] = p["bn1_t"].astype(f32)
    kp["sc2_wa"] = p["sc2_w"][:MAIN_HID].astype(bf16)              # (96, 96)
    kp["sc2_wb"] = p["sc2_w"][MAIN_HID:].astype(bf16)              # (18, 96)
    kp["sc2_b"] = p["sc2_b"].astype(f32)
    kp["bn2_s"] = p["bn2_s"].astype(f32)
    kp["bn2_t"] = p["bn2_t"].astype(f32)
    kp["out_w"] = jnp.transpose(p["out_w"]).astype(bf16)           # (5, 96)
    kp["out_b"] = jnp.reshape(p["out_b"], (OUT_DIM, 1)).astype(f32)
    kp["ffl0_b"] = jnp.reshape(p["ffl0_b"], (1,)).astype(f32)      # SMEM scalar
    kp["rz"] = jnp.reshape(p["rz"], (GROUPS,)).astype(f32)         # SMEM scalars
    return kp


def post_process_net_final(emb, bpp, emb2, params):
    """emb: (b, 96, l), bpp: (b, l, l), emb2: (b, 18, l)  ->  (b, 5, l)."""
    b, c, l = emb.shape
    assert c == MAIN_HID and emb2.shape[1] == EMB2_CH
    kp = pack_params(params)

    emb_t = jnp.transpose(emb, (0, 2, 1)).astype(jnp.bfloat16)     # (b, l, 96)
    emb2_t = jnp.transpose(emb2, (0, 2, 1)).astype(jnp.bfloat16)   # (b, l, 18)
    bpp_f = bpp.astype(jnp.float32)

    # banded matrices for the fixed 3x3 conv, built once (bf16, resident input)
    idx = jnp.arange(l)
    ad = jnp.abs(idx[:, None] - idx[None, :])
    t_col = jnp.where(ad == 0, 7.0,
                      jnp.where(ad == 1, 2.0, 0.0)).astype(jnp.bfloat16)  # [2,7,2]
    t_row = jnp.where(ad == 0, 5.0,
                      jnp.where(ad == 1, 1.0, 0.0)).astype(jnp.bfloat16)  # [1,5,1]

    data_inputs = [emb_t, bpp_f, emb2_t]
    const_inputs = [t_row, t_col]
    weight_inputs = [kp[k] for k in KERNEL_PARAM_ORDER]

    def batched_spec(arr):
        nd = arr.ndim
        return pl.BlockSpec((1,) + arr.shape[1:],
                            lambda i, nd=nd: (i,) + (0,) * (nd - 1))

    def const_spec(arr):
        nd = arr.ndim
        return pl.BlockSpec(arr.shape, lambda i, nd=nd: (0,) * nd)

    def weight_spec(name, arr):
        if name in SMEM_PARAMS:
            return pl.BlockSpec(memory_space=pltpu.MemorySpace.SMEM)
        return const_spec(arr)

    in_specs = ([batched_spec(a) for a in data_inputs] +
                [const_spec(a) for a in const_inputs] +
                [weight_spec(k, a)
                 for k, a in zip(KERNEL_PARAM_ORDER, weight_inputs)])
    # lane-dense output: (5, L) per sample, no trailing transpose
    out_spec = pl.BlockSpec((1, OUT_DIM, l), lambda i: (i, 0, 0))

    # rough VMEM budget: ~14 (L,L)-ish f32 temporaries + qkv/activation slabs
    est = 14 * l * max(l, 128) * 4 + 10 * l * 4096 + (4 << 20)
    vmem_limit = int(min(112 << 20, max(32 << 20, est)))

    y = pl.pallas_call(
        _kernel,
        out_shape=jax.ShapeDtypeStruct((b, OUT_DIM, l), jnp.float32),
        grid=(b,),
        in_specs=in_specs,
        out_specs=out_spec,
        compiler_params=pltpu.CompilerParams(
            dimension_semantics=("parallel",),
            vmem_limit_bytes=vmem_limit),
    )(*data_inputs, *const_inputs, *weight_inputs)
    return y                                                       # (b, 5, l)


def init_params(key):
    """Deterministic synthetic parameters (shapes from the module __init__)."""
    def nrm(k, shape, scale=0.1):
        return scale * jax.random.normal(k, shape, jnp.float32)

    ks = iter(jax.random.split(key, 64))
    p = {}
    p["ffl0_b"] = jnp.full((1, 1), 0.05, jnp.float32)              # ffl0 bias
    p["fp_w"] = nrm(next(ks), (GROUPS, GCH, GCH))                  # grouped 1x1 conv
    p["fp_b"] = nrm(next(ks), (1, MAIN_HID), 0.05)
    p["gn_g"] = 1.0 + nrm(next(ks), (1, MAIN_HID), 0.05)
    p["gn_b"] = nrm(next(ks), (1, MAIN_HID), 0.05)
    for name in ("a1", "a2"):
        p[f"{name}_wqkv"] = nrm(next(ks), (3, MAIN_HID, HEADS * HEAD_DIM))
        p[f"{name}_bqkv"] = nrm(next(ks), (3, 1, HEADS * HEAD_DIM), 0.05)
        p[f"{name}_wo"] = nrm(next(ks), (HEADS * HEAD_DIM, MAIN_HID))
        p[f"{name}_bo"] = nrm(next(ks), (1, MAIN_HID), 0.05)
    p["ps_w1"] = nrm(next(ks), (GROUPS, PS_GIN, PS_GHID))
    p["ps_b1"] = nrm(next(ks), (1, PS_HID), 0.05)
    p["ps_w2"] = nrm(next(ks), (GROUPS, PS_GHID, PS_GIN))
    p["ps_b2"] = nrm(next(ks), (1, MAIN_HID), 0.05)
    p["sc1_w"] = nrm(next(ks), (MAIN_HID, MAIN_HID))
    p["sc1_b"] = nrm(next(ks), (1, MAIN_HID), 0.05)
    # BatchNorm1d (eval): running_mean=0, running_var=1 folded with affine.
    # General fold: s = gamma/sqrt(var+eps), t = beta - mean*s.
    bn1_g = 1.0 + nrm(next(ks), (1, MAIN_HID), 0.05)
    bn1_b = nrm(next(ks), (1, MAIN_HID), 0.05)
    p["bn1_s"] = bn1_g / jnp.sqrt(1.0 + 1e-5)
    p["bn1_t"] = bn1_b
    p["sc2_w"] = nrm(next(ks), (MAIN_HID + EMB2_CH, MAIN_HID))
    p["sc2_b"] = nrm(next(ks), (1, MAIN_HID), 0.05)
    bn2_g = 1.0 + nrm(next(ks), (1, MAIN_HID), 0.05)
    bn2_b = nrm(next(ks), (1, MAIN_HID), 0.05)
    p["bn2_s"] = bn2_g / jnp.sqrt(1.0 + 1e-5)
    p["bn2_t"] = bn2_b
    p["out_w"] = nrm(next(ks), (MAIN_HID, OUT_DIM))
    p["out_b"] = nrm(next(ks), (1, OUT_DIM), 0.05)
    p["rz"] = jnp.full((1, 4), 0.8, jnp.float32)                   # RZ ParameterList
    return p


if __name__ == "__main__":
    b, l = 2, 16
    key = jax.random.PRNGKey(0)
    k1, k2, k3, kp = jax.random.split(key, 4)

    emb = jax.random.normal(k1, (b, MAIN_HID, l), jnp.float32)
    bpp = jax.random.uniform(k2, (b, l, l), jnp.float32, minval=1e-4, maxval=1.0)
    emb2 = jax.random.normal(k3, (b, EMB2_CH, l), jnp.float32)
    params = init_params(kp)

    y = post_process_net_final(emb, bpp, emb2, params)
    y = jax.block_until_ready(y)

    assert y.shape == (b, OUT_DIM, l), y.shape
    assert bool(jnp.all(jnp.isfinite(y)))
    print("KERNEL_OK")
</pallas_src>

<mosaic_0001>
module attributes {stable_mosaic.version = 11 : i64} {
  func.func @_kernel(%arg0: i32, %arg1: memref<1x16x96xbf16, #tpu.memory_space<vmem>>, %arg2: memref<1x16x16xf32, #tpu.memory_space<vmem>>, %arg3: memref<1x16x18xbf16, #tpu.memory_space<vmem>>, %arg4: memref<16x16xbf16, #tpu.memory_space<vmem>>, %arg5: memref<16x16xbf16, #tpu.memory_space<vmem>>, %arg6: memref<96x96xbf16, #tpu.memory_space<vmem>>, %arg7: memref<1x96xf32, #tpu.memory_space<vmem>>, %arg8: memref<1x96xf32, #tpu.memory_space<vmem>>, %arg9: memref<1x96xf32, #tpu.memory_space<vmem>>, %arg10: memref<96x4xf32, #tpu.memory_space<vmem>>, %arg11: memref<4x96xf32, #tpu.memory_space<vmem>>, %arg12: memref<96x768xbf16, #tpu.memory_space<vmem>>, %arg13: memref<1x768xf32, #tpu.memory_space<vmem>>, %arg14: memref<1x96xf32, #tpu.memory_space<vmem>>, %arg15: memref<96x768xbf16, #tpu.memory_space<vmem>>, %arg16: memref<1x768xf32, #tpu.memory_space<vmem>>, %arg17: memref<1x96xf32, #tpu.memory_space<vmem>>, %arg18: memref<96x48xbf16, #tpu.memory_space<vmem>>, %arg19: memref<1x48xf32, #tpu.memory_space<vmem>>, %arg20: memref<48x96xbf16, #tpu.memory_space<vmem>>, %arg21: memref<1x96xf32, #tpu.memory_space<vmem>>, %arg22: memref<96x96xbf16, #tpu.memory_space<vmem>>, %arg23: memref<1x96xf32, #tpu.memory_space<vmem>>, %arg24: memref<1x96xf32, #tpu.memory_space<vmem>>, %arg25: memref<1x96xf32, #tpu.memory_space<vmem>>, %arg26: memref<96x96xbf16, #tpu.memory_space<vmem>>, %arg27: memref<18x96xbf16, #tpu.memory_space<vmem>>, %arg28: memref<1x96xf32, #tpu.memory_space<vmem>>, %arg29: memref<1x96xf32, #tpu.memory_space<vmem>>, %arg30: memref<1x96xf32, #tpu.memory_space<vmem>>, %arg31: memref<5x96xbf16, #tpu.memory_space<vmem>>, %arg32: memref<5x1xf32, #tpu.memory_space<vmem>>, %arg33: memref<1xf32, #tpu.memory_space<smem>>, %arg34: memref<4xf32, #tpu.memory_space<smem>>, %arg35: memref<1x5x16xf32, #tpu.memory_space<vmem>>) attributes {dimension_semantics = [#tpu.dimension_semantics<parallel>], iteration_bounds = array<i64: 2>, scalar_prefetch = 0 : i64, scratch_operands = 0 : i64, tpu.core_type = #tpu.core_type<tc>, window_params = [{transform_indices = @transform_0, window_bounds = array<i64: 1, 16, 96>}, {transform_indices = @transform_1, window_bounds = array<i64: 1, 16, 16>}, {transform_indices = @transform_2, window_bounds = array<i64: 1, 16, 18>}, {pipeline_mode = #tpu.pipeline_mode<synchronous>, transform_indices = @transform_3, window_bounds = array<i64: 16, 16>}, {pipeline_mode = #tpu.pipeline_mode<synchronous>, transform_indices = @transform_4, window_bounds = array<i64: 16, 16>}, {pipeline_mode = #tpu.pipeline_mode<synchronous>, transform_indices = @transform_5, window_bounds = array<i64: 96, 96>}, {pipeline_mode = #tpu.pipeline_mode<synchronous>, transform_indices = @transform_6, window_bounds = array<i64: 1, 96>}, {pipeline_mode = #tpu.pipeline_mode<synchronous>, transform_indices = @transform_7, window_bounds = array<i64: 1, 96>}, {pipeline_mode = #tpu.pipeline_mode<synchronous>, transform_indices = @transform_8, window_bounds = array<i64: 1, 96>}, {pipeline_mode = #tpu.pipeline_mode<synchronous>, transform_indices = @transform_9, window_bounds = array<i64: 96, 4>}, {pipeline_mode = #tpu.pipeline_mode<synchronous>, transform_indices = @transform_10, window_bounds = array<i64: 4, 96>}, {pipeline_mode = #tpu.pipeline_mode<synchronous>, transform_indices = @transform_11, window_bounds = array<i64: 96, 768>}, {pipeline_mode = #tpu.pipeline_mode<synchronous>, transform_indices = @transform_12, window_bounds = array<i64: 1, 768>}, {pipeline_mode = #tpu.pipeline_mode<synchronous>, transform_indices = @transform_13, window_bounds = array<i64: 1, 96>}, {pipeline_mode = #tpu.pipeline_mode<synchronous>, transform_indices = @transform_14, window_bounds = array<i64: 96, 768>}, {pipeline_mode = #tpu.pipeline_mode<synchronous>, transform_indices = @transform_15, window_bounds = array<i64: 1, 768>}, {pipeline_mode = #tpu.pipeline_mode<synchronous>, transform_indices = @transform_16, window_bounds = array<i64: 1, 96>}, {pipeline_mode = #tpu.pipeline_mode<synchronous>, transform_indices = @transform_17, window_bounds = array<i64: 96, 48>}, {pipeline_mode = #tpu.pipeline_mode<synchronous>, transform_indices = @transform_18, window_bounds = array<i64: 1, 48>}, {pipeline_mode = #tpu.pipeline_mode<synchronous>, transform_indices = @transform_19, window_bounds = array<i64: 48, 96>}, {pipeline_mode = #tpu.pipeline_mode<synchronous>, transform_indices = @transform_20, window_bounds = array<i64: 1, 96>}, {pipeline_mode = #tpu.pipeline_mode<synchronous>, transform_indices = @transform_21, window_bounds = array<i64: 96, 96>}, {pipeline_mode = #tpu.pipeline_mode<synchronous>, transform_indices = @transform_22, window_bounds = array<i64: 1, 96>}, {pipeline_mode = #tpu.pipeline_mode<synchronous>, transform_indices = @transform_23, window_bounds = array<i64: 1, 96>}, {pipeline_mode = #tpu.pipeline_mode<synchronous>, transform_indices = @transform_24, window_bounds = array<i64: 1, 96>}, {pipeline_mode = #tpu.pipeline_mode<synchronous>, transform_indices = @transform_25, window_bounds = array<i64: 96, 96>}, {pipeline_mode = #tpu.pipeline_mode<synchronous>, transform_indices = @transform_26, window_bounds = array<i64: 18, 96>}, {pipeline_mode = #tpu.pipeline_mode<synchronous>, transform_indices = @transform_27, window_bounds = array<i64: 1, 96>}, {pipeline_mode = #tpu.pipeline_mode<synchronous>, transform_indices = @transform_28, window_bounds = array<i64: 1, 96>}, {pipeline_mode = #tpu.pipeline_mode<synchronous>, transform_indices = @transform_29, window_bounds = array<i64: 1, 96>}, {pipeline_mode = #tpu.pipeline_mode<synchronous>, transform_indices = @transform_30, window_bounds = array<i64: 5, 96>}, {pipeline_mode = #tpu.pipeline_mode<synchronous>, transform_indices = @transform_31, window_bounds = array<i64: 5, 1>}, {transform_indices = @transform_32, window_bounds = array<i64: 1>}, {transform_indices = @transform_33, window_bounds = array<i64: 4>}, {transform_indices = @transform_34, window_bounds = array<i64: 1, 5, 16>}]} {
    %c0 = arith.constant 0 : index
    %c0_0 = arith.constant 0 : index
    %c0_1 = arith.constant 0 : index
    %0 = vector.load %arg2[%c0, %c0_0, %c0_1] : memref<1x16x16xf32, #tpu.memory_space<vmem>>, vector<1x16x16xf32>
    %1 = vector.shape_cast %0 : vector<1x16x16xf32> to vector<16x16xf32>
    %cst = arith.constant 9.99999974E-6 : f32
    %2 = vector.broadcast %cst : f32 to vector<16x16xf32>
    %3 = arith.addf %1, %2 : vector<16x16xf32>
    %4 = math.log %3 : vector<16x16xf32>
    %cst_2 = arith.constant 4.500000e+00 : f32
    %5 = vector.broadcast %cst_2 : f32 to vector<16x16xf32>
    %6 = arith.addf %4, %5 : vector<16x16xf32>
    %7 = arith.truncf %6 : vector<16x16xf32> to vector<16x16xbf16>
    %c0_3 = arith.constant 0 : index
    %c0_4 = arith.constant 0 : index
    %8 = vector.load %arg5[%c0_3, %c0_4] : memref<16x16xbf16, #tpu.memory_space<vmem>>, vector<16x16xbf16>
    %cst_5 = arith.constant dense<0.000000e+00> : vector<16x16xf32>
    %9 = tpu.matmul %7, %8, %cst_5 {dimension_numbers = #tpu.dot_dimension_numbers<[1], [0], [0], [1], [0, 0, 1, 1], [], []>} : vector<16x16xbf16>, vector<16x16xbf16>, vector<16x16xf32> -> vector<16x16xf32>
    %c0_6 = arith.constant 0 : index
    %c0_7 = arith.constant 0 : index
    %10 = vector.load %arg4[%c0_6, %c0_7] : memref<16x16xbf16, #tpu.memory_space<vmem>>, vector<16x16xbf16>
    %11 = arith.truncf %9 : vector<16x16xf32> to vector<16x16xbf16>
    %cst_8 = arith.constant dense<0.000000e+00> : vector<16x16xf32>
    %12 = tpu.matmul %10, %11, %cst_8 {dimension_numbers = #tpu.dot_dimension_numbers<[1], [0], [0], [1], [0, 0, 1, 1], [], []>} : vector<16x16xbf16>, vector<16x16xbf16>, vector<16x16xf32> -> vector<16x16xf32>
    %cst_9 = arith.constant 5.000000e+00 : f32
    %13 = vector.broadcast %cst_9 : f32 to vector<16x16xf32>
    %14 = arith.mulf %13, %6 : vector<16x16xf32>
    %15 = arith.addf %12, %14 : vector<16x16xf32>
    %c0_10 = arith.constant 0 : index
    %16 = memref.load %arg33[%c0_10] : memref<1xf32, #tpu.memory_space<smem>>
    %17 = vector.broadcast %16 : f32 to vector<16x16xf32>
    %18 = arith.addf %15, %17 : vector<16x16xf32>
    %c0_11 = arith.constant 0 : index
    %c0_12 = arith.constant 0 : index
    %c0_13 = arith.constant 0 : index
    %19 = vector.load %arg1[%c0_11, %c0_12, %c0_13] : memref<1x16x96xbf16, #tpu.memory_space<vmem>>, vector<1x16x96xbf16>
    %20 = vector.shape_cast %19 : vector<1x16x96xbf16> to vector<16x96xbf16>
    %c0_14 = arith.constant 0 : index
    %c0_15 = arith.constant 0 : index
    %21 = vector.load %arg6[%c0_14, %c0_15] : memref<96x96xbf16, #tpu.memory_space<vmem>>, vector<96x96xbf16>
    %cst_16 = arith.constant dense<0.000000e+00> : vector<16x96xf32>
    %22 = tpu.matmul %20, %21, %cst_16 {dimension_numbers = #tpu.dot_dimension_numbers<[1], [0], [0], [1], [0, 0, 1, 1], [], []>} : vector<16x96xbf16>, vector<96x96xbf16>, vector<16x96xf32> -> vector<16x96xf32>
    %c0_17 = arith.constant 0 : index
    %c0_18 = arith.constant 0 : index
    %23 = vector.load %arg7[%c0_17, %c0_18] : memref<1x96xf32, #tpu.memory_space<vmem>>, vector<1x96xf32>
    %24 = vector.broadcast %23 : vector<1x96xf32> to vector<16x96xf32>
    %25 = arith.addf %22, %24 : vector<16x96xf32>
    %cst_19 = arith.constant 0.000000e+00 : f32
    %26 = vector.broadcast %cst_19 : f32 to vector<16x96xf32>
    %27 = arith.maximumf %25, %26 : vector<16x96xf32>
    %cst_20 = arith.constant dense<0.000000e+00> : vector<96xf32>
    %28 = vector.multi_reduction <add>, %27, %cst_20 [0] : vector<16x96xf32> to vector<96xf32>
    %29 = vector.shape_cast %28 : vector<96xf32> to vector<1x96xf32>
    %30 = arith.mulf %27, %27 : vector<16x96xf32>
    %cst_21 = arith.constant dense<0.000000e+00> : vector<96xf32>
    %31 = vector.multi_reduction <add>, %30, %cst_21 [0] : vector<16x96xf32> to vector<96xf32>
    %32 = vector.shape_cast %31 : vector<96xf32> to vector<1x96xf32>
    %c0_22 = arith.constant 0 : index
    %c0_23 = arith.constant 0 : index
    %33 = vector.load %arg10[%c0_22, %c0_23] : memref<96x4xf32, #tpu.memory_space<vmem>>, vector<96x4xf32>
    %cst_24 = arith.constant dense<0.000000e+00> : vector<1x4xf32>
    %34 = tpu.matmul %29, %33, %cst_24 {dimension_numbers = #tpu.dot_dimension_numbers<[1], [0], [0], [1], [0, 0, 1, 1], [], []>} : vector<1x96xf32>, vector<96x4xf32>, vector<1x4xf32> -> vector<1x4xf32>
    %cst_25 = arith.constant 0.00260416674 : f32
    %35 = vector.broadcast %cst_25 : f32 to vector<1x4xf32>
    %36 = arith.mulf %34, %35 : vector<1x4xf32>
    %c0_26 = arith.constant 0 : index
    %c0_27 = arith.constant 0 : index
    %37 = vector.load %arg10[%c0_26, %c0_27] : memref<96x4xf32, #tpu.memory_space<vmem>>, vector<96x4xf32>
    %cst_28 = arith.constant dense<0.000000e+00> : vector<1x4xf32>
    %38 = tpu.matmul %32, %37, %cst_28 {dimension_numbers = #tpu.dot_dimension_numbers<[1], [0], [0], [1], [0, 0, 1, 1], [], []>} : vector<1x96xf32>, vector<96x4xf32>, vector<1x4xf32> -> vector<1x4xf32>
    %cst_29 = arith.constant 0.00260416674 : f32
    %39 = vector.broadcast %cst_29 : f32 to vector<1x4xf32>
    %40 = arith.mulf %38, %39 : vector<1x4xf32>
    %41 = arith.mulf %36, %36 : vector<1x4xf32>
    %42 = arith.subf %40, %41 : vector<1x4xf32>
    %cst_30 = arith.constant 9.99999974E-6 : f32
    %43 = vector.broadcast %cst_30 : f32 to vector<1x4xf32>
    %44 = arith.addf %42, %43 : vector<1x4xf32>
    %45 = math.rsqrt %44 : vector<1x4xf32>
    %c0_31 = arith.constant 0 : index
    %c0_32 = arith.constant 0 : index
    %46 = vector.load %arg11[%c0_31, %c0_32] : memref<4x96xf32, #tpu.memory_space<vmem>>, vector<4x96xf32>
    %cst_33 = arith.constant dense<0.000000e+00> : vector<1x96xf32>
    %47 = tpu.matmul %36, %46, %cst_33 {dimension_numbers = #tpu.dot_dimension_numbers<[1], [0], [0], [1], [0, 0, 1, 1], [], []>} : vector<1x4xf32>, vector<4x96xf32>, vector<1x96xf32> -> vector<1x96xf32>
    %c0_34 = arith.constant 0 : index
    %c0_35 = arith.constant 0 : index
    %48 = vector.load %arg11[%c0_34, %c0_35] : memref<4x96xf32, #tpu.memory_space<vmem>>, vector<4x96xf32>
    %cst_36 = arith.constant dense<0.000000e+00> : vector<1x96xf32>
    %49 = tpu.matmul %45, %48, %cst_36 {dimension_numbers = #tpu.dot_dimension_numbers<[1], [0], [0], [1], [0, 0, 1, 1], [], []>} : vector<1x4xf32>, vector<4x96xf32>, vector<1x96xf32> -> vector<1x96xf32>
    %50 = vector.broadcast %47 : vector<1x96xf32> to vector<16x96xf32>
    %51 = arith.subf %27, %50 : vector<16x96xf32>
    %c0_37 = arith.constant 0 : index
    %c0_38 = arith.constant 0 : index
    %52 = vector.load %arg8[%c0_37, %c0_38] : memref<1x96xf32, #tpu.memory_space<vmem>>, vector<1x96xf32>
    %53 = arith.mulf %49, %52 : vector<1x96xf32>
    %54 = vector.broadcast %53 : vector<1x96xf32> to vector<16x96xf32>
    %55 = arith.mulf %51, %54 : vector<16x96xf32>
    %c0_39 = arith.constant 0 : index
    %c0_40 = arith.constant 0 : index
    %56 = vector.load %arg9[%c0_39, %c0_40] : memref<1x96xf32, #tpu.memory_space<vmem>>, vector<1x96xf32>
    %57 = vector.broadcast %56 : vector<1x96xf32> to vector<16x96xf32>
    %58 = arith.addf %55, %57 : vector<16x96xf32>
    %c0_41 = arith.constant 0 : index
    %59 = memref.load %arg34[%c0_41] : memref<4xf32, #tpu.memory_space<smem>>
    %c1 = arith.constant 1 : index
    %60 = memref.load %arg34[%c1] : memref<4xf32, #tpu.memory_space<smem>>
    %c2 = arith.constant 2 : index
    %61 = memref.load %arg34[%c2] : memref<4xf32, #tpu.memory_space<smem>>
    %c3 = arith.constant 3 : index
    %62 = memref.load %arg34[%c3] : memref<4xf32, #tpu.memory_space<smem>>
    %63 = arith.truncf %58 : vector<16x96xf32> to vector<16x96xbf16>
    %c0_42 = arith.constant 0 : index
    %c0_43 = arith.constant 0 : index
    %64 = vector.load %arg12[%c0_42, %c0_43] : memref<96x768xbf16, #tpu.memory_space<vmem>>, vector<96x768xbf16>
    %cst_44 = arith.constant dense<0.000000e+00> : vector<16x768xf32>
    %65 = tpu.matmul %63, %64, %cst_44 {dimension_numbers = #tpu.dot_dimension_numbers<[1], [0], [0], [1], [0, 0, 1, 1], [], []>} : vector<16x96xbf16>, vector<96x768xbf16>, vector<16x768xf32> -> vector<16x768xf32>
    %c0_45 = arith.constant 0 : index
    %c0_46 = arith.constant 0 : index
    %66 = vector.load %arg13[%c0_45, %c0_46] : memref<1x768xf32, #tpu.memory_space<vmem>>, vector<1x768xf32>
    %67 = vector.broadcast %66 : vector<1x768xf32> to vector<16x768xf32>
    %68 = arith.addf %65, %67 : vector<16x768xf32>
    %69 = arith.truncf %68 : vector<16x768xf32> to vector<16x768xbf16>
    %cst_47 = arith.constant 0.000000e+00 : f32
    %70 = vector.broadcast %cst_47 : f32 to vector<16x128xf32>
    %71 = vector.extract_strided_slice %69 {offsets = [0, 0], sizes = [16, 128], strides = [1, 1]} : vector<16x768xbf16> to vector<16x128xbf16>
    %72 = vector.extract_strided_slice %69 {offsets = [0, 256], sizes = [16, 128], strides = [1, 1]} : vector<16x768xbf16> to vector<16x128xbf16>
    %73 = vector.extract_strided_slice %69 {offsets = [0, 512], sizes = [16, 128], strides = [1, 1]} : vector<16x768xbf16> to vector<16x128xbf16>
    %cst_48 = arith.constant dense<0.000000e+00> : vector<16x16xf32>
    %74 = tpu.matmul %71, %72, %cst_48 {dimension_numbers = #tpu.dot_dimension_numbers<[1], [1], [0], [0], [0, 0, 1, 0], [], []>} : vector<16x128xbf16>, vector<16x128xbf16>, vector<16x16xf32> -> vector<16x16xf32>
    %75 = arith.addf %74, %6 : vector<16x16xf32>
    %cst_49 = arith.constant dense<0xFF800000> : vector<16xf32>
    %76 = vector.multi_reduction <maximumf>, %75, %cst_49 [1] : vector<16x16xf32> to vector<16xf32>
    %77 = vector.shape_cast %76 : vector<16xf32> to vector<16x1xf32>
    %cst_50 = arith.constant 0.000000e+00 : f32
    %78 = vector.broadcast %cst_50 : f32 to vector<16x1xf32>
    %79 = arith.maximumf %77, %78 : vector<16x1xf32>
    %80 = vector.broadcast %79 : vector<16x1xf32> to vector<16x16xf32>
    %81 = arith.subf %75, %80 : vector<16x16xf32>
    %82 = math.exp %81 : vector<16x16xf32>
    %cst_51 = arith.constant dense<0.000000e+00> : vector<16xf32>
    %83 = vector.multi_reduction <add>, %82, %cst_51 [1] : vector<16x16xf32> to vector<16xf32>
    %84 = vector.shape_cast %83 : vector<16xf32> to vector<16x1xf32>
    %cst_52 = arith.constant 0.000000e+00 : f32
    %85 = vector.broadcast %cst_52 : f32 to vector<16x1xf32>
    %86 = arith.subf %85, %79 : vector<16x1xf32>
    %87 = math.exp %86 : vector<16x1xf32>
    %88 = arith.addf %84, %87 : vector<16x1xf32>
    %89 = tpu.reciprocal %88 {approx = true} : vector<16x1xf32> -> vector<16x1xf32>
    %90 = vector.broadcast %89 : vector<16x1xf32> to vector<16x16xf32>
    %91 = arith.mulf %82, %90 : vector<16x16xf32>
    %92 = arith.truncf %91 : vector<16x16xf32> to vector<16x16xbf16>
    %cst_53 = arith.constant dense<0.000000e+00> : vector<16x128xf32>
    %93 = tpu.matmul %92, %73, %cst_53 {dimension_numbers = #tpu.dot_dimension_numbers<[1], [0], [0], [1], [0, 0, 1, 1], [], []>} : vector<16x16xbf16>, vector<16x128xbf16>, vector<16x128xf32> -> vector<16x128xf32>
    %94 = arith.addf %70, %93 : vector<16x128xf32>
    %95 = vector.extract_strided_slice %69 {offsets = [0, 128], sizes = [16, 128], strides = [1, 1]} : vector<16x768xbf16> to vector<16x128xbf16>
    %96 = vector.extract_strided_slice %69 {offsets = [0, 384], sizes = [16, 128], strides = [1, 1]} : vector<16x768xbf16> to vector<16x128xbf16>
    %97 = vector.extract_strided_slice %69 {offsets = [0, 640], sizes = [16, 128], strides = [1, 1]} : vector<16x768xbf16> to vector<16x128xbf16>
    %cst_54 = arith.constant dense<0.000000e+00> : vector<16x16xf32>
    %98 = tpu.matmul %95, %96, %cst_54 {dimension_numbers = #tpu.dot_dimension_numbers<[1], [1], [0], [0], [0, 0, 1, 0], [], []>} : vector<16x128xbf16>, vector<16x128xbf16>, vector<16x16xf32> -> vector<16x16xf32>
    %99 = arith.addf %98, %18 : vector<16x16xf32>
    %cst_55 = arith.constant dense<0xFF800000> : vector<16xf32>
    %100 = vector.multi_reduction <maximumf>, %99, %cst_55 [1] : vector<16x16xf32> to vector<16xf32>
    %101 = vector.shape_cast %100 : vector<16xf32> to vector<16x1xf32>
    %cst_56 = arith.constant 0.000000e+00 : f32
    %102 = vector.broadcast %cst_56 : f32 to vector<16x1xf32>
    %103 = arith.maximumf %101, %102 : vector<16x1xf32>
    %104 = vector.broadcast %103 : vector<16x1xf32> to vector<16x16xf32>
    %105 = arith.subf %99, %104 : vector<16x16xf32>
    %106 = math.exp %105 : vector<16x16xf32>
    %cst_57 = arith.constant dense<0.000000e+00> : vector<16xf32>
    %107 = vector.multi_reduction <add>, %106, %cst_57 [1] : vector<16x16xf32> to vector<16xf32>
    %108 = vector.shape_cast %107 : vector<16xf32> to vector<16x1xf32>
    %cst_58 = arith.constant 0.000000e+00 : f32
    %109 = vector.broadcast %cst_58 : f32 to vector<16x1xf32>
    %110 = arith.subf %109, %103 : vector<16x1xf32>
    %111 = math.exp %110 : vector<16x1xf32>
    %112 = arith.addf %108, %111 : vector<16x1xf32>
    %113 = tpu.reciprocal %112 {approx = true} : vector<16x1xf32> -> vector<16x1xf32>
    %114 = vector.broadcast %113 : vector<16x1xf32> to vector<16x16xf32>
    %115 = arith.mulf %106, %114 : vector<16x16xf32>
    %116 = arith.truncf %115 : vector<16x16xf32> to vector<16x16xbf16>
    %cst_59 = arith.constant dense<0.000000e+00> : vector<16x128xf32>
    %117 = tpu.matmul %116, %97, %cst_59 {dimension_numbers = #tpu.dot_dimension_numbers<[1], [0], [0], [1], [0, 0, 1, 1], [], []>} : vector<16x16xbf16>, vector<16x128xbf16>, vector<16x128xf32> -> vector<16x128xf32>
    %118 = arith.addf %94, %117 : vector<16x128xf32>
    %119 = vector.extract_strided_slice %118 {offsets = [0, 0], sizes = [16, 96], strides = [1, 1]} : vector<16x128xf32> to vector<16x96xf32>
    %c0_60 = arith.constant 0 : index
    %c0_61 = arith.constant 0 : index
    %120 = vector.load %arg14[%c0_60, %c0_61] : memref<1x96xf32, #tpu.memory_space<vmem>>, vector<1x96xf32>
    %121 = vector.broadcast %120 : vector<1x96xf32> to vector<16x96xf32>
    %122 = arith.addf %119, %121 : vector<16x96xf32>
    %123 = vector.broadcast %59 : f32 to vector<16x96xf32>
    %124 = arith.mulf %123, %122 : vector<16x96xf32>
    %125 = arith.addf %58, %124 : vector<16x96xf32>
    %126 = arith.truncf %125 : vector<16x96xf32> to vector<16x96xbf16>
    %c0_62 = arith.constant 0 : index
    %c0_63 = arith.constant 0 : index
    %127 = vector.load %arg18[%c0_62, %c0_63] : memref<96x48xbf16, #tpu.memory_space<vmem>>, vector<96x48xbf16>
    %cst_64 = arith.constant dense<0.000000e+00> : vector<16x48xf32>
    %128 = tpu.matmul %126, %127, %cst_64 {dimension_numbers = #tpu.dot_dimension_numbers<[1], [0], [0], [1], [0, 0, 1, 1], [], []>} : vector<16x96xbf16>, vector<96x48xbf16>, vector<16x48xf32> -> vector<16x48xf32>
    %c0_65 = arith.constant 0 : index
    %c0_66 = arith.constant 0 : index
    %129 = vector.load %arg19[%c0_65, %c0_66] : memref<1x48xf32, #tpu.memory_space<vmem>>, vector<1x48xf32>
    %130 = vector.broadcast %129 : vector<1x48xf32> to vector<16x48xf32>
    %131 = arith.addf %128, %130 : vector<16x48xf32>
    %cst_67 = arith.constant 0.000000e+00 : f32
    %132 = vector.broadcast %cst_67 : f32 to vector<16x48xf32>
    %133 = arith.cmpf ogt, %131, %132 : vector<16x48xf32>
    %cst_68 = arith.constant 0.00999999977 : f32
    %134 = vector.broadcast %cst_68 : f32 to vector<16x48xf32>
    %135 = arith.mulf %134, %131 : vector<16x48xf32>
    %136 = arith.select %133, %131, %135 : vector<16x48xi1>, vector<16x48xf32>
    %137 = arith.truncf %136 : vector<16x48xf32> to vector<16x48xbf16>
    %c0_69 = arith.constant 0 : index
    %c0_70 = arith.constant 0 : index
    %138 = vector.load %arg20[%c0_69, %c0_70] : memref<48x96xbf16, #tpu.memory_space<vmem>>, vector<48x96xbf16>
    %cst_71 = arith.constant dense<0.000000e+00> : vector<16x96xf32>
    %139 = tpu.matmul %137, %138, %cst_71 {dimension_numbers = #tpu.dot_dimension_numbers<[1], [0], [0], [1], [0, 0, 1, 1], [], []>} : vector<16x48xbf16>, vector<48x96xbf16>, vector<16x96xf32> -> vector<16x96xf32>
    %c0_72 = arith.constant 0 : index
    %c0_73 = arith.constant 0 : index
    %140 = vector.load %arg21[%c0_72, %c0_73] : memref<1x96xf32, #tpu.memory_space<vmem>>, vector<1x96xf32>
    %141 = vector.broadcast %140 : vector<1x96xf32> to vector<16x96xf32>
    %142 = arith.addf %139, %141 : vector<16x96xf32>
    %143 = vector.broadcast %60 : f32 to vector<16x96xf32>
    %144 = arith.mulf %143, %142 : vector<16x96xf32>
    %145 = arith.addf %125, %144 : vector<16x96xf32>
    %cst_74 = arith.constant 2.000000e-01 : f32
    %146 = vector.broadcast %cst_74 : f32 to vector<16x16xf32>
    %147 = arith.mulf %6, %146 : vector<16x16xf32>
    %cst_75 = arith.constant 2.000000e-01 : f32
    %148 = vector.broadcast %cst_75 : f32 to vector<16x16xf32>
    %149 = arith.mulf %18, %148 : vector<16x16xf32>
    %150 = arith.truncf %145 : vector<16x96xf32> to vector<16x96xbf16>
    %c0_76 = arith.constant 0 : index
    %c0_77 = arith.constant 0 : index
    %151 = vector.load %arg15[%c0_76, %c0_77] : memref<96x768xbf16, #tpu.memory_space<vmem>>, vector<96x768xbf16>
    %cst_78 = arith.constant dense<0.000000e+00> : vector<16x768xf32>
    %152 = tpu.matmul %150, %151, %cst_78 {dimension_numbers = #tpu.dot_dimension_numbers<[1], [0], [0], [1], [0, 0, 1, 1], [], []>} : vector<16x96xbf16>, vector<96x768xbf16>, vector<16x768xf32> -> vector<16x768xf32>
    %c0_79 = arith.constant 0 : index
    %c0_80 = arith.constant 0 : index
    %153 = vector.load %arg16[%c0_79, %c0_80] : memref<1x768xf32, #tpu.memory_space<vmem>>, vector<1x768xf32>
    %154 = vector.broadcast %153 : vector<1x768xf32> to vector<16x768xf32>
    %155 = arith.addf %152, %154 : vector<16x768xf32>
    %156 = arith.truncf %155 : vector<16x768xf32> to vector<16x768xbf16>
    %cst_81 = arith.constant 0.000000e+00 : f32
    %157 = vector.broadcast %cst_81 : f32 to vector<16x128xf32>
    %158 = vector.extract_strided_slice %156 {offsets = [0, 0], sizes = [16, 128], strides = [1, 1]} : vector<16x768xbf16> to vector<16x128xbf16>
    %159 = vector.extract_strided_slice %156 {offsets = [0, 256], sizes = [16, 128], strides = [1, 1]} : vector<16x768xbf16> to vector<16x128xbf16>
    %160 = vector.extract_strided_slice %156 {offsets = [0, 512], sizes = [16, 128], strides = [1, 1]} : vector<16x768xbf16> to vector<16x128xbf16>
    %cst_82 = arith.constant dense<0.000000e+00> : vector<16x16xf32>
    %161 = tpu.matmul %158, %159, %cst_82 {dimension_numbers = #tpu.dot_dimension_numbers<[1], [1], [0], [0], [0, 0, 1, 0], [], []>} : vector<16x128xbf16>, vector<16x128xbf16>, vector<16x16xf32> -> vector<16x16xf32>
    %162 = arith.addf %161, %147 : vector<16x16xf32>
    %cst_83 = arith.constant dense<0xFF800000> : vector<16xf32>
    %163 = vector.multi_reduction <maximumf>, %162, %cst_83 [1] : vector<16x16xf32> to vector<16xf32>
    %164 = vector.shape_cast %163 : vector<16xf32> to vector<16x1xf32>
    %cst_84 = arith.constant 0.000000e+00 : f32
    %165 = vector.broadcast %cst_84 : f32 to vector<16x1xf32>
    %166 = arith.maximumf %164, %165 : vector<16x1xf32>
    %167 = vector.broadcast %166 : vector<16x1xf32> to vector<16x16xf32>
    %168 = arith.subf %162, %167 : vector<16x16xf32>
    %169 = math.exp %168 : vector<16x16xf32>
    %cst_85 = arith.constant dense<0.000000e+00> : vector<16xf32>
    %170 = vector.multi_reduction <add>, %169, %cst_85 [1] : vector<16x16xf32> to vector<16xf32>
    %171 = vector.shape_cast %170 : vector<16xf32> to vector<16x1xf32>
    %cst_86 = arith.constant 0.000000e+00 : f32
    %172 = vector.broadcast %cst_86 : f32 to vector<16x1xf32>
    %173 = arith.subf %172, %166 : vector<16x1xf32>
    %174 = math.exp %173 : vector<16x1xf32>
    %175 = arith.addf %171, %174 : vector<16x1xf32>
    %176 = tpu.reciprocal %175 {approx = true} : vector<16x1xf32> -> vector<16x1xf32>
    %177 = vector.broadcast %176 : vector<16x1xf32> to vector<16x16xf32>
    %178 = arith.mulf %169, %177 : vector<16x16xf32>
    %179 = arith.truncf %178 : vector<16x16xf32> to vector<16x16xbf16>
    %cst_87 = arith.constant dense<0.000000e+00> : vector<16x128xf32>
    %180 = tpu.matmul %179, %160, %cst_87 {dimension_numbers = #tpu.dot_dimension_numbers<[1], [0], [0], [1], [0, 0, 1, 1], [], []>} : vector<16x16xbf16>, vector<16x128xbf16>, vector<16x128xf32> -> vector<16x128xf32>
    %181 = arith.addf %157, %180 : vector<16x128xf32>
    %182 = vector.extract_strided_slice %156 {offsets = [0, 128], sizes = [16, 128], strides = [1, 1]} : vector<16x768xbf16> to vector<16x128xbf16>
    %183 = vector.extract_strided_slice %156 {offsets = [0, 384], sizes = [16, 128], strides = [1, 1]} : vector<16x768xbf16> to vector<16x128xbf16>
    %184 = vector.extract_strided_slice %156 {offsets = [0, 640], sizes = [16, 128], strides = [1, 1]} : vector<16x768xbf16> to vector<16x128xbf16>
    %cst_88 = arith.constant dense<0.000000e+00> : vector<16x16xf32>
    %185 = tpu.matmul %182, %183, %cst_88 {dimension_numbers = #tpu.dot_dimension_numbers<[1], [1], [0], [0], [0, 0, 1, 0], [], []>} : vector<16x128xbf16>, vector<16x128xbf16>, vector<16x16xf32> -> vector<16x16xf32>
    %186 = arith.addf %185, %149 : vector<16x16xf32>
    %cst_89 = arith.constant dense<0xFF800000> : vector<16xf32>
    %187 = vector.multi_reduction <maximumf>, %186, %cst_89 [1] : vector<16x16xf32> to vector<16xf32>
    %188 = vector.shape_cast %187 : vector<16xf32> to vector<16x1xf32>
    %cst_90 = arith.constant 0.000000e+00 : f32
    %189 = vector.broadcast %cst_90 : f32 to vector<16x1xf32>
    %190 = arith.maximumf %188, %189 : vector<16x1xf32>
    %191 = vector.broadcast %190 : vector<16x1xf32> to vector<16x16xf32>
    %192 = arith.subf %186, %191 : vector<16x16xf32>
    %193 = math.exp %192 : vector<16x16xf32>
    %cst_91 = arith.constant dense<0.000000e+00> : vector<16xf32>
    %194 = vector.multi_reduction <add>, %193, %cst_91 [1] : vector<16x16xf32> to vector<16xf32>
    %195 = vector.shape_cast %194 : vector<16xf32> to vector<16x1xf32>
    %cst_92 = arith.constant 0.000000e+00 : f32
    %196 = vector.broadcast %cst_92 : f32 to vector<16x1xf32>
    %197 = arith.subf %196, %190 : vector<16x1xf32>
    %198 = math.exp %197 : vector<16x1xf32>
    %199 = arith.addf %195, %198 : vector<16x1xf32>
    %200 = tpu.reciprocal %199 {approx = true} : vector<16x1xf32> -> vector<16x1xf32>
    %201 = vector.broadcast %200 : vector<16x1xf32> to vector<16x16xf32>
    %202 = arith.mulf %193, %201 : vector<16x16xf32>
    %203 = arith.truncf %202 : vector<16x16xf32> to vector<16x16xbf16>
    %cst_93 = arith.constant dense<0.000000e+00> : vector<16x128xf32>
    %204 = tpu.matmul %203, %184, %cst_93 {dimension_numbers = #tpu.dot_dimension_numbers<[1], [0], [0], [1], [0, 0, 1, 1], [], []>} : vector<16x16xbf16>, vector<16x128xbf16>, vector<16x128xf32> -> vector<16x128xf32>
    %205 = arith.addf %181, %204 : vector<16x128xf32>
    %206 = vector.extract_strided_slice %205 {offsets = [0, 0], sizes = [16, 96], strides = [1, 1]} : vector<16x128xf32> to vector<16x96xf32>
    %c0_94 = arith.constant 0 : index
    %c0_95 = arith.constant 0 : index
    %207 = vector.load %arg17[%c0_94, %c0_95] : memref<1x96xf32, #tpu.memory_space<vmem>>, vector<1x96xf32>
    %208 = vector.broadcast %207 : vector<1x96xf32> to vector<16x96xf32>
    %209 = arith.addf %206, %208 : vector<16x96xf32>
    %210 = vector.broadcast %61 : f32 to vector<16x96xf32>
    %211 = arith.mulf %210, %209 : vector<16x96xf32>
    %212 = arith.addf %145, %211 : vector<16x96xf32>
    %213 = arith.truncf %212 : vector<16x96xf32> to vector<16x96xbf16>
    %c0_96 = arith.constant 0 : index
    %c0_97 = arith.constant 0 : index
    %214 = vector.load %arg22[%c0_96, %c0_97] : memref<96x96xbf16, #tpu.memory_space<vmem>>, vector<96x96xbf16>
    %cst_98 = arith.constant dense<0.000000e+00> : vector<16x96xf32>
    %215 = tpu.matmul %213, %214, %cst_98 {dimension_numbers = #tpu.dot_dimension_numbers<[1], [0], [0], [1], [0, 0, 1, 1], [], []>} : vector<16x96xbf16>, vector<96x96xbf16>, vector<16x96xf32> -> vector<16x96xf32>
    %c0_99 = arith.constant 0 : index
    %c0_100 = arith.constant 0 : index
    %216 = vector.load %arg23[%c0_99, %c0_100] : memref<1x96xf32, #tpu.memory_space<vmem>>, vector<1x96xf32>
    %217 = vector.broadcast %216 : vector<1x96xf32> to vector<16x96xf32>
    %218 = arith.addf %215, %217 : vector<16x96xf32>
    %cst_101 = arith.constant 0.000000e+00 : f32
    %219 = vector.broadcast %cst_101 : f32 to vector<16x96xf32>
    %220 = arith.maximumf %218, %219 : vector<16x96xf32>
    %c0_102 = arith.constant 0 : index
    %c0_103 = arith.constant 0 : index
    %221 = vector.load %arg24[%c0_102, %c0_103] : memref<1x96xf32, #tpu.memory_space<vmem>>, vector<1x96xf32>
    %222 = vector.broadcast %221 : vector<1x96xf32> to vector<16x96xf32>
    %223 = arith.mulf %220, %222 : vector<16x96xf32>
    %c0_104 = arith.constant 0 : index
    %c0_105 = arith.constant 0 : index
    %224 = vector.load %arg25[%c0_104, %c0_105] : memref<1x96xf32, #tpu.memory_space<vmem>>, vector<1x96xf32>
    %225 = vector.broadcast %224 : vector<1x96xf32> to vector<16x96xf32>
    %226 = arith.addf %223, %225 : vector<16x96xf32>
    %227 = arith.truncf %226 : vector<16x96xf32> to vector<16x96xbf16>
    %c0_106 = arith.constant 0 : index
    %c0_107 = arith.constant 0 : index
    %228 = vector.load %arg26[%c0_106, %c0_107] : memref<96x96xbf16, #tpu.memory_space<vmem>>, vector<96x96xbf16>
    %cst_108 = arith.constant dense<0.000000e+00> : vector<16x96xf32>
    %229 = tpu.matmul %227, %228, %cst_108 {dimension_numbers = #tpu.dot_dimension_numbers<[1], [0], [0], [1], [0, 0, 1, 1], [], []>} : vector<16x96xbf16>, vector<96x96xbf16>, vector<16x96xf32> -> vector<16x96xf32>
    %c0_109 = arith.constant 0 : index
    %c0_110 = arith.constant 0 : index
    %c0_111 = arith.constant 0 : index
    %230 = vector.load %arg3[%c0_109, %c0_110, %c0_111] : memref<1x16x18xbf16, #tpu.memory_space<vmem>>, vector<1x16x18xbf16>
    %231 = vector.shape_cast %230 : vector<1x16x18xbf16> to vector<16x18xbf16>
    %c0_112 = arith.constant 0 : index
    %c0_113 = arith.constant 0 : index
    %232 = vector.load %arg27[%c0_112, %c0_113] : memref<18x96xbf16, #tpu.memory_space<vmem>>, vector<18x96xbf16>
    %cst_114 = arith.constant dense<0.000000e+00> : vector<16x96xf32>
    %233 = tpu.matmul %231, %232, %cst_114 {dimension_numbers = #tpu.dot_dimension_numbers<[1], [0], [0], [1], [0, 0, 1, 1], [], []>} : vector<16x18xbf16>, vector<18x96xbf16>, vector<16x96xf32> -> vector<16x96xf32>
    %234 = arith.addf %229, %233 : vector<16x96xf32>
    %c0_115 = arith.constant 0 : index
    %c0_116 = arith.constant 0 : index
    %235 = vector.load %arg28[%c0_115, %c0_116] : memref<1x96xf32, #tpu.memory_space<vmem>>, vector<1x96xf32>
    %236 = vector.broadcast %235 : vector<1x96xf32> to vector<16x96xf32>
    %237 = arith.addf %234, %236 : vector<16x96xf32>
    %cst_117 = arith.constant 0.000000e+00 : f32
    %238 = vector.broadcast %cst_117 : f32 to vector<16x96xf32>
    %239 = arith.maximumf %237, %238 : vector<16x96xf32>
    %c0_118 = arith.constant 0 : index
    %c0_119 = arith.constant 0 : index
    %240 = vector.load %arg29[%c0_118, %c0_119] : memref<1x96xf32, #tpu.memory_space<vmem>>, vector<1x96xf32>
    %241 = vector.broadcast %240 : vector<1x96xf32> to vector<16x96xf32>
    %242 = arith.mulf %239, %241 : vector<16x96xf32>
    %c0_120 = arith.constant 0 : index
    %c0_121 = arith.constant 0 : index
    %243 = vector.load %arg30[%c0_120, %c0_121] : memref<1x96xf32, #tpu.memory_space<vmem>>, vector<1x96xf32>
    %244 = vector.broadcast %243 : vector<1x96xf32> to vector<16x96xf32>
    %245 = arith.addf %242, %244 : vector<16x96xf32>
    %246 = vector.broadcast %62 : f32 to vector<16x96xf32>
    %247 = arith.mulf %246, %245 : vector<16x96xf32>
    %248 = arith.addf %226, %247 : vector<16x96xf32>
    %c0_122 = arith.constant 0 : index
    %c0_123 = arith.constant 0 : index
    %249 = vector.load %arg31[%c0_122, %c0_123] : memref<5x96xbf16, #tpu.memory_space<vmem>>, vector<5x96xbf16>
    %250 = arith.truncf %248 : vector<16x96xf32> to vector<16x96xbf16>
    %cst_124 = arith.constant dense<0.000000e+00> : vector<5x16xf32>
    %251 = tpu.matmul %249, %250, %cst_124 {dimension_numbers = #tpu.dot_dimension_numbers<[1], [1], [0], [0], [0, 0, 1, 0], [], []>} : vector<5x96xbf16>, vector<16x96xbf16>, vector<5x16xf32> -> vector<5x16xf32>
    %c0_125 = arith.constant 0 : index
    %c0_126 = arith.constant 0 : index
    %252 = vector.load %arg32[%c0_125, %c0_126] : memref<5x1xf32, #tpu.memory_space<vmem>>, vector<5x1xf32>
    %253 = vector.broadcast %252 : vector<5x1xf32> to vector<5x16xf32>
    %254 = arith.addf %251, %253 : vector<5x16xf32>
    %c0_127 = arith.constant 0 : index
    %c0_128 = arith.constant 0 : index
    %c0_129 = arith.constant 0 : index
    %255 = vector.load %arg35[%c0_127, %c0_128, %c0_129] : memref<1x5x16xf32, #tpu.memory_space<vmem>>, vector<1x5x16xf32>
    %256 = vector.shape_cast %255 : vector<1x5x16xf32> to vector<5x16xf32>
    %257 = vector.shape_cast %254 : vector<5x16xf32> to vector<1x5x16xf32>
    tpu.vector_store %arg35[%c0_127, %c0_128, %c0_129], %257 {strides = array<i32>} : memref<1x5x16xf32, #tpu.memory_space<vmem>>, vector<1x5x16xf32>,
    return
  }
  func.func @transform_0(%arg0: i32) -> (i32, i32, i32) {
    %c0_i32 = arith.constant 0 : i32
    %c0_i32_0 = arith.constant 0 : i32
    %c0_i32_1 = arith.constant 0 : i32
    return %arg0, %c0_i32, %c0_i32_0 : i32, i32, i32
  }
  func.func @transform_1(%arg0: i32) -> (i32, i32, i32) {
    %c0_i32 = arith.constant 0 : i32
    %c0_i32_0 = arith.constant 0 : i32
    %c0_i32_1 = arith.constant 0 : i32
    return %arg0, %c0_i32, %c0_i32_0 : i32, i32, i32
  }
  func.func @transform_2(%arg0: i32) -> (i32, i32, i32) {
    %c0_i32 = arith.constant 0 : i32
    %c0_i32_0 = arith.constant 0 : i32
    %c0_i32_1 = arith.constant 0 : i32
    return %arg0, %c0_i32, %c0_i32_0 : i32, i32, i32
  }
  func.func @transform_3(%arg0: i32) -> (i32, i32) {
    %c0_i32 = arith.constant 0 : i32
    %c0_i32_0 = arith.constant 0 : i32
    %c0_i32_1 = arith.constant 0 : i32
    return %c0_i32, %c0_i32_0 : i32, i32
  }
  func.func @transform_4(%arg0: i32) -> (i32, i32) {
    %c0_i32 = arith.constant 0 : i32
    %c0_i32_0 = arith.constant 0 : i32
    %c0_i32_1 = arith.constant 0 : i32
    return %c0_i32, %c0_i32_0 : i32, i32
  }
  func.func @transform_5(%arg0: i32) -> (i32, i32) {
    %c0_i32 = arith.constant 0 : i32
    %c0_i32_0 = arith.constant 0 : i32
    %c0_i32_1 = arith.constant 0 : i32
    return %c0_i32, %c0_i32_0 : i32, i32
  }
  func.func @transform_6(%arg0: i32) -> (i32, i32) {
    %c0_i32 = arith.constant 0 : i32
    %c0_i32_0 = arith.constant 0 : i32
    %c0_i32_1 = arith.constant 0 : i32
    return %c0_i32, %c0_i32_0 : i32, i32
  }
  func.func @transform_7(%arg0: i32) -> (i32, i32) {
    %c0_i32 = arith.constant 0 : i32
    %c0_i32_0 = arith.constant 0 : i32
    %c0_i32_1 = arith.constant 0 : i32
    return %c0_i32, %c0_i32_0 : i32, i32
  }
  func.func @transform_8(%arg0: i32) -> (i32, i32) {
    %c0_i32 = arith.constant 0 : i32
    %c0_i32_0 = arith.constant 0 : i32
    %c0_i32_1 = arith.constant 0 : i32
    return %c0_i32, %c0_i32_0 : i32, i32
  }
  func.func @transform_9(%arg0: i32) -> (i32, i32) {
    %c0_i32 = arith.constant 0 : i32
    %c0_i32_0 = arith.constant 0 : i32
    %c0_i32_1 = arith.constant 0 : i32
    return %c0_i32, %c0_i32_0 : i32, i32
  }
  func.func @transform_10(%arg0: i32) -> (i32, i32) {
    %c0_i32 = arith.constant 0 : i32
    %c0_i32_0 = arith.constant 0 : i32
    %c0_i32_1 = arith.constant 0 : i32
    return %c0_i32, %c0_i32_0 : i32, i32
  }
  func.func @transform_11(%arg0: i32) -> (i32, i32) {
    %c0_i32 = arith.constant 0 : i32
    %c0_i32_0 = arith.constant 0 : i32
    %c0_i32_1 = arith.constant 0 : i32
    return %c0_i32, %c0_i32_0 : i32, i32
  }
  func.func @transform_12(%arg0: i32) -> (i32, i32) {
    %c0_i32 = arith.constant 0 : i32
    %c0_i32_0 = arith.constant 0 : i32
    %c0_i32_1 = arith.constant 0 : i32
    return %c0_i32, %c0_i32_0 : i32, i32
  }
  func.func @transform_13(%arg0: i32) -> (i32, i32) {
    %c0_i32 = arith.constant 0 : i32
    %c0_i32_0 = arith.constant 0 : i32
    %c0_i32_1 = arith.constant 0 : i32
    return %c0_i32, %c0_i32_0 : i32, i32
  }
  func.func @transform_14(%arg0: i32) -> (i32, i32) {
    %c0_i32 = arith.constant 0 : i32
    %c0_i32_0 = arith.constant 0 : i32
    %c0_i32_1 = arith.constant 0 : i32
    return %c0_i32, %c0_i32_0 : i32, i32
  }
  func.func @transform_15(%arg0: i32) -> (i32, i32) {
    %c0_i32 = arith.constant 0 : i32
    %c0_i32_0 = arith.constant 0 : i32
    %c0_i32_1 = arith.constant 0 : i32
    return %c0_i32, %c0_i32_0 : i32, i32
  }
  func.func @transform_16(%arg0: i32) -> (i32, i32) {
    %c0_i32 = arith.constant 0 : i32
    %c0_i32_0 = arith.constant 0 : i32
    %c0_i32_1 = arith.constant 0 : i32
    return %c0_i32, %c0_i32_0 : i32, i32
  }
  func.func @transform_17(%arg0: i32) -> (i32, i32) {
    %c0_i32 = arith.constant 0 : i32
    %c0_i32_0 = arith.constant 0 : i32
    %c0_i32_1 = arith.constant 0 : i32
    return %c0_i32, %c0_i32_0 : i32, i32
  }
  func.func @transform_18(%arg0: i32) -> (i32, i32) {
    %c0_i32 = arith.constant 0 : i32
    %c0_i32_0 = arith.constant 0 : i32
    %c0_i32_1 = arith.constant 0 : i32
    return %c0_i32, %c0_i32_0 : i32, i32
  }
  func.func @transform_19(%arg0: i32) -> (i32, i32) {
    %c0_i32 = arith.constant 0 : i32
    %c0_i32_0 = arith.constant 0 : i32
    %c0_i32_1 = arith.constant 0 : i32
    return %c0_i32, %c0_i32_0 : i32, i32
  }
  func.func @transform_20(%arg0: i32) -> (i32, i32) {
    %c0_i32 = arith.constant 0 : i32
    %c0_i32_0 = arith.constant 0 : i32
    %c0_i32_1 = arith.constant 0 : i32
    return %c0_i32, %c0_i32_0 : i32, i32
  }
  func.func @transform_21(%arg0: i32) -> (i32, i32) {
    %c0_i32 = arith.constant 0 : i32
    %c0_i32_0 = arith.constant 0 : i32
    %c0_i32_1 = arith.constant 0 : i32
    return %c0_i32, %c0_i32_0 : i32, i32
  }
  func.func @transform_22(%arg0: i32) -> (i32, i32) {
    %c0_i32 = arith.constant 0 : i32
    %c0_i32_0 = arith.constant 0 : i32
    %c0_i32_1 = arith.constant 0 : i32
    return %c0_i32, %c0_i32_0 : i32, i32
  }
  func.func @transform_23(%arg0: i32) -> (i32, i32) {
    %c0_i32 = arith.constant 0 : i32
    %c0_i32_0 = arith.constant 0 : i32
    %c0_i32_1 = arith.constant 0 : i32
    return %c0_i32, %c0_i32_0 : i32, i32
  }
  func.func @transform_24(%arg0: i32) -> (i32, i32) {
    %c0_i32 = arith.constant 0 : i32
    %c0_i32_0 = arith.constant 0 : i32
    %c0_i32_1 = arith.constant 0 : i32
    return %c0_i32, %c0_i32_0 : i32, i32
  }
  func.func @transform_25(%arg0: i32) -> (i32, i32) {
    %c0_i32 = arith.constant 0 : i32
    %c0_i32_0 = arith.constant 0 : i32
    %c0_i32_1 = arith.constant 0 : i32
    return %c0_i32, %c0_i32_0 : i32, i32
  }
  func.func @transform_26(%arg0: i32) -> (i32, i32) {
    %c0_i32 = arith.constant 0 : i32
    %c0_i32_0 = arith.constant 0 : i32
    %c0_i32_1 = arith.constant 0 : i32
    return %c0_i32, %c0_i32_0 : i32, i32
  }
  func.func @transform_27(%arg0: i32) -> (i32, i32) {
    %c0_i32 = arith.constant 0 : i32
    %c0_i32_0 = arith.constant 0 : i32
    %c0_i32_1 = arith.constant 0 : i32
    return %c0_i32, %c0_i32_0 : i32, i32
  }
  func.func @transform_28(%arg0: i32) -> (i32, i32) {
    %c0_i32 = arith.constant 0 : i32
    %c0_i32_0 = arith.constant 0 : i32
    %c0_i32_1 = arith.constant 0 : i32
    return %c0_i32, %c0_i32_0 : i32, i32
  }
  func.func @transform_29(%arg0: i32) -> (i32, i32) {
    %c0_i32 = arith.constant 0 : i32
    %c0_i32_0 = arith.constant 0 : i32
    %c0_i32_1 = arith.constant 0 : i32
    return %c0_i32, %c0_i32_0 : i32, i32
  }
  func.func @transform_30(%arg0: i32) -> (i32, i32) {
    %c0_i32 = arith.constant 0 : i32
    %c0_i32_0 = arith.constant 0 : i32
    %c0_i32_1 = arith.constant 0 : i32
    return %c0_i32, %c0_i32_0 : i32, i32
  }
  func.func @transform_31(%arg0: i32) -> (i32, i32) {
    %c0_i32 = arith.constant 0 : i32
    %c0_i32_0 = arith.constant 0 : i32
    %c0_i32_1 = arith.constant 0 : i32
    return %c0_i32, %c0_i32_0 : i32, i32
  }
  func.func @transform_32(%arg0: i32) -> i32 {
    %c0_i32 = arith.constant 0 : i32
    %c0_i32_0 = arith.constant 0 : i32
    return %c0_i32 : i32
  }
  func.func @transform_33(%arg0: i32) -> i32 {
    %c0_i32 = arith.constant 0 : i32
    %c0_i32_0 = arith.constant 0 : i32
    return %c0_i32 : i32
  }
  func.func @transform_34(%arg0: i32) -> (i32, i32, i32) {
    %c0_i32 = arith.constant 0 : i32
    %c0_i32_0 = arith.constant 0 : i32
    %c0_i32_1 = arith.constant 0 : i32
    return %arg0, %c0_i32, %c0_i32_0 : i32, i32, i32
  }
}

</mosaic_0001>

<llo_original>
// kernel: tpu_custom_call.1
$region0: #{tpu_custom_call.1}
  #allocation0 [shape = 'u32[]', space=smem, size = 0x4, offset = 0x4, fixed_abs, tag = 'smem constant byte address 0x4 - core index']
  #allocation1 [shape = 'u32[144,128]{1,0:T(1,128)}', space=vmem, size = 0x12000, scoped, tag = 'internal scratch']
  #allocation2 [shape = 'f32[1]{0:T(128)S(6)}', space=smem, size = 0x200, scoped, tag = 'scoped memory for tpu_custom_call.1']
  %s0 = inlined_call_operand.smem [shape: u32[35], index: -1, kind: input, shape index: {}]
  %s1 = sld [smem:[%s0]]
  %s2 = scalar_lea.smem %s0, 1
  %s3 = sld [smem:[%s2]]
  %s4 = scalar_lea.smem %s0, 2
  %s5 = sld [smem:[%s4]]
  %s6 = scalar_lea.smem %s0, 3
  %s7 = sld [smem:[%s6]]
  %s8 = scalar_lea.smem %s0, 4
  %s9 = sld [smem:[%s8]]
  %s10 = scalar_lea.smem %s0, 5
  %s11 = sld [smem:[%s10]]
  %s12 = scalar_lea.smem %s0, 6
  %s13 = sld [smem:[%s12]]
  %s14 = scalar_lea.smem %s0, 7
  %s15 = sld [smem:[%s14]]
  %s16 = scalar_lea.smem %s0, 8
  %s17 = sld [smem:[%s16]]
  %s18 = scalar_lea.smem %s0, 9
  %s19 = sld [smem:[%s18]]
  %s20 = scalar_lea.smem %s0, 10
  %s21 = sld [smem:[%s20]]
  %s22 = scalar_lea.smem %s0, 11
  %s23 = sld [smem:[%s22]]
  %s24 = scalar_lea.smem %s0, 12
  %s25 = sld [smem:[%s24]]
  %s26 = scalar_lea.smem %s0, 13
  %s27 = sld [smem:[%s26]]
  %s28 = scalar_lea.smem %s0, 14
  %s29 = sld [smem:[%s28]]
  %s30 = scalar_lea.smem %s0, 15
  %s31 = sld [smem:[%s30]]
  %s32 = scalar_lea.smem %s0, 16
  %s33 = sld [smem:[%s32]]
  %s34 = scalar_lea.smem %s0, 17
  %s35 = sld [smem:[%s34]]
  %s36 = scalar_lea.smem %s0, 18
  %s37 = sld [smem:[%s36]]
  %s38 = scalar_lea.smem %s0, 19
  %s39 = sld [smem:[%s38]]
  %s40 = scalar_lea.smem %s0, 20
  %s41 = sld [smem:[%s40]]
  %s42 = scalar_lea.smem %s0, 21
  %s43 = sld [smem:[%s42]]
  %s44 = scalar_lea.smem %s0, 22
  %s45 = sld [smem:[%s44]]
  %s46 = scalar_lea.smem %s0, 23
  %s47 = sld [smem:[%s46]]
  %s48 = scalar_lea.smem %s0, 24
  %s49 = sld [smem:[%s48]]
  %s50 = scalar_lea.smem %s0, 25
  %s51 = sld [smem:[%s50]]
  %s52 = scalar_lea.smem %s0, 26
  %s53 = sld [smem:[%s52]]
  %s54 = scalar_lea.smem %s0, 27
  %s55 = sld [smem:[%s54]]
  %s56 = scalar_lea.smem %s0, 28
  %s57 = sld [smem:[%s56]]
  %s58 = scalar_lea.smem %s0, 29
  %s59 = sld [smem:[%s58]]
  %s60 = scalar_lea.smem %s0, 30
  %s61 = sld [smem:[%s60]]
  %s62 = scalar_lea.smem %s0, 31
  %s63 = sld [smem:[%s62]]
  %s64 = scalar_lea.smem %s0, 32
  %s65 = sld [smem:[%s64]]
  %s66 = scalar_lea.smem %s0, 33
  %s67 = sld [smem:[%s66]]
  %s68 = scalar_lea.smem %s0, 34
  %s69 = sld [smem:[%s68]]
  %s70 = sld [smem:[#allocation0]]
  $region233: #{tpu_custom_call.1} parent=0
    _
  %s72 = ssub.s32 1, %s70
  %s73 = scalar_select 0, %s72, %s70
  %74 = sst [smem:[#allocation2]] %s65
  $region1: #{tpu_custom_call.1} parent=0
    #allocation3 [shape = 'u8[8192]{0}', space=vmem, size = 0x2000, scoped, tag = 'input window, operand 0']
    #allocation4 [shape = 's32[2]{0}', space=sflag, size = 0x8, scoped, tag = 'scoped memory for tpu_custom_call.1']
    #allocation5 [shape = 's32[2]{0}', space=sflag, size = 0x8, scoped, tag = 'scoped memory for tpu_custom_call.1']
    #allocation6 [shape = 'u8[8192]{0}', space=vmem, size = 0x2000, scoped, tag = 'input window, operand 2']
    #allocation7 [shape = 's32[2]{0}', space=sflag, size = 0x8, scoped, tag = 'scoped memory for tpu_custom_call.1']
    #allocation8 [shape = 'u8[4096]{0}', space=vmem, size = 0x1000, scoped, tag = 'input window, operand 3, single buffered']
    #allocation9 [shape = 'u8[4096]{0}', space=vmem, size = 0x1000, scoped, tag = 'input window, operand 4, single buffered']
    #allocation10 [shape = 's32[1]{0}', space=sflag, size = 0x4, scoped, tag = 'scoped memory for tpu_custom_call.1']
    #allocation11 [shape = 'u8[512]{0}', space=vmem, size = 0x400, scoped, tag = 'input window, operand 7, single buffered']
    #allocation12 [shape = 'u8[512]{0}', space=vmem, size = 0x400, scoped, tag = 'input window, operand 8, single buffered']
    #allocation13 [shape = 's32[1]{0}', space=sflag, size = 0x4, scoped, tag = 'scoped memory for tpu_custom_call.1']
    #allocation14 [shape = 'u8[2048]{0}', space=vmem, size = 0x800, scoped, tag = 'input window, operand 10, single buffered']
    #allocation15 [shape = 'u8[147456]{0}', space=vmem, size = 0x24000, scoped, tag = 'input window, operand 11, single buffered']
    #allocation16 [shape = 's32[1]{0}', space=sflag, size = 0x4, scoped, tag = 'scoped memory for tpu_custom_call.1']
    #allocation17 [shape = 'u8[3072]{0}', space=vmem, size = 0xc00, scoped, tag = 'input window, operand 12, single buffered']
    #allocation18 [shape = 'u8[512]{0}', space=vmem, size = 0x400, scoped, tag = 'input window, operand 13, single buffered']
    #allocation19 [shape = 's32[1]{0}', space=sflag, size = 0x4, scoped, tag = 'scoped memory for tpu_custom_call.1']
    #allocation20 [shape = 'u8[147456]{0}', space=vmem, size = 0x24000, scoped, tag = 'input window, operand 14, single buffered']
    #allocation21 [shape = 'u8[3072]{0}', space=vmem, size = 0xc00, scoped, tag = 'input window, operand 15, single buffered']
    #allocation22 [shape = 's32[1]{0}', space=sflag, size = 0x4, scoped, tag = 'scoped memory for tpu_custom_call.1']
    #allocation23 [shape = 'u8[512]{0}', space=vmem, size = 0x400, scoped, tag = 'input window, operand 16, single buffered']
    #allocation24 [shape = 'u8[512]{0}', space=vmem, size = 0x400, scoped, tag = 'input window, operand 18, single buffered']
    #allocation25 [shape = 's32[1]{0}', space=sflag, size = 0x4, scoped, tag = 'scoped memory for tpu_custom_call.1']
    #allocation26 [shape = 'u8[512]{0}', space=vmem, size = 0x400, scoped, tag = 'input window, operand 20, single buffered']
    #allocation27 [shape = 'u8[512]{0}', space=smem, size = 0x200, scoped, tag = 'input window, operand 33, single buffered']
    %75 = vsyncpa [#allocation4], 0
    %s76 = scalar_lea.sflag [#allocation4], 1
    %77 = vsyncpa %s76, 0
    %78 = vsyncpa [#allocation7], 0
    %s79 = scalar_lea.sflag [#allocation7], 1
    %80 = vsyncpa %s79, 0
    %81 = vsyncpa [#allocation10], 0
    %82 = vsyncpa [#allocation13], 0
    %83 = vsyncpa [#allocation16], 0
    %84 = vsyncpa [#allocation19], 0
    %85 = vsyncpa [#allocation22], 0
    %86 = vsyncpa [#allocation25], 0
    %87 = vsyncpa [#allocation5], 0
    loop: start=0, step=1, limit=4
    $region2: #{tpu_custom_call.1} parent=1 // loop_pre_header
      _
    $region3: #{tpu_custom_call.1} parent=1 // loop_header
      %s89 = sphi 0, %s93
      %p90 = scmp.ge.s32.totalorder %s89, 4
      %s99 = sphi 0, %s101
      %s102 = sphi 0, %s99
      %s103 = sphi 0, %s102
      %s119 = sphi 0, %s103
      %s125 = sphi 0, %s127
      %s128 = sphi 0, %s125
      %s129 = sphi 0, %s128
      %s145 = sphi 0, %s129
      %s151 = sphi 0, %s153
      %s154 = sphi 0, %s151
      %s155 = sphi 0, %s154
      %s171 = sphi 0, %s155
      %s175 = sphi 0, %s175
      %s177 = sphi 0, %s175
      %s178 = sphi 0, %s177
      %s192 = sphi 0, %s178
      %s196 = sphi 0, %s196
      %s198 = sphi 0, %s196
      %s199 = sphi 0, %s198
      %s213 = sphi 0, %s199
      %s217 = sphi 0, %s217
      %s219 = sphi 0, %s217
      %s220 = sphi 0, %s219
      %s234 = sphi 0, %s220
      %s238 = sphi 0, %s238
      %s240 = sphi 0, %s238
      %s241 = sphi 0, %s240
      %s255 = sphi 0, %s241
      %s259 = sphi 0, %s259
      %s261 = sphi 0, %s259
      %s262 = sphi 0, %s261
      %s276 = sphi 0, %s262
      %s280 = sphi 0, %s280
      %s282 = sphi 0, %s280
      %s283 = sphi 0, %s282
      %s297 = sphi 0, %s283
      %s301 = sphi 0, %s301
      %s303 = sphi 0, %s301
      %s304 = sphi 0, %s303
      %s318 = sphi 0, %s304
      %s322 = sphi 0, %s322
      %s324 = sphi 0, %s322
      %s325 = sphi 0, %s324
      %s339 = sphi 0, %s325
      %s343 = sphi 0, %s343
      %s345 = sphi 0, %s343
      %s346 = sphi 0, %s345
      %s360 = sphi 0, %s346
      %s364 = sphi 0, %s364
      %s366 = sphi 0, %s364
      %s367 = sphi 0, %s366
      %s381 = sphi 0, %s367
      %s385 = sphi 0, %s385
      %s387 = sphi 0, %s385
      %s388 = sphi 0, %s387
      %s402 = sphi 0, %s388
      %s406 = sphi 0, %s406
      %s408 = sphi 0, %s406
      %s409 = sphi 0, %s408
      %s423 = sphi 0, %s409
      %s427 = sphi 0, %s427
      %s429 = sphi 0, %s427
      %s430 = sphi 0, %s429
      %s444 = sphi 0, %s430
      %s448 = sphi 0, %s448
      %s450 = sphi 0, %s448
      %s451 = sphi 0, %s450
      %s465 = sphi 0, %s451
      %s469 = sphi 0, %s469
      %s471 = sphi 0, %s469
      %s472 = sphi 0, %s471
      %s486 = sphi 0, %s472
      %s490 = sphi 0, %s490
      %s492 = sphi 0, %s490
      %s493 = sphi 0, %s492
      %s507 = sphi 0, %s493
      %s511 = sphi 0, %s511
      %s513 = sphi 0, %s511
      %s514 = sphi 0, %s513
      %s528 = sphi 0, %s514
      %s532 = sphi 0, %s532
      %s534 = sphi 0, %s532
      %s535 = sphi 0, %s534
      %s549 = sphi 0, %s535
      %s553 = sphi 0, %s553
      %s555 = sphi 0, %s553
      %s556 = sphi 0, %s555
      %s570 = sphi 0, %s556
      %s574 = sphi 0, %s574
      %s576 = sphi 0, %s574
      %s577 = sphi 0, %s576
      %s591 = sphi 0, %s577
      %s595 = sphi 0, %s595
      %s597 = sphi 0, %s595
      %s598 = sphi 0, %s597
      %s612 = sphi 0, %s598
      %s616 = sphi 0, %s616
      %s618 = sphi 0, %s616
      %s619 = sphi 0, %s618
      %s633 = sphi 0, %s619
      %s637 = sphi 0, %s637
      %s639 = sphi 0, %s637
      %s640 = sphi 0, %s639
      %s654 = sphi 0, %s640
      %s658 = sphi 0, %s658
      %s660 = sphi 0, %s658
      %s661 = sphi 0, %s660
      %s675 = sphi 0, %s661
      %s679 = sphi 0, %s679
      %s681 = sphi 0, %s679
      %s682 = sphi 0, %s681
      %s696 = sphi 0, %s682
      %s700 = sphi 0, %s700
      %s702 = sphi 0, %s700
      %s703 = sphi 0, %s702
      %s717 = sphi 0, %s703
      %s721 = sphi 0, %s721
      %s723 = sphi 0, %s721
      %s724 = sphi 0, %s723
      %s738 = sphi 0, %s724
      %s742 = sphi 0, %s742
      %s744 = sphi 0, %s742
      %s745 = sphi 0, %s744
      %s759 = sphi 0, %s745
      %s763 = sphi 0, %s763
      %s765 = sphi 0, %s763
      %s766 = sphi 0, %s765
      %s780 = sphi 0, %s766
      %s784 = sphi 0, %s784
      %s786 = sphi 0, %s784
      %s787 = sphi 0, %s786
      %s801 = sphi 0, %s787
      %s805 = sphi 0, %s805
      %s807 = sphi 0, %s805
      %s808 = sphi 0, %s807
      %s822 = sphi 0, %s808
      %s828 = sphi 0, %s830
      %s831 = sphi 0, %s828
      %s832 = sphi 0, %s831
      %s848 = sphi 0, %s832
    $region4: #{tpu_custom_call.1} parent=1 // loop_header_branch
      %92 = sbr.rel (%p90) target = $region8
    $region5: #{tpu_custom_call.1} parent=1 // loop_body
      %s94 = ssub.s32 %s89, 1
      %s95 = ssub.s32 %s89, 2
      %s96 = sadd.s32 %s89, 1
      %s97 = ssub.s32 %s89, %s96
      %p98 = scmp.eq.s32.totalorder %s97, 0
      %s100 = sadd.s32 %s99, 1
      %s101 = scalar_select %p98, %s99, %s100
      %p104 = pneg %p98
      %p105 = scmp.eq.s32.totalorder %s89, 1
      %p106 = por %p104, %p105
      %p107 = scmp.ne.s32.totalorder %s99, %s102
      %p108 = scmp.eq.s32.totalorder %s89, 0
      %p109 = por %p107, %p108
      %p110 = scmp.ne.s32.totalorder %s99, %s102
      %p111 = scmp.eq.s32.totalorder %s94, 1
      %p112 = por %p110, %p111
      %p113 = scmp.ne.s32.totalorder %s102, %s103
      %p114 = scmp.eq.s32.totalorder %s94, 0
      %p115 = por %p113, %p114
      %p116 = scmp.ne.s32.totalorder %s102, %s103
      %p117 = scmp.eq.s32.totalorder %s95, 1
      %p118 = por %p116, %p117
      %p120 = scmp.ne.s32.totalorder %s103, %s119
      %p121 = scmp.eq.s32.totalorder %s95, 0
      %p122 = por %p120, %p121
      %s123 = ssub.s32 %s89, %s96
      %p124 = scmp.eq.s32.totalorder %s123, 0
      %s126 = sadd.s32 %s125, 1
      %s127 = scalar_select %p124, %s125, %s126
      %p130 = pneg %p124
      %p131 = scmp.eq.s32.totalorder %s89, 1
      %p132 = por %p130, %p131
      %p133 = scmp.ne.s32.totalorder %s125, %s128
      %p134 = scmp.eq.s32.totalorder %s89, 0
      %p135 = por %p133, %p134
      %p136 = scmp.ne.s32.totalorder %s125, %s128
      %p137 = scmp.eq.s32.totalorder %s94, 1
      %p138 = por %p136, %p137
      %p139 = scmp.ne.s32.totalorder %s128, %s129
      %p140 = scmp.eq.s32.totalorder %s94, 0
      %p141 = por %p139, %p140
      %p142 = scmp.ne.s32.totalorder %s128, %s129
      %p143 = scmp.eq.s32.totalorder %s95, 1
      %p144 = por %p142, %p143
      %p146 = scmp.ne.s32.totalorder %s129, %s145
      %p147 = scmp.eq.s32.totalorder %s95, 0
      %p148 = por %p146, %p147
      %s149 = ssub.s32 %s89, %s96
      %p150 = scmp.eq.s32.totalorder %s149, 0
      %s152 = sadd.s32 %s151, 1
      %s153 = scalar_select %p150, %s151, %s152
      %p156 = pneg %p150
      %p157 = scmp.eq.s32.totalorder %s89, 1
      %p158 = por %p156, %p157
      %p159 = scmp.ne.s32.totalorder %s151, %s154
      %p160 = scmp.eq.s32.totalorder %s89, 0
      %p161 = por %p159, %p160
      %p162 = scmp.ne.s32.totalorder %s151, %s154
      %p163 = scmp.eq.s32.totalorder %s94, 1
      %p164 = por %p162, %p163
      %p165 = scmp.ne.s32.totalorder %s154, %s155
      %p166 = scmp.eq.s32.totalorder %s94, 0
      %p167 = por %p165, %p166
      %p168 = scmp.ne.s32.totalorder %s154, %s155
      %p169 = scmp.eq.s32.totalorder %s95, 1
      %p170 = por %p168, %p169
      %p172 = scmp.ne.s32.totalorder %s155, %s171
      %p173 = scmp.eq.s32.totalorder %s95, 0
      %p174 = por %p172, %p173
      %s176 = sadd.s32 %s175, 1
      %p179 = scmp.eq.s32.totalorder %s89, 1
      %p180 = scmp.ne.s32.totalorder %s175, %s177
      %p181 = scmp.eq.s32.totalorder %s89, 0
      %p182 = por %p180, %p181
      %p183 = scmp.ne.s32.totalorder %s175, %s177
      %p184 = scmp.eq.s32.totalorder %s94, 1
      %p185 = por %p183, %p184
      %p186 = scmp.ne.s32.totalorder %s177, %s178
      %p187 = scmp.eq.s32.totalorder %s94, 0
      %p188 = por %p186, %p187
      %p189 = scmp.ne.s32.totalorder %s177, %s178
      %p190 = scmp.eq.s32.totalorder %s95, 1
      %p191 = por %p189, %p190
      %p193 = scmp.ne.s32.totalorder %s178, %s192
      %p194 = scmp.eq.s32.totalorder %s95, 0
      %p195 = por %p193, %p194
      %s197 = sadd.s32 %s196, 1
      %p200 = scmp.eq.s32.totalorder %s89, 1
      %p201 = scmp.ne.s32.totalorder %s196, %s198
      %p202 = scmp.eq.s32.totalorder %s89, 0
      %p203 = por %p201, %p202
      %p204 = scmp.ne.s32.totalorder %s196, %s198
      %p205 = scmp.eq.s32.totalorder %s94, 1
      %p206 = por %p204, %p205
      %p207 = scmp.ne.s32.totalorder %s198, %s199
      %p208 = scmp.eq.s32.totalorder %s94, 0
      %p209 = por %p207, %p208
      %p210 = scmp.ne.s32.totalorder %s198, %s199
      %p211 = scmp.eq.s32.totalorder %s95, 1
      %p212 = por %p210, %p211
      %p214 = scmp.ne.s32.totalorder %s199, %s213
      %p215 = scmp.eq.s32.totalorder %s95, 0
      %p216 = por %p214, %p215
      %s218 = sadd.s32 %s217, 1
      %p221 = scmp.eq.s32.totalorder %s89, 1
      %p222 = scmp.ne.s32.totalorder %s217, %s219
      %p223 = scmp.eq.s32.totalorder %s89, 0
      %p224 = por %p222, %p223
      %p225 = scmp.ne.s32.totalorder %s217, %s219
      %p226 = scmp.eq.s32.totalorder %s94, 1
      %p227 = por %p225, %p226
      %p228 = scmp.ne.s32.totalorder %s219, %s220
      %p229 = scmp.eq.s32.totalorder %s94, 0
      %p230 = por %p228, %p229
      %p231 = scmp.ne.s32.totalorder %s219, %s220
      %p232 = scmp.eq.s32.totalorder %s95, 1
      %p233 = por %p231, %p232
      %p235 = scmp.ne.s32.totalorder %s220, %s234
      %p236 = scmp.eq.s32.totalorder %s95, 0
      %p237 = por %p235, %p236
      %s239 = sadd.s32 %s238, 1
      %p242 = scmp.eq.s32.totalorder %s89, 1
      %p243 = scmp.ne.s32.totalorder %s238, %s240
      %p244 = scmp.eq.s32.totalorder %s89, 0
      %p245 = por %p243, %p244
      %p246 = scmp.ne.s32.totalorder %s238, %s240
      %p247 = scmp.eq.s32.totalorder %s94, 1
      %p248 = por %p246, %p247
      %p249 = scmp.ne.s32.totalorder %s240, %s241
      %p250 = scmp.eq.s32.totalorder %s94, 0
      %p251 = por %p249, %p250
      %p252 = scmp.ne.s32.totalorder %s240, %s241
      %p253 = scmp.eq.s32.totalorder %s95, 1
      %p254 = por %p252, %p253
      %p256 = scmp.ne.s32.totalorder %s241, %s255
      %p257 = scmp.eq.s32.totalorder %s95, 0
      %p258 = por %p256, %p257
      %s260 = sadd.s32 %s259, 1
      %p263 = scmp.eq.s32.totalorder %s89, 1
      %p264 = scmp.ne.s32.totalorder %s259, %s261
      %p265 = scmp.eq.s32.totalorder %s89, 0
      %p266 = por %p264, %p265
      %p267 = scmp.ne.s32.totalorder %s259, %s261
      %p268 = scmp.eq.s32.totalorder %s94, 1
      %p269 = por %p267, %p268
      %p270 = scmp.ne.s32.totalorder %s261, %s262
      %p271 = scmp.eq.s32.totalorder %s94, 0
      %p272 = por %p270, %p271
      %p273 = scmp.ne.s32.totalorder %s261, %s262
      %p274 = scmp.eq.s32.totalorder %s95, 1
      %p275 = por %p273, %p274
      %p277 = scmp.ne.s32.totalorder %s262, %s276
      %p278 = scmp.eq.s32.totalorder %s95, 0
      %p279 = por %p277, %p278
      %s281 = sadd.s32 %s280, 1
      %p284 = scmp.eq.s32.totalorder %s89, 1
      %p285 = scmp.ne.s32.totalorder %s280, %s282
      %p286 = scmp.eq.s32.totalorder %s89, 0
      %p287 = por %p285, %p286
      %p288 = scmp.ne.s32.totalorder %s280, %s282
      %p289 = scmp.eq.s32.totalorder %s94, 1
      %p290 = por %p288, %p289
      %p291 = scmp.ne.s32.totalorder %s282, %s283
      %p292 = scmp.eq.s32.totalorder %s94, 0
      %p293 = por %p291, %p292
      %p294 = scmp.ne.s32.totalorder %s282, %s283
      %p295 = scmp.eq.s32.totalorder %s95, 1
      %p296 = por %p294, %p295
      %p298 = scmp.ne.s32.totalorder %s283, %s297
      %p299 = scmp.eq.s32.totalorder %s95, 0
      %p300 = por %p298, %p299
      %s302 = sadd.s32 %s301, 1
      %p305 = scmp.eq.s32.totalorder %s89, 1
      %p306 = scmp.ne.s32.totalorder %s301, %s303
      %p307 = scmp.eq.s32.totalorder %s89, 0
      %p308 = por %p306, %p307
      %p309 = scmp.ne.s32.totalorder %s301, %s303
      %p310 = scmp.eq.s32.totalorder %s94, 1
      %p311 = por %p309, %p310
      %p312 = scmp.ne.s32.totalorder %s303, %s304
      %p313 = scmp.eq.s32.totalorder %s94, 0
      %p314 = por %p312, %p313
      %p315 = scmp.ne.s32.totalorder %s303, %s304
      %p316 = scmp.eq.s32.totalorder %s95, 1
      %p317 = por %p315, %p316
      %p319 = scmp.ne.s32.totalorder %s304, %s318
      %p320 = scmp.eq.s32.totalorder %s95, 0
      %p321 = por %p319, %p320
      %s323 = sadd.s32 %s322, 1
      %p326 = scmp.eq.s32.totalorder %s89, 1
      %p327 = scmp.ne.s32.totalorder %s322, %s324
      %p328 = scmp.eq.s32.totalorder %s89, 0
      %p329 = por %p327, %p328
      %p330 = scmp.ne.s32.totalorder %s322, %s324
      %p331 = scmp.eq.s32.totalorder %s94, 1
      %p332 = por %p330, %p331
      %p333 = scmp.ne.s32.totalorder %s324, %s325
      %p334 = scmp.eq.s32.totalorder %s94, 0
      %p335 = por %p333, %p334
      %p336 = scmp.ne.s32.totalorder %s324, %s325
      %p337 = scmp.eq.s32.totalorder %s95, 1
      %p338 = por %p336, %p337
      %p340 = scmp.ne.s32.totalorder %s325, %s339
      %p341 = scmp.eq.s32.totalorder %s95, 0
      %p342 = por %p340, %p341
      %s344 = sadd.s32 %s343, 1
      %p347 = scmp.eq.s32.totalorder %s89, 1
      %p348 = scmp.ne.s32.totalorder %s343, %s345
      %p349 = scmp.eq.s32.totalorder %s89, 0
      %p350 = por %p348, %p349
      %p351 = scmp.ne.s32.totalorder %s343, %s345
      %p352 = scmp.eq.s32.totalorder %s94, 1
      %p353 = por %p351, %p352
      %p354 = scmp.ne.s32.totalorder %s345, %s346
      %p355 = scmp.eq.s32.totalorder %s94, 0
      %p356 = por %p354, %p355
      %p357 = scmp.ne.s32.totalorder %s345, %s346
      %p358 = scmp.eq.s32.totalorder %s95, 1
      %p359 = por %p357, %p358
      %p361 = scmp.ne.s32.totalorder %s346, %s360
      %p362 = scmp.eq.s32.totalorder %s95, 0
      %p363 = por %p361, %p362
      %s365 = sadd.s32 %s364, 1
      %p368 = scmp.eq.s32.totalorder %s89, 1
      %p369 = scmp.ne.s32.totalorder %s364, %s366
      %p370 = scmp.eq.s32.totalorder %s89, 0
      %p371 = por %p369, %p370
      %p372 = scmp.ne.s32.totalorder %s364, %s366
      %p373 = scmp.eq.s32.totalorder %s94, 1
      %p374 = por %p372, %p373
      %p375 = scmp.ne.s32.totalorder %s366, %s367
      %p376 = scmp.eq.s32.totalorder %s94, 0
      %p377 = por %p375, %p376
      %p378 = scmp.ne.s32.totalorder %s366, %s367
      %p379 = scmp.eq.s32.totalorder %s95, 1
      %p380 = por %p378, %p379
      %p382 = scmp.ne.s32.totalorder %s367, %s381
      %p383 = scmp.eq.s32.totalorder %s95, 0
      %p384 = por %p382, %p383
      %s386 = sadd.s32 %s385, 1
      %p389 = scmp.eq.s32.totalorder %s89, 1
      %p390 = scmp.ne.s32.totalorder %s385, %s387
      %p391 = scmp.eq.s32.totalorder %s89, 0
      %p392 = por %p390, %p391
      %p393 = scmp.ne.s32.totalorder %s385, %s387
      %p394 = scmp.eq.s32.totalorder %s94, 1
      %p395 = por %p393, %p394
      %p396 = scmp.ne.s32.totalorder %s387, %s388
      %p397 = scmp.eq.s32.totalorder %s94, 0
      %p398 = por %p396, %p397
      %p399 = scmp.ne.s32.totalorder %s387, %s388
      %p400 = scmp.eq.s32.totalorder %s95, 1
      %p401 = por %p399, %p400
      %p403 = scmp.ne.s32.totalorder %s388, %s402
      %p404 = scmp.eq.s32.totalorder %s95, 0
      %p405 = por %p403, %p404
      %s407 = sadd.s32 %s406, 1
      %p410 = scmp.eq.s32.totalorder %s89, 1
      %p411 = scmp.ne.s32.totalorder %s406, %s408
      %p412 = scmp.eq.s32.totalorder %s89, 0
      %p413 = por %p411, %p412
      %p414 = scmp.ne.s32.totalorder %s406, %s408
      %p415 = scmp.eq.s32.totalorder %s94, 1
      %p416 = por %p414, %p415
      %p417 = scmp.ne.s32.totalorder %s408, %s409
      %p418 = scmp.eq.s32.totalorder %s94, 0
      %p419 = por %p417, %p418
      %p420 = scmp.ne.s32.totalorder %s408, %s409
      %p421 = scmp.eq.s32.totalorder %s95, 1
      %p422 = por %p420, %p421
      %p424 = scmp.ne.s32.totalorder %s409, %s423
      %p425 = scmp.eq.s32.totalorder %s95, 0
      %p426 = por %p424, %p425
      %s428 = sadd.s32 %s427, 1
      %p431 = scmp.eq.s32.totalorder %s89, 1
      %p432 = scmp.ne.s32.totalorder %s427, %s429
      %p433 = scmp.eq.s32.totalorder %s89, 0
      %p434 = por %p432, %p433
      %p435 = scmp.ne.s32.totalorder %s427, %s429
      %p436 = scmp.eq.s32.totalorder %s94, 1
      %p437 = por %p435, %p436
      %p438 = scmp.ne.s32.totalorder %s429, %s430
      %p439 = scmp.eq.s32.totalorder %s94, 0
      %p440 = por %p438, %p439
      %p441 = scmp.ne.s32.totalorder %s429, %s430
      %p442 = scmp.eq.s32.totalorder %s95, 1
      %p443 = por %p441, %p442
      %p445 = scmp.ne.s32.totalorder %s430, %s444
      %p446 = scmp.eq.s32.totalorder %s95, 0
      %p447 = por %p445, %p446
      %s449 = sadd.s32 %s448, 1
      %p452 = scmp.eq.s32.totalorder %s89, 1
      %p453 = scmp.ne.s32.totalorder %s448, %s450
      %p454 = scmp.eq.s32.totalorder %s89, 0
      %p455 = por %p453, %p454
      %p456 = scmp.ne.s32.totalorder %s448, %s450
      %p457 = scmp.eq.s32.totalorder %s94, 1
      %p458 = por %p456, %p457
      %p459 = scmp.ne.s32.totalorder %s450, %s451
      %p460 = scmp.eq.s32.totalorder %s94, 0
      %p461 = por %p459, %p460
      %p462 = scmp.ne.s32.totalorder %s450, %s451
      %p463 = scmp.eq.s32.totalorder %s95, 1
      %p464 = por %p462, %p463
      %p466 = scmp.ne.s32.totalorder %s451, %s465
      %p467 = scmp.eq.s32.totalorder %s95, 0
      %p468 = por %p466, %p467
      %s470 = sadd.s32 %s469, 1
      %p473 = scmp.eq.s32.totalorder %s89, 1
      %p474 = scmp.ne.s32.totalorder %s469, %s471
      %p475 = scmp.eq.s32.totalorder %s89, 0
      %p476 = por %p474, %p475
      %p477 = scmp.ne.s32.totalorder %s469, %s471
      %p478 = scmp.eq.s32.totalorder %s94, 1
      %p479 = por %p477, %p478
      %p480 = scmp.ne.s32.totalorder %s471, %s472
      %p481 = scmp.eq.s32.totalorder %s94, 0
      %p482 = por %p480, %p481
      %p483 = scmp.ne.s32.totalorder %s471, %s472
      %p484 = scmp.eq.s32.totalorder %s95, 1
      %p485 = por %p483, %p484
      %p487 = scmp.ne.s32.totalorder %s472, %s486
      %p488 = scmp.eq.s32.totalorder %s95, 0
      %p489 = por %p487, %p488
      %s491 = sadd.s32 %s490, 1
      %p494 = scmp.eq.s32.totalorder %s89, 1
      %p495 = scmp.ne.s32.totalorder %s490, %s492
      %p496 = scmp.eq.s32.totalorder %s89, 0
      %p497 = por %p495, %p496
      %p498 = scmp.ne.s32.totalorder %s490, %s492
      %p499 = scmp.eq.s32.totalorder %s94, 1
      %p500 = por %p498, %p499
      %p501 = scmp.ne.s32.totalorder %s492, %s493
      %p502 = scmp.eq.s32.totalorder %s94, 0
      %p503 = por %p501, %p502
      %p504 = scmp.ne.s32.totalorder %s492, %s493
      %p505 = scmp.eq.s32.totalorder %s95, 1
      %p506 = por %p504, %p505
      %p508 = scmp.ne.s32.totalorder %s493, %s507
      %p509 = scmp.eq.s32.totalorder %s95, 0
      %p510 = por %p508, %p509
      %s512 = sadd.s32 %s511, 1
      %p515 = scmp.eq.s32.totalorder %s89, 1
      %p516 = scmp.ne.s32.totalorder %s511, %s513
      %p517 = scmp.eq.s32.totalorder %s89, 0
      %p518 = por %p516, %p517
      %p519 = scmp.ne.s32.totalorder %s511, %s513
      %p520 = scmp.eq.s32.totalorder %s94, 1
      %p521 = por %p519, %p520
      %p522 = scmp.ne.s32.totalorder %s513, %s514
      %p523 = scmp.eq.s32.totalorder %s94, 0
      %p524 = por %p522, %p523
      %p525 = scmp.ne.s32.totalorder %s513, %s514
      %p526 = scmp.eq.s32.totalorder %s95, 1
      %p527 = por %p525, %p526
      %p529 = scmp.ne.s32.totalorder %s514, %s528
      %p530 = scmp.eq.s32.totalorder %s95, 0
      %p531 = por %p529, %p530
      %s533 = sadd.s32 %s532, 1
      %p536 = scmp.eq.s32.totalorder %s89, 1
      %p537 = scmp.ne.s32.totalorder %s532, %s534
      %p538 = scmp.eq.s32.totalorder %s89, 0
      %p539 = por %p537, %p538
      %p540 = scmp.ne.s32.totalorder %s532, %s534
      %p541 = scmp.eq.s32.totalorder %s94, 1
      %p542 = por %p540, %p541
      %p543 = scmp.ne.s32.totalorder %s534, %s535
      %p544 = scmp.eq.s32.totalorder %s94, 0
      %p545 = por %p543, %p544
      %p546 = scmp.ne.s32.totalorder %s534, %s535
      %p547 = scmp.eq.s32.totalorder %s95, 1
      %p548 = por %p546, %p547
      %p550 = scmp.ne.s32.totalorder %s535, %s549
      %p551 = scmp.eq.s32.totalorder %s95, 0
      %p552 = por %p550, %p551
      %s554 = sadd.s32 %s553, 1
      %p557 = scmp.eq.s32.totalorder %s89, 1
      %p558 = scmp.ne.s32.totalorder %s553, %s555
      %p559 = scmp.eq.s32.totalorder %s89, 0
      %p560 = por %p558, %p559
      %p561 = scmp.ne.s32.totalorder %s553, %s555
      %p562 = scmp.eq.s32.totalorder %s94, 1
      %p563 = por %p561, %p562
      %p564 = scmp.ne.s32.totalorder %s555, %s556
      %p565 = scmp.eq.s32.totalorder %s94, 0
      %p566 = por %p564, %p565
      %p567 = scmp.ne.s32.totalorder %s555, %s556
      %p568 = scmp.eq.s32.totalorder %s95, 1
      %p569 = por %p567, %p568
      %p571 = scmp.ne.s32.totalorder %s556, %s570
      %p572 = scmp.eq.s32.totalorder %s95, 0
      %p573 = por %p571, %p572
      %s575 = sadd.s32 %s574, 1
      %p578 = scmp.eq.s32.totalorder %s89, 1
      %p579 = scmp.ne.s32.totalorder %s574, %s576
      %p580 = scmp.eq.s32.totalorder %s89, 0
      %p581 = por %p579, %p580
      %p582 = scmp.ne.s32.totalorder %s574, %s576
      %p583 = scmp.eq.s32.totalorder %s94, 1
      %p584 = por %p582, %p583
      %p585 = scmp.ne.s32.totalorder %s576, %s577
      %p586 = scmp.eq.s32.totalorder %s94, 0
      %p587 = por %p585, %p586
      %p588 = scmp.ne.s32.totalorder %s576, %s577
      %p589 = scmp.eq.s32.totalorder %s95, 1
      %p590 = por %p588, %p589
      %p592 = scmp.ne.s32.totalorder %s577, %s591
      %p593 = scmp.eq.s32.totalorder %s95, 0
      %p594 = por %p592, %p593
      %s596 = sadd.s32 %s595, 1
      %p599 = scmp.eq.s32.totalorder %s89, 1
      %p600 = scmp.ne.s32.totalorder %s595, %s597
      %p601 = scmp.eq.s32.totalorder %s89, 0
      %p602 = por %p600, %p601
      %p603 = scmp.ne.s32.totalorder %s595, %s597
      %p604 = scmp.eq.s32.totalorder %s94, 1
      %p605 = por %p603, %p604
      %p606 = scmp.ne.s32.totalorder %s597, %s598
      %p607 = scmp.eq.s32.totalorder %s94, 0
      %p608 = por %p606, %p607
      %p609 = scmp.ne.s32.totalorder %s597, %s598
      %p610 = scmp.eq.s32.totalorder %s95, 1
      %p611 = por %p609, %p610
      %p613 = scmp.ne.s32.totalorder %s598, %s612
      %p614 = scmp.eq.s32.totalorder %s95, 0
      %p615 = por %p613, %p614
      %s617 = sadd.s32 %s616, 1
      %p620 = scmp.eq.s32.totalorder %s89, 1
      %p621 = scmp.ne.s32.totalorder %s616, %s618
      %p622 = scmp.eq.s32.totalorder %s89, 0
      %p623 = por %p621, %p622
      %p624 = scmp.ne.s32.totalorder %s616, %s618
      %p625 = scmp.eq.s32.totalorder %s94, 1
      %p626 = por %p624, %p625
      %p627 = scmp.ne.s32.totalorder %s618, %s619
      %p628 = scmp.eq.s32.totalorder %s94, 0
      %p629 = por %p627, %p628
      %p630 = scmp.ne.s32.totalorder %s618, %s619
      %p631 = scmp.eq.s32.totalorder %s95, 1
      %p632 = por %p630, %p631
      %p634 = scmp.ne.s32.totalorder %s619, %s633
      %p635 = scmp.eq.s32.totalorder %s95, 0
      %p636 = por %p634, %p635
      %s638 = sadd.s32 %s637, 1
      %p641 = scmp.eq.s32.totalorder %s89, 1
      %p642 = scmp.ne.s32.totalorder %s637, %s639
      %p643 = scmp.eq.s32.totalorder %s89, 0
      %p644 = por %p642, %p643
      %p645 = scmp.ne.s32.totalorder %s637, %s639
      %p646 = scmp.eq.s32.totalorder %s94, 1
      %p647 = por %p645, %p646
      %p648 = scmp.ne.s32.totalorder %s639, %s640
      %p649 = scmp.eq.s32.totalorder %s94, 0
      %p650 = por %p648, %p649
      %p651 = scmp.ne.s32.totalorder %s639, %s640
      %p652 = scmp.eq.s32.totalorder %s95, 1
      %p653 = por %p651, %p652
      %p655 = scmp.ne.s32.totalorder %s640, %s654
      %p656 = scmp.eq.s32.totalorder %s95, 0
      %p657 = por %p655, %p656
      %s659 = sadd.s32 %s658, 1
      %p662 = scmp.eq.s32.totalorder %s89, 1
      %p663 = scmp.ne.s32.totalorder %s658, %s660
      %p664 = scmp.eq.s32.totalorder %s89, 0
      %p665 = por %p663, %p664
      %p666 = scmp.ne.s32.totalorder %s658, %s660
      %p667 = scmp.eq.s32.totalorder %s94, 1
      %p668 = por %p666, %p667
      %p669 = scmp.ne.s32.totalorder %s660, %s661
      %p670 = scmp.eq.s32.totalorder %s94, 0
      %p671 = por %p669, %p670
      %p672 = scmp.ne.s32.totalorder %s660, %s661
      %p673 = scmp.eq.s32.totalorder %s95, 1
      %p674 = por %p672, %p673
      %p676 = scmp.ne.s32.totalorder %s661, %s675
      %p677 = scmp.eq.s32.totalorder %s95, 0
      %p678 = por %p676, %p677
      %s680 = sadd.s32 %s679, 1
      %p683 = scmp.eq.s32.totalorder %s89, 1
      %p684 = scmp.ne.s32.totalorder %s679, %s681
      %p685 = scmp.eq.s32.totalorder %s89, 0
      %p686 = por %p684, %p685
      %p687 = scmp.ne.s32.totalorder %s679, %s681
      %p688 = scmp.eq.s32.totalorder %s94, 1
      %p689 = por %p687, %p688
      %p690 = scmp.ne.s32.totalorder %s681, %s682
      %p691 = scmp.eq.s32.totalorder %s94, 0
      %p692 = por %p690, %p691
      %p693 = scmp.ne.s32.totalorder %s681, %s682
      %p694 = scmp.eq.s32.totalorder %s95, 1
      %p695 = por %p693, %p694
      %p697 = scmp.ne.s32.totalorder %s682, %s696
      %p698 = scmp.eq.s32.totalorder %s95, 0
      %p699 = por %p697, %p698
      %s701 = sadd.s32 %s700, 1
      %p704 = scmp.eq.s32.totalorder %s89, 1
      %p705 = scmp.ne.s32.totalorder %s700, %s702
      %p706 = scmp.eq.s32.totalorder %s89, 0
      %p707 = por %p705, %p706
      %p708 = scmp.ne.s32.totalorder %s700, %s702
      %p709 = scmp.eq.s32.totalorder %s94, 1
      %p710 = por %p708, %p709
      %p711 = scmp.ne.s32.totalorder %s702, %s703
      %p712 = scmp.eq.s32.totalorder %s94, 0
      %p713 = por %p711, %p712
      %p714 = scmp.ne.s32.totalorder %s702, %s703
      %p715 = scmp.eq.s32.totalorder %s95, 1
      %p716 = por %p714, %p715
      %p718 = scmp.ne.s32.totalorder %s703, %s717
      %p719 = scmp.eq.s32.totalorder %s95, 0
      %p720 = por %p718, %p719
      %s722 = sadd.s32 %s721, 1
      %p725 = scmp.eq.s32.totalorder %s89, 1
      %p726 = scmp.ne.s32.totalorder %s721, %s723
      %p727 = scmp.eq.s32.totalorder %s89, 0
      %p728 = por %p726, %p727
      %p729 = scmp.ne.s32.totalorder %s721, %s723
      %p730 = scmp.eq.s32.totalorder %s94, 1
      %p731 = por %p729, %p730
      %p732 = scmp.ne.s32.totalorder %s723, %s724
      %p733 = scmp.eq.s32.totalorder %s94, 0
      %p734 = por %p732, %p733
      %p735 = scmp.ne.s32.totalorder %s723, %s724
      %p736 = scmp.eq.s32.totalorder %s95, 1
      %p737 = por %p735, %p736
      %p739 = scmp.ne.s32.totalorder %s724, %s738
      %p740 = scmp.eq.s32.totalorder %s95, 0
      %p741 = por %p739, %p740
      %s743 = sadd.s32 %s742, 1
      %p746 = scmp.eq.s32.totalorder %s89, 1
      %p747 = scmp.ne.s32.totalorder %s742, %s744
      %p748 = scmp.eq.s32.totalorder %s89, 0
      %p749 = por %p747, %p748
      %p750 = scmp.ne.s32.totalorder %s742, %s744
      %p751 = scmp.eq.s32.totalorder %s94, 1
      %p752 = por %p750, %p751
      %p753 = scmp.ne.s32.totalorder %s744, %s745
      %p754 = scmp.eq.s32.totalorder %s94, 0
      %p755 = por %p753, %p754
      %p756 = scmp.ne.s32.totalorder %s744, %s745
      %p757 = scmp.eq.s32.totalorder %s95, 1
      %p758 = por %p756, %p757
      %p760 = scmp.ne.s32.totalorder %s745, %s759
      %p761 = scmp.eq.s32.totalorder %s95, 0
      %p762 = por %p760, %p761
      %s764 = sadd.s32 %s763, 1
      %p767 = scmp.eq.s32.totalorder %s89, 1
      %p768 = scmp.ne.s32.totalorder %s763, %s765
      %p769 = scmp.eq.s32.totalorder %s89, 0
      %p770 = por %p768, %p769
      %p771 = scmp.ne.s32.totalorder %s763, %s765
      %p772 = scmp.eq.s32.totalorder %s94, 1
      %p773 = por %p771, %p772
      %p774 = scmp.ne.s32.totalorder %s765, %s766
      %p775 = scmp.eq.s32.totalorder %s94, 0
      %p776 = por %p774, %p775
      %p777 = scmp.ne.s32.totalorder %s765, %s766
      %p778 = scmp.eq.s32.totalorder %s95, 1
      %p779 = por %p777, %p778
      %p781 = scmp.ne.s32.totalorder %s766, %s780
      %p782 = scmp.eq.s32.totalorder %s95, 0
      %p783 = por %p781, %p782
      %s785 = sadd.s32 %s784, 1
      %p788 = scmp.eq.s32.totalorder %s89, 1
      %p789 = scmp.ne.s32.totalorder %s784, %s786
      %p790 = scmp.eq.s32.totalorder %s89, 0
      %p791 = por %p789, %p790
      %p792 = scmp.ne.s32.totalorder %s784, %s786
      %p793 = scmp.eq.s32.totalorder %s94, 1
      %p794 = por %p792, %p793
      %p795 = scmp.ne.s32.totalorder %s786, %s787
      %p796 = scmp.eq.s32.totalorder %s94, 0
      %p797 = por %p795, %p796
      %p798 = scmp.ne.s32.totalorder %s786, %s787
      %p799 = scmp.eq.s32.totalorder %s95, 1
      %p800 = por %p798, %p799
      %p802 = scmp.ne.s32.totalorder %s787, %s801
      %p803 = scmp.eq.s32.totalorder %s95, 0
      %p804 = por %p802, %p803
      %s806 = sadd.s32 %s805, 1
      %p809 = scmp.eq.s32.totalorder %s89, 1
      %p810 = scmp.ne.s32.totalorder %s805, %s807
      %p811 = scmp.eq.s32.totalorder %s89, 0
      %p812 = por %p810, %p811
      %p813 = scmp.ne.s32.totalorder %s805, %s807
      %p814 = scmp.eq.s32.totalorder %s94, 1
      %p815 = por %p813, %p814
      %p816 = scmp.ne.s32.totalorder %s807, %s808
      %p817 = scmp.eq.s32.totalorder %s94, 0
      %p818 = por %p816, %p817
      %p819 = scmp.ne.s32.totalorder %s807, %s808
      %p820 = scmp.eq.s32.totalorder %s95, 1
      %p821 = por %p819, %p820
      %p823 = scmp.ne.s32.totalorder %s808, %s822
      %p824 = scmp.eq.s32.totalorder %s95, 0
      %p825 = por %p823, %p824
      %s826 = ssub.s32 %s89, %s96
      %p827 = scmp.eq.s32.totalorder %s826, 0
      %s829 = sadd.s32 %s828, 1
      %s830 = scalar_select %p827, %s828, %s829
      %p833 = pneg %p827
      %p834 = scmp.eq.s32.totalorder %s89, 1
      %p835 = por %p833, %p834
      %p836 = scmp.ne.s32.totalorder %s828, %s831
      %p837 = scmp.eq.s32.totalorder %s89, 0
      %p838 = por %p836, %p837
      %p839 = scmp.ne.s32.totalorder %s828, %s831
      %p840 = scmp.eq.s32.totalorder %s94, 1
      %p841 = por %p839, %p840
      %p842 = scmp.ne.s32.totalorder %s831, %s832
      %p843 = scmp.eq.s32.totalorder %s94, 0
      %p844 = por %p842, %p843
      %p845 = scmp.ne.s32.totalorder %s831, %s832
      %p846 = scmp.eq.s32.totalorder %s95, 1
      %p847 = por %p845, %p846
      %p849 = scmp.ne.s32.totalorder %s832, %s848
      %p850 = scmp.eq.s32.totalorder %s95, 0
      %p851 = por %p849, %p850
      %p852 = scmp.le.s32.totalorder 1, %s89
      %p853 = scmp.lt.s32.totalorder %s89, 3
      %p854 = pnand %p852, %p853
      %p855 = pneg %p854
      // Predicated region
      $region9: #{tpu_custom_call.1} parent=5 // pred_check
        _
      $region10: #{tpu_custom_call.1} parent=5 // pred_check_branch
        %857 = sbr.rel (%p854) target = $region12
      $region11: #{tpu_custom_call.1} parent=5 // pred_region
        %s858 = ssub.s32 %s89, 1
        // Predicated region
        $region13: #{tpu_custom_call.1} parent=11 // pred_check
          %p859 = pneg %p188
        $region14: #{tpu_custom_call.1} parent=11 // pred_check_branch
          %861 = sbr.rel (%p859) target = $region16
        $region15: #{tpu_custom_call.1} parent=11 // pred_region
          %s863 = ssub.s32 128, 128
          %864 = vsyncadd [#allocation7], %s863
          %s865 = sshll.u32 [#allocation8], 4
          %s866 = int_to_ptr.vmem [resolvable:$true] %s865
          %871 = dma.hbm_to_vmem [thread:$0]  %s7, 128, %s866, [#allocation7], 64, 64, 4
        $region16: #{tpu_custom_call.1} parent=11 // pred_fallthru
          _
        // Predicated region
        $region17: #{tpu_custom_call.1} parent=11 // pred_check
          %p872 = pneg %p209
        $region18: #{tpu_custom_call.1} parent=11 // pred_check_branch
          %874 = sbr.rel (%p872) target = $region20
        $region19: #{tpu_custom_call.1} parent=11 // pred_region
          %s876 = ssub.s32 128, 128
          %877 = vsyncadd [#allocation10], %s876
          %s878 = sshll.u32 [#allocation9], 4
          %s879 = int_to_ptr.vmem [resolvable:$true] %s878
          %884 = dma.hbm_to_vmem [thread:$0]  %s9, 128, %s879, [#allocation10], 64, 64, 4
        $region20: #{tpu_custom_call.1} parent=11 // pred_fallthru
          _
        // Predicated region
        $region21: #{tpu_custom_call.1} parent=11 // pred_check
          %p885 = pneg %p230
        $region22: #{tpu_custom_call.1} parent=11 // pred_check_branch
          %887 = sbr.rel (%p885) target = $region24
        $region23: #{tpu_custom_call.1} parent=11 // pred_region
          _
        $region24: #{tpu_custom_call.1} parent=11 // pred_fallthru
          _
        // Predicated region
        $region25: #{tpu_custom_call.1} parent=11 // pred_check
          %p888 = pneg %p251
        $region26: #{tpu_custom_call.1} parent=11 // pred_check_branch
          %890 = sbr.rel (%p888) target = $region28
        $region27: #{tpu_custom_call.1} parent=11 // pred_region
          _
        $region28: #{tpu_custom_call.1} parent=11 // pred_fallthru
          _
        // Predicated region
        $region29: #{tpu_custom_call.1} parent=11 // pred_check
          %p891 = pneg %p272
        $region30: #{tpu_custom_call.1} parent=11 // pred_check_branch
          %893 = sbr.rel (%p891) target = $region32
        $region31: #{tpu_custom_call.1} parent=11 // pred_region
          %s895 = ssub.s32 16, 16
          %896 = vsyncadd [#allocation10], %s895
          %s898 = sshll.u32 [#allocation11], 4
          %s899 = int_to_ptr.vmem [resolvable:$true] %s898
          %901 = dma.hbm_to_vmem [thread:$0]  %s15, 16, %s899, [#allocation10]
        $region32: #{tpu_custom_call.1} parent=11 // pred_fallthru
          _
        // Predicated region
        $region33: #{tpu_custom_call.1} parent=11 // pred_check
          %p902 = pneg %p293
        $region34: #{tpu_custom_call.1} parent=11 // pred_check_branch
          %904 = sbr.rel (%p902) target = $region36
        $region35: #{tpu_custom_call.1} parent=11 // pred_region
          %s906 = ssub.s32 16, 16
          %907 = vsyncadd [#allocation13], %s906
          %s909 = sshll.u32 [#allocation12], 4
          %s910 = int_to_ptr.vmem [resolvable:$true] %s909
          %912 = dma.hbm_to_vmem [thread:$0]  %s17, 16, %s910, [#allocation13]
        $region36: #{tpu_custom_call.1} parent=11 // pred_fallthru
          _
        // Predicated region
        $region37: #{tpu_custom_call.1} parent=11 // pred_check
          %p913 = pneg %p314
        $region38: #{tpu_custom_call.1} parent=11 // pred_check_branch
          %915 = sbr.rel (%p913) target = $region40
        $region39: #{tpu_custom_call.1} parent=11 // pred_region
          _
        $region40: #{tpu_custom_call.1} parent=11 // pred_fallthru
          _
        // Predicated region
        $region41: #{tpu_custom_call.1} parent=11 // pred_check
          %p916 = pneg %p335
        $region42: #{tpu_custom_call.1} parent=11 // pred_check_branch
          %918 = sbr.rel (%p916) target = $region44
        $region43: #{tpu_custom_call.1} parent=11 // pred_region
          %s920 = ssub.s32 64, 64
          %921 = vsyncadd [#allocation13], %s920
          %s923 = sshll.u32 [#allocation14], 4
          %s924 = int_to_ptr.vmem [resolvable:$true] %s923
          %926 = dma.hbm_to_vmem [thread:$0]  %s21, 64, %s924, [#allocation13]
        $region44: #{tpu_custom_call.1} parent=11 // pred_fallthru
          _
        // Predicated region
        $region45: #{tpu_custom_call.1} parent=11 // pred_check
          %p927 = pneg %p356
        $region46: #{tpu_custom_call.1} parent=11 // pred_check_branch
          %929 = sbr.rel (%p927) target = $region48
        $region47: #{tpu_custom_call.1} parent=11 // pred_region
          %s931 = ssub.s32 4608, 4608
          %932 = vsyncadd [#allocation16], %s931
          %s933 = sshll.u32 [#allocation15], 4
          %s934 = int_to_ptr.vmem [resolvable:$true] %s933
          %939 = dma.hbm_to_vmem [thread:$0]  %s23, 4608, %s934, [#allocation16], 384, 384, 24
        $region48: #{tpu_custom_call.1} parent=11 // pred_fallthru
          _
        // Predicated region
        $region49: #{tpu_custom_call.1} parent=11 // pred_check
          %p940 = pneg %p377
        $region50: #{tpu_custom_call.1} parent=11 // pred_check_branch
          %942 = sbr.rel (%p940) target = $region52
        $region51: #{tpu_custom_call.1} parent=11 // pred_region
          %s944 = ssub.s32 96, 96
          %945 = vsyncadd [#allocation16], %s944
          %s947 = sshll.u32 [#allocation17], 4
          %s948 = int_to_ptr.vmem [resolvable:$true] %s947
          %950 = dma.hbm_to_vmem [thread:$0]  %s25, 96, %s948, [#allocation16]
        $region52: #{tpu_custom_call.1} parent=11 // pred_fallthru
          _
        // Predicated region
        $region53: #{tpu_custom_call.1} parent=11 // pred_check
          %p951 = pneg %p398
        $region54: #{tpu_custom_call.1} parent=11 // pred_check_branch
          %953 = sbr.rel (%p951) target = $region56
        $region55: #{tpu_custom_call.1} parent=11 // pred_region
          %s955 = ssub.s32 16, 16
          %956 = vsyncadd [#allocation19], %s955
          %s958 = sshll.u32 [#allocation18], 4
          %s959 = int_to_ptr.vmem [resolvable:$true] %s958
          %961 = dma.hbm_to_vmem [thread:$0]  %s27, 16, %s959, [#allocation19]
        $region56: #{tpu_custom_call.1} parent=11 // pred_fallthru
          _
        // Predicated region
        $region57: #{tpu_custom_call.1} parent=11 // pred_check
          %p962 = pneg %p419
        $region58: #{tpu_custom_call.1} parent=11 // pred_check_branch
          %964 = sbr.rel (%p962) target = $region60
        $region59: #{tpu_custom_call.1} parent=11 // pred_region
          %s966 = ssub.s32 4608, 4608
          %967 = vsyncadd [#allocation19], %s966
          %s968 = sshll.u32 [#allocation20], 4
          %s969 = int_to_ptr.vmem [resolvable:$true] %s968
          %974 = dma.hbm_to_vmem [thread:$0]  %s29, 4608, %s969, [#allocation19], 384, 384, 24
        $region60: #{tpu_custom_call.1} parent=11 // pred_fallthru
          _
        // Predicated region
        $region61: #{tpu_custom_call.1} parent=11 // pred_check
          %p975 = pneg %p440
        $region62: #{tpu_custom_call.1} parent=11 // pred_check_branch
          %977 = sbr.rel (%p975) target = $region64
        $region63: #{tpu_custom_call.1} parent=11 // pred_region
          %s979 = ssub.s32 96, 96
          %980 = vsyncadd [#allocation22], %s979
          %s982 = sshll.u32 [#allocation21], 4
          %s983 = int_to_ptr.vmem [resolvable:$true] %s982
          %985 = dma.hbm_to_vmem [thread:$0]  %s31, 96, %s983, [#allocation22]
        $region64: #{tpu_custom_call.1} parent=11 // pred_fallthru
          _
        // Predicated region
        $region65: #{tpu_custom_call.1} parent=11 // pred_check
          %p986 = pneg %p461
        $region66: #{tpu_custom_call.1} parent=11 // pred_check_branch
          %988 = sbr.rel (%p986) target = $region68
        $region67: #{tpu_custom_call.1} parent=11 // pred_region
          %s990 = ssub.s32 16, 16
          %991 = vsyncadd [#allocation22], %s990
          %s993 = sshll.u32 [#allocation23], 4
          %s994 = int_to_ptr.vmem [resolvable:$true] %s993
          %996 = dma.hbm_to_vmem [thread:$0]  %s33, 16, %s994, [#allocation22]
        $region68: #{tpu_custom_call.1} parent=11 // pred_fallthru
          _
        // Predicated region
        $region69: #{tpu_custom_call.1} parent=11 // pred_check
          %p997 = pneg %p482
        $region70: #{tpu_custom_call.1} parent=11 // pred_check_branch
          %999 = sbr.rel (%p997) target = $region72
        $region71: #{tpu_custom_call.1} parent=11 // pred_region
          _
        $region72: #{tpu_custom_call.1} parent=11 // pred_fallthru
          _
        // Predicated region
        $region73: #{tpu_custom_call.1} parent=11 // pred_check
          %p1000 = pneg %p503
        $region74: #{tpu_custom_call.1} parent=11 // pred_check_branch
          %1002 = sbr.rel (%p1000) target = $region76
        $region75: #{tpu_custom_call.1} parent=11 // pred_region
          %s1004 = ssub.s32 16, 16
          %1005 = vsyncadd [#allocation25], %s1004
          %s1007 = sshll.u32 [#allocation24], 4
          %s1008 = int_to_ptr.vmem [resolvable:$true] %s1007
          %1010 = dma.hbm_to_vmem [thread:$0]  %s37, 16, %s1008, [#allocation25]
        $region76: #{tpu_custom_call.1} parent=11 // pred_fallthru
          _
        // Predicated region
        $region77: #{tpu_custom_call.1} parent=11 // pred_check
          %p1011 = pneg %p524
        $region78: #{tpu_custom_call.1} parent=11 // pred_check_branch
          %1013 = sbr.rel (%p1011) target = $region80
        $region79: #{tpu_custom_call.1} parent=11 // pred_region
          _
        $region80: #{tpu_custom_call.1} parent=11 // pred_fallthru
          _
        // Predicated region
        $region81: #{tpu_custom_call.1} parent=11 // pred_check
          %p1014 = pneg %p545
        $region82: #{tpu_custom_call.1} parent=11 // pred_check_branch
          %1016 = sbr.rel (%p1014) target = $region84
        $region83: #{tpu_custom_call.1} parent=11 // pred_region
          %s1018 = ssub.s32 16, 16
          %1019 = vsyncadd [#allocation25], %s1018
          %s1021 = sshll.u32 [#allocation26], 4
          %s1022 = int_to_ptr.vmem [resolvable:$true] %s1021
          %1024 = dma.hbm_to_vmem [thread:$0]  %s41, 16, %s1022, [#allocation25]
        $region84: #{tpu_custom_call.1} parent=11 // pred_fallthru
          _
        // Predicated region
        $region85: #{tpu_custom_call.1} parent=11 // pred_check
          %p1025 = pneg %p566
        $region86: #{tpu_custom_call.1} parent=11 // pred_check_branch
          %1027 = sbr.rel (%p1025) target = $region88
        $region87: #{tpu_custom_call.1} parent=11 // pred_region
          _
        $region88: #{tpu_custom_call.1} parent=11 // pred_fallthru
          _
        // Predicated region
        $region89: #{tpu_custom_call.1} parent=11 // pred_check
          %p1028 = pneg %p587
        $region90: #{tpu_custom_call.1} parent=11 // pred_check_branch
          %1030 = sbr.rel (%p1028) target = $region92
        $region91: #{tpu_custom_call.1} parent=11 // pred_region
          _
        $region92: #{tpu_custom_call.1} parent=11 // pred_fallthru
          _
        // Predicated region
        $region93: #{tpu_custom_call.1} parent=11 // pred_check
          %p1031 = pneg %p608
        $region94: #{tpu_custom_call.1} parent=11 // pred_check_branch
          %1033 = sbr.rel (%p1031) target = $region96
        $region95: #{tpu_custom_call.1} parent=11 // pred_region
          _
        $region96: #{tpu_custom_call.1} parent=11 // pred_fallthru
          _
        // Predicated region
        $region97: #{tpu_custom_call.1} parent=11 // pred_check
          %p1034 = pneg %p629
        $region98: #{tpu_custom_call.1} parent=11 // pred_check_branch
          %1036 = sbr.rel (%p1034) target = $region100
        $region99: #{tpu_custom_call.1} parent=11 // pred_region
          _
        $region100: #{tpu_custom_call.1} parent=11 // pred_fallthru
          _
        // Predicated region
        $region101: #{tpu_custom_call.1} parent=11 // pred_check
          %p1037 = pneg %p650
        $region102: #{tpu_custom_call.1} parent=11 // pred_check_branch
          %1039 = sbr.rel (%p1037) target = $region104
        $region103: #{tpu_custom_call.1} parent=11 // pred_region
          _
        $region104: #{tpu_custom_call.1} parent=11 // pred_fallthru
          _
        // Predicated region
        $region105: #{tpu_custom_call.1} parent=11 // pred_check
          %p1040 = pneg %p671
        $region106: #{tpu_custom_call.1} parent=11 // pred_check_branch
          %1042 = sbr.rel (%p1040) target = $region108
        $region107: #{tpu_custom_call.1} parent=11 // pred_region
          _
        $region108: #{tpu_custom_call.1} parent=11 // pred_fallthru
          _
        // Predicated region
        $region109: #{tpu_custom_call.1} parent=11 // pred_check
          %p1043 = pneg %p692
        $region110: #{tpu_custom_call.1} parent=11 // pred_check_branch
          %1045 = sbr.rel (%p1043) target = $region112
        $region111: #{tpu_custom_call.1} parent=11 // pred_region
          _
        $region112: #{tpu_custom_call.1} parent=11 // pred_fallthru
          _
        // Predicated region
        $region113: #{tpu_custom_call.1} parent=11 // pred_check
          %p1046 = pneg %p713
        $region114: #{tpu_custom_call.1} parent=11 // pred_check_branch
          %1048 = sbr.rel (%p1046) target = $region116
        $region115: #{tpu_custom_call.1} parent=11 // pred_region
          _
        $region116: #{tpu_custom_call.1} parent=11 // pred_fallthru
          _
        // Predicated region
        $region117: #{tpu_custom_call.1} parent=11 // pred_check
          %p1049 = pneg %p734
        $region118: #{tpu_custom_call.1} parent=11 // pred_check_branch
          %1051 = sbr.rel (%p1049) target = $region120
        $region119: #{tpu_custom_call.1} parent=11 // pred_region
          _
        $region120: #{tpu_custom_call.1} parent=11 // pred_fallthru
          _
        // Predicated region
        $region121: #{tpu_custom_call.1} parent=11 // pred_check
          %p1052 = pneg %p755
        $region122: #{tpu_custom_call.1} parent=11 // pred_check_branch
          %1054 = sbr.rel (%p1052) target = $region124
        $region123: #{tpu_custom_call.1} parent=11 // pred_region
          _
        $region124: #{tpu_custom_call.1} parent=11 // pred_fallthru
          _
        // Predicated region
        $region125: #{tpu_custom_call.1} parent=11 // pred_check
          %p1055 = pneg %p776
        $region126: #{tpu_custom_call.1} parent=11 // pred_check_branch
          %1057 = sbr.rel (%p1055) target = $region128
        $region127: #{tpu_custom_call.1} parent=11 // pred_region
          _
        $region128: #{tpu_custom_call.1} parent=11 // pred_fallthru
          _
        // Predicated region
        $region129: #{tpu_custom_call.1} parent=11 // pred_check
          %p1058 = pneg %p797
        $region130: #{tpu_custom_call.1} parent=11 // pred_check_branch
          %1060 = sbr.rel (%p1058) target = $region132
        $region131: #{tpu_custom_call.1} parent=11 // pred_region
          _
        $region132: #{tpu_custom_call.1} parent=11 // pred_fallthru
          _
        // Predicated region
        $region133: #{tpu_custom_call.1} parent=11 // pred_check
          %p1061 = pneg %p818
        $region134: #{tpu_custom_call.1} parent=11 // pred_check_branch
          %1063 = sbr.rel (%p1061) target = $region136
        $region135: #{tpu_custom_call.1} parent=11 // pred_region
          %s1065 = ssub.s32 16, 16
          %1066 = vsyncadd [#allocation5], %s1065
          %s1068 = sshll.u32 %s67, 4
          %s1069 = int_to_ptr.vmem [resolvable:$true] %s1068
          %1071 = dma.vmem_to_smem %s1069, 16, [#allocation27], [#allocation5]
        $region136: #{tpu_custom_call.1} parent=11 // pred_fallthru
          _
      $region12: #{tpu_custom_call.1} parent=5 // pred_fallthru
        _
      %p1072 = scmp.lt.s32.totalorder %s89, 2
      // Predicated region
      $region137: #{tpu_custom_call.1} parent=5 // pred_check
        %p1073 = pneg %p1072
      $region138: #{tpu_custom_call.1} parent=5 // pred_check_branch
        %1075 = sbr.rel (%p1073) target = $region140
      $region139: #{tpu_custom_call.1} parent=5 // pred_region
        // Predicated region
        $region141: #{tpu_custom_call.1} parent=139 // pred_check
          %p1076 = pneg %p109
        $region142: #{tpu_custom_call.1} parent=139 // pred_check_branch
          %1078 = sbr.rel (%p1076) target = $region144
        $region143: #{tpu_custom_call.1} parent=139 // pred_region
          %s1079 = sand.u32 %s99, 1
          %s1080 = scalar_lea.sflag [#allocation4], %s1079
          %s1081 = sand.u32 %s99, 1
          %s1082 = smul.addr %s1081, 8
          %s1083 = scalar_lea.vmem [#allocation3], %s1082
          %s1085 = ssub.s32 128, 128
          %1086 = vsyncadd %s1080, %s1085
          %s1087 = smul.addr %s89, 2
          %s1088 = smul.addr %s1087, 64
          %s1089 = scalar_lea.hbm %s1, %s1088
          %s1090 = sshll.u32 %s1083, 4
          %s1091 = int_to_ptr.vmem [resolvable:$true] %s1090
          %1096 = dma.hbm_to_vmem [thread:$0]  %s1089, 128, %s1091, %s1080, 64, 64, 4
        $region144: #{tpu_custom_call.1} parent=139 // pred_fallthru
          _
        // Predicated region
        $region145: #{tpu_custom_call.1} parent=139 // pred_check
          %p1097 = pneg %p135
        $region146: #{tpu_custom_call.1} parent=139 // pred_check_branch
          %1099 = sbr.rel (%p1097) target = $region148
        $region147: #{tpu_custom_call.1} parent=139 // pred_region
          %p1100 = scmp.lt.s32.totalorder %s89, 1
          %s1101 = scalar_select %p1100, %s89, 1
          %s1102 = smul.addr %s1101, 2
          %s1103 = smul.addr %s1102, 8
          %s1104 = scalar_lea.vmem %s3, %s1103
        $region148: #{tpu_custom_call.1} parent=139 // pred_fallthru
          _
        // Predicated region
        $region149: #{tpu_custom_call.1} parent=139 // pred_check
          %p1105 = pneg %p161
        $region150: #{tpu_custom_call.1} parent=139 // pred_check_branch
          %1107 = sbr.rel (%p1105) target = $region152
        $region151: #{tpu_custom_call.1} parent=139 // pred_region
          %s1108 = sand.u32 %s89, 1
          %s1109 = scalar_lea.sflag [#allocation7], %s1108
          %s1110 = sand.u32 %s151, 1
          %s1111 = smul.addr %s1110, 8
          %s1112 = scalar_lea.vmem [#allocation6], %s1111
          %s1114 = ssub.s32 128, 128
          %1115 = vsyncadd %s1109, %s1114
          %s1116 = smul.addr %s89, 2
          %s1117 = smul.addr %s1116, 64
          %s1118 = scalar_lea.hbm %s5, %s1117
          %s1119 = sshll.u32 %s1112, 4
          %s1120 = int_to_ptr.vmem [resolvable:$true] %s1119
          %1125 = dma.hbm_to_vmem [thread:$0]  %s1118, 128, %s1120, %s1109, 64, 64, 4
        $region152: #{tpu_custom_call.1} parent=139 // pred_fallthru
          _
      $region140: #{tpu_custom_call.1} parent=5 // pred_fallthru
        _
      %p1126 = scmp.le.s32.totalorder 1, %s89
      %p1127 = scmp.lt.s32.totalorder %s89, 3
      %p1128 = pnand %p1126, %p1127
      %p1129 = pneg %p1128
      // Predicated region
      $region153: #{tpu_custom_call.1} parent=5 // pred_check
        _
      $region154: #{tpu_custom_call.1} parent=5 // pred_check_branch
        %1131 = sbr.rel (%p1128) target = $region156
      $region155: #{tpu_custom_call.1} parent=5 // pred_region
        %s1132 = ssub.s32 %s89, 1
        %s1133 = sand.u32 %s102, 1
        %s1134 = scalar_lea.sflag [#allocation4], %s1133
        %s1135 = sand.u32 %s102, 1
        %s1136 = smul.addr %s1135, 8
        %s1137 = scalar_lea.vmem [#allocation3], %s1136
        // Predicated region
        $region157: #{tpu_custom_call.1} parent=155 // pred_check
          %p1138 = pneg %p115
        $region158: #{tpu_custom_call.1} parent=155 // pred_check_branch
          %1140 = sbr.rel (%p1138) target = $region160
        $region159: #{tpu_custom_call.1} parent=155 // pred_region
          %1141 = dma.done %s1134, 128
        $region160: #{tpu_custom_call.1} parent=155 // pred_fallthru
          _
        %s1142 = sand.u32 %s94, 1
        %s1143 = scalar_lea.sflag [#allocation7], %s1142
        %s1144 = sand.u32 %s154, 1
        %s1145 = smul.addr %s1144, 8
        %s1146 = scalar_lea.vmem [#allocation6], %s1145
        // Predicated region
        $region161: #{tpu_custom_call.1} parent=155 // pred_check
          %p1147 = pneg %p167
        $region162: #{tpu_custom_call.1} parent=155 // pred_check_branch
          %1149 = sbr.rel (%p1147) target = $region164
        $region163: #{tpu_custom_call.1} parent=155 // pred_region
          %1150 = dma.done %s1143, 128
        $region164: #{tpu_custom_call.1} parent=155 // pred_fallthru
          _
        // Predicated region
        $region165: #{tpu_custom_call.1} parent=155 // pred_check
          %p1151 = pneg %p188
        $region166: #{tpu_custom_call.1} parent=155 // pred_check_branch
          %1153 = sbr.rel (%p1151) target = $region168
        $region167: #{tpu_custom_call.1} parent=155 // pred_region
          %1154 = dma.done [#allocation7], 128
        $region168: #{tpu_custom_call.1} parent=155 // pred_fallthru
          _
        // Predicated region
        $region169: #{tpu_custom_call.1} parent=155 // pred_check
          %p1155 = pneg %p209
        $region170: #{tpu_custom_call.1} parent=155 // pred_check_branch
          %1157 = sbr.rel (%p1155) target = $region172
        $region171: #{tpu_custom_call.1} parent=155 // pred_region
          %1158 = dma.done [#allocation10], 128
        $region172: #{tpu_custom_call.1} parent=155 // pred_fallthru
          _
        // Predicated region
        $region173: #{tpu_custom_call.1} parent=155 // pred_check
          %p1159 = pneg %p272
        $region174: #{tpu_custom_call.1} parent=155 // pred_check_branch
          %1161 = sbr.rel (%p1159) target = $region176
        $region175: #{tpu_custom_call.1} parent=155 // pred_region
          %1162 = dma.done [#allocation10], 16
        $region176: #{tpu_custom_call.1} parent=155 // pred_fallthru
          _
        // Predicated region
        $region177: #{tpu_custom_call.1} parent=155 // pred_check
          %p1163 = pneg %p293
        $region178: #{tpu_custom_call.1} parent=155 // pred_check_branch
          %1165 = sbr.rel (%p1163) target = $region180
        $region179: #{tpu_custom_call.1} parent=155 // pred_region
          %1166 = dma.done [#allocation13], 16
        $region180: #{tpu_custom_call.1} parent=155 // pred_fallthru
          _
        // Predicated region
        $region181: #{tpu_custom_call.1} parent=155 // pred_check
          %p1167 = pneg %p335
        $region182: #{tpu_custom_call.1} parent=155 // pred_check_branch
          %1169 = sbr.rel (%p1167) target = $region184
        $region183: #{tpu_custom_call.1} parent=155 // pred_region
          %1170 = dma.done [#allocation13], 64
        $region184: #{tpu_custom_call.1} parent=155 // pred_fallthru
          _
        // Predicated region
        $region185: #{tpu_custom_call.1} parent=155 // pred_check
          %p1171 = pneg %p356
        $region186: #{tpu_custom_call.1} parent=155 // pred_check_branch
          %1173 = sbr.rel (%p1171) target = $region188
        $region187: #{tpu_custom_call.1} parent=155 // pred_region
          %1174 = dma.done [#allocation16], 4608
        $region188: #{tpu_custom_call.1} parent=155 // pred_fallthru
          _
        // Predicated region
        $region189: #{tpu_custom_call.1} parent=155 // pred_check
          %p1175 = pneg %p377
        $region190: #{tpu_custom_call.1} parent=155 // pred_check_branch
          %1177 = sbr.rel (%p1175) target = $region192
        $region191: #{tpu_custom_call.1} parent=155 // pred_region
          %1178 = dma.done [#allocation16], 96
        $region192: #{tpu_custom_call.1} parent=155 // pred_fallthru
          _
        // Predicated region
        $region193: #{tpu_custom_call.1} parent=155 // pred_check
          %p1179 = pneg %p398
        $region194: #{tpu_custom_call.1} parent=155 // pred_check_branch
          %1181 = sbr.rel (%p1179) target = $region196
        $region195: #{tpu_custom_call.1} parent=155 // pred_region
          %1182 = dma.done [#allocation19], 16
        $region196: #{tpu_custom_call.1} parent=155 // pred_fallthru
          _
        // Predicated region
        $region197: #{tpu_custom_call.1} parent=155 // pred_check
          %p1183 = pneg %p419
        $region198: #{tpu_custom_call.1} parent=155 // pred_check_branch
          %1185 = sbr.rel (%p1183) target = $region200
        $region199: #{tpu_custom_call.1} parent=155 // pred_region
          %1186 = dma.done [#allocation19], 4608
        $region200: #{tpu_custom_call.1} parent=155 // pred_fallthru
          _
        // Predicated region
        $region201: #{tpu_custom_call.1} parent=155 // pred_check
          %p1187 = pneg %p440
        $region202: #{tpu_custom_call.1} parent=155 // pred_check_branch
          %1189 = sbr.rel (%p1187) target = $region204
        $region203: #{tpu_custom_call.1} parent=155 // pred_region
          %1190 = dma.done [#allocation22], 96
        $region204: #{tpu_custom_call.1} parent=155 // pred_fallthru
          _
        // Predicated region
        $region205: #{tpu_custom_call.1} parent=155 // pred_check
          %p1191 = pneg %p461
        $region206: #{tpu_custom_call.1} parent=155 // pred_check_branch
          %1193 = sbr.rel (%p1191) target = $region208
        $region207: #{tpu_custom_call.1} parent=155 // pred_region
          %1194 = dma.done [#allocation22], 16
        $region208: #{tpu_custom_call.1} parent=155 // pred_fallthru
          _
        // Predicated region
        $region209: #{tpu_custom_call.1} parent=155 // pred_check
          %p1195 = pneg %p503
        $region210: #{tpu_custom_call.1} parent=155 // pred_check_branch
          %1197 = sbr.rel (%p1195) target = $region212
        $region211: #{tpu_custom_call.1} parent=155 // pred_region
          %1198 = dma.done [#allocation25], 16
        $region212: #{tpu_custom_call.1} parent=155 // pred_fallthru
          _
        // Predicated region
        $region213: #{tpu_custom_call.1} parent=155 // pred_check
          %p1199 = pneg %p545
        $region214: #{tpu_custom_call.1} parent=155 // pred_check_branch
          %1201 = sbr.rel (%p1199) target = $region216
        $region215: #{tpu_custom_call.1} parent=155 // pred_region
          %1202 = dma.done [#allocation25], 16
        $region216: #{tpu_custom_call.1} parent=155 // pred_fallthru
          _
        // Predicated region
        $region217: #{tpu_custom_call.1} parent=155 // pred_check
          %p1203 = pneg %p818
        $region218: #{tpu_custom_call.1} parent=155 // pred_check_branch
          %1205 = sbr.rel (%p1203) target = $region220
        $region219: #{tpu_custom_call.1} parent=155 // pred_region
          %1206 = dma.done [#allocation5], 16
        $region220: #{tpu_custom_call.1} parent=155 // pred_fallthru
          _
        %1207 = sfence
        %s1208 = sand.u32 %s102, 1
        %s1209 = scalar_lea.sflag [#allocation4], %s1208
        %s1210 = sand.u32 %s102, 1
        %s1211 = smul.addr %s1210, 8
        %s1212 = scalar_lea.vmem [#allocation3], %s1211
        %p1213 = pneg %p115
        %p1214 = pneg %p112
        %p1215 = scmp.lt.s32.totalorder %s94, 1
        %s1216 = scalar_select %p1215, %s94, 1
        %s1217 = smul.addr %s1216, 2
        %s1218 = smul.addr %s1217, 8
        %s1219 = scalar_lea.vmem %s3, %s1218
        %p1220 = pneg %p141
        %p1221 = pneg %p138
        %s1222 = sand.u32 %s94, 1
        %s1223 = scalar_lea.sflag [#allocation7], %s1222
        %s1224 = sand.u32 %s154, 1
        %s1225 = smul.addr %s1224, 8
        %s1226 = scalar_lea.vmem [#allocation6], %s1225
        %p1227 = pneg %p167
        %p1228 = pneg %p164
        %p1229 = pneg %p188
        %p1230 = pneg %p185
        %p1231 = pneg %p209
        %p1232 = pneg %p206
        %p1233 = pneg %p230
        %p1234 = pneg %p227
        %p1235 = pneg %p251
        %p1236 = pneg %p248
        %p1237 = pneg %p272
        %p1238 = pneg %p269
        %p1239 = pneg %p293
        %p1240 = pneg %p290
        %p1241 = pneg %p314
        %p1242 = pneg %p311
        %p1243 = pneg %p335
        %p1244 = pneg %p332
        %p1245 = pneg %p356
        %p1246 = pneg %p353
        %p1247 = pneg %p377
        %p1248 = pneg %p374
        %p1249 = pneg %p398
        %p1250 = pneg %p395
        %p1251 = pneg %p419
        %p1252 = pneg %p416
        %p1253 = pneg %p440
        %p1254 = pneg %p437
        %p1255 = pneg %p461
        %p1256 = pneg %p458
        %p1257 = pneg %p482
        %p1258 = pneg %p479
        %p1259 = pneg %p503
        %p1260 = pneg %p500
        %p1261 = pneg %p524
        %p1262 = pneg %p521
        %p1263 = pneg %p545
        %p1264 = pneg %p542
        %p1265 = pneg %p566
        %p1266 = pneg %p563
        %p1267 = pneg %p587
        %p1268 = pneg %p584
        %p1269 = pneg %p608
        %p1270 = pneg %p605
        %p1271 = pneg %p629
        %p1272 = pneg %p626
        %p1273 = pneg %p650
        %p1274 = pneg %p647
        %p1275 = pneg %p671
        %p1276 = pneg %p668
        %p1277 = pneg %p692
        %p1278 = pneg %p689
        %p1279 = pneg %p713
        %p1280 = pneg %p710
        %p1281 = pneg %p734
        %p1282 = pneg %p731
        %p1283 = pneg %p755
        %p1284 = pneg %p752
        %p1285 = pneg %p776
        %p1286 = pneg %p773
        %p1287 = pneg %p797
        %p1288 = pneg %p794
        %p1289 = pneg %p818
        %p1290 = pneg %p815
        %p1291 = pneg %p844
        %p1292 = pneg %p841
        %p1293 = scmp.lt.s32.totalorder %s94, 1
        %s1294 = scalar_select %p1293, %s94, 1
        %s1295 = smul.addr %s1294, 8
        %s1296 = scalar_lea.vmem %s69, %s1295
        %p1297 = scmp.lt.s32.totalorder %s94, 1
        %s1298 = scalar_select %p1297, %s94, 1
        %s1299 = smul.addr %s1298, 2
        %s1300 = smul.addr %s1299, 8
        %s1301 = scalar_lea.vmem %s3, %s1300
        %p1302 = scmp.lt.s32.totalorder %s94, 1
        %s1303 = scalar_select %p1302, %s94, 1
        %s1304 = smul.addr %s1303, 8
        %s1305 = scalar_lea.vmem %s69, %s1304
        %v1307 = vld [vmem:[%s1301] sm:$0xff]
        %v1308 = vld [vmem:[%s1301 + $0x8] sm:$0xff]
        %v1309 = vadd.f32 %v1307, 1e-05
        %v1310 = vadd.f32 %v1308, 1e-05
        %v1311 = vlog2.pop %v1309
        %v1312 = vmul.f32 %v1311, 0.6931472
        %v1313 = vlog2.pop %v1310
        %v1314 = vmul.f32 %v1313, 0.6931472
        %v1315 = vadd.f32 %v1312, 4.5
        %v1316 = vadd.f32 %v1314, 4.5
        %v1317 = vpack.c.bf16 %v1316, %v1315
        %v1318 = vld [vmem:[#allocation9] sm:$0xf]
        %v1319 = vld [vmem:[#allocation9 + $0x4] sm:$0xf]
        %v1322 = vunpack.c.l.b16 %v1318
        %v1323 = vunpack.c.l.b16 %v1319
        %v1324 = vpack.c.b16 %v1323, %v1322
        %vm1326 = vcmask 130048
        %v1328 = vsel %vm1326, %v1317, 0
        %1330 = vmatprep.subr.bf16.mxu0 0
        %1331 = vmatpush1.bf16.msra.mxu0 0
        %1332 = vmatprep.subr.bf16.mxu0 0
        %1333 = vmatpush1.bf16.msra.mxu0 0
        %1334 = vmatprep.subr.bf16.mxu0 0
        %1335 = vmatpush1.bf16.msra.mxu0 0
        %1336 = vmatprep.subr.bf16.mxu0 0
        %1337 = vmatpush1.bf16.msra.mxu0 0
        %1338 = vmatprep.subr.bf16.mxu0 0
        %1339 = vmatpush1.bf16.msra.mxu0 0
        %1340 = vmatprep.subr.bf16.mxu0 0
        %1341 = vmatpush1.bf16.msra.mxu0 0
        %1342 = vmatprep.subr.bf16.mxu0 0
        %1343 = vmatpush1.bf16.msra.mxu0 0
        %1344 = vmatprep.subr.bf16.mxu0 0
        %1345 = vmatpush1.bf16.msra.mxu0 %v1324
        %1346 = vmatprep.subr.bf16.mxu0 0
        %1347 = vmatpush2.bf16.msra.mxu0 0
        %1348 = vmatprep.subr.bf16.mxu0 0
        %1349 = vmatpush2.bf16.msra.mxu0 0
        %1350 = vmatprep.subr.bf16.mxu0 0
        %1351 = vmatpush2.bf16.msra.mxu0 0
        %1352 = vmatprep.subr.bf16.mxu0 0
        %1353 = vmatpush2.bf16.msra.mxu0 0
        %1354 = vmatprep.subr.bf16.mxu0 0
        %1355 = vmatpush2.bf16.msra.mxu0 0
        %1356 = vmatprep.subr.bf16.mxu0 0
        %1357 = vmatpush2.bf16.msra.mxu0 0
        %1358 = vmatprep.subr.bf16.mxu0 0
        %1359 = vmatpush2.bf16.msra.mxu0 0
        %1360 = vmatprep.subr.bf16.mxu0 0
        %1361 = vmatpush2.bf16.msra.mxu0 0
        %1362 = vmatprep.mubr.bf16.mxu0 0
        %1363 = vmatmul.mubr.bf16.gmra.mxu0 %v1328
        %v1364 = vpop.f32.mrf.mxu0
        %v1365 = vadd.f32 0.0, %v1364
        %v1366 = vpop.f32.mrf.mxu0
        %v1367 = vpop.f32.mrf.mxu0
        %v1368 = vadd.f32 0.0, %v1367
        %v1369 = vpop.f32.mrf.mxu0
        %1370 = vdwg.mxu0
        %v1371 = vld [vmem:[#allocation8] sm:$0xf]
        %v1372 = vld [vmem:[#allocation8 + $0x4] sm:$0xf]
        %v1373 = vpack.c.bf16 %v1368, %v1365
        %v1374 = vmul.f32 %v1315, 5.0
        %v1375 = vmul.f32 %v1316, 5.0
        %v1378 = vunpack.c.l.b16 %v1371
        %v1379 = vunpack.c.l.b16 %v1372
        %v1380 = vpack.c.b16 %v1379, %v1378
        %v1382 = vsel %vm1326, %v1380, 0
        %1384 = vmatprep.subr.bf16.mxu0 0
        %1385 = vmatpush1.bf16.msra.mxu0 0
        %1386 = vmatprep.subr.bf16.mxu0 0
        %1387 = vmatpush1.bf16.msra.mxu0 0
        %1388 = vmatprep.subr.bf16.mxu0 0
        %1389 = vmatpush1.bf16.msra.mxu0 0
        %1390 = vmatprep.subr.bf16.mxu0 0
        %1391 = vmatpush1.bf16.msra.mxu0 0
        %1392 = vmatprep.subr.bf16.mxu0 0
        %1393 = vmatpush1.bf16.msra.mxu0 0
        %1394 = vmatprep.subr.bf16.mxu0 0
        %1395 = vmatpush1.bf16.msra.mxu0 0
        %1396 = vmatprep.subr.bf16.mxu0 0
        %1397 = vmatpush1.bf16.msra.mxu0 0
        %1398 = vmatprep.subr.bf16.mxu0 0
        %1399 = vmatpush1.bf16.msra.mxu0 %v1373
        %1400 = vmatprep.subr.bf16.mxu0 0
        %1401 = vmatpush2.bf16.msra.mxu0 0
        %1402 = vmatprep.subr.bf16.mxu0 0
        %1403 = vmatpush2.bf16.msra.mxu0 0
        %1404 = vmatprep.subr.bf16.mxu0 0
        %1405 = vmatpush2.bf16.msra.mxu0 0
        %1406 = vmatprep.subr.bf16.mxu0 0
        %1407 = vmatpush2.bf16.msra.mxu0 0
        %1408 = vmatprep.subr.bf16.mxu0 0
        %1409 = vmatpush2.bf16.msra.mxu0 0
        %1410 = vmatprep.subr.bf16.mxu0 0
        %1411 = vmatpush2.bf16.msra.mxu0 0
        %1412 = vmatprep.subr.bf16.mxu0 0
        %1413 = vmatpush2.bf16.msra.mxu0 0
        %1414 = vmatprep.subr.bf16.mxu0 0
        %1415 = vmatpush2.bf16.msra.mxu0 0
        %1416 = vmatprep.mubr.bf16.mxu0 0
        %1417 = vmatmul.mubr.bf16.gmra.mxu0 %v1382
        %v1418 = vpop.f32.mrf.mxu0
        %v1419 = vadd.f32 %v1374, %v1418
        %v1420 = vpop.f32.mrf.mxu0
        %v1421 = vpop.f32.mrf.mxu0
        %v1422 = vadd.f32 %v1375, %v1421
        %v1423 = vpop.f32.mrf.mxu0
        %1424 = vdwg.mxu0
        %s1425 = sld [smem:[#allocation2]]
        %v1426 = vstv %s1425
        %v1427 = vadd.f32 %v1419, %v1426
        %v1428 = vadd.f32 %v1422, %v1426
        %v1429 = vld [vmem:[%s1137] sm:$0xf]
        %v1430 = vld [vmem:[%s1137 + $0x4] sm:$0xf]
        %v1431 = vld [vmem:[%s11] sm:$0xf]
        %v1432 = vld [vmem:[%s11 + $0x4] sm:$0xf]
        %v1433 = vld [vmem:[%s11 + $0x8] sm:$0xf]
        %v1434 = vld [vmem:[%s11 + $0xc] sm:$0xf]
        %v1435 = vld [vmem:[%s11 + $0x10] sm:$0xf]
        %v1436 = vld [vmem:[%s11 + $0x14] sm:$0xf]
        %v1437 = vld [vmem:[%s11 + $0x18] sm:$0xf]
        %v1438 = vld [vmem:[%s11 + $0x1c] sm:$0xf]
        %v1439 = vld [vmem:[%s11 + $0x20] sm:$0xf]
        %v1440 = vld [vmem:[%s11 + $0x24] sm:$0xf]
        %v1441 = vld [vmem:[%s11 + $0x28] sm:$0xf]
        %v1442 = vld [vmem:[%s11 + $0x2c] sm:$0xf]
        %v1443 = vld [vmem:[%s13] sm:$0x1]
        %v1445 = vlaneseq
        %v1446 = vshrl.u32 %v1445, 7
        %v1447 = vsub.s32 0, %v1446
        %v1448 = vrot.slane %v1443, %v1447
        %v1452 = vunpack.c.l.b16 %v1429
        %v1453 = vunpack.c.l.b16 %v1430
        %v1454 = vpack.c.b16 %v1453, %v1452
        %v1467 = vunpack.c.l.b16 %v1431
        %v1468 = vunpack.c.l.b16 %v1432
        %v1469 = vunpack.c.l.b16 %v1433
        %v1470 = vunpack.c.l.b16 %v1434
        %v1471 = vunpack.c.l.b16 %v1435
        %v1472 = vunpack.c.l.b16 %v1436
        %v1473 = vunpack.c.l.b16 %v1437
        %v1474 = vunpack.c.l.b16 %v1438
        %v1475 = vunpack.c.l.b16 %v1439
        %v1476 = vunpack.c.l.b16 %v1440
        %v1477 = vunpack.c.l.b16 %v1441
        %v1478 = vunpack.c.l.b16 %v1442
        %v1479 = vpack.c.b16 %v1468, %v1467
        %v1480 = vpack.c.b16 %v1470, %v1469
        %v1481 = vpack.c.b16 %v1472, %v1471
        %v1482 = vpack.c.b16 %v1474, %v1473
        %v1483 = vpack.c.b16 %v1476, %v1475
        %v1484 = vpack.c.b16 %v1478, %v1477
        %vm1491 = vcmask 785408
        %v1493 = vsel %vm1491, %v1454, 0
        %1495 = vmatprep.subr.bf16.mxu0 0
        %1496 = vmatpush1.bf16.msra.mxu0 0
        %1497 = vmatprep.subr.bf16.mxu0 0
        %1498 = vmatpush1.bf16.msra.mxu0 0
        %1499 = vmatprep.subr.bf16.mxu0 0
        %1500 = vmatpush1.bf16.msra.mxu0 %v1484
        %1501 = vmatprep.subr.bf16.mxu0 0
        %1502 = vmatpush1.bf16.msra.mxu0 %v1483
        %1503 = vmatprep.subr.bf16.mxu0 0
        %1504 = vmatpush1.bf16.msra.mxu0 %v1482
        %1505 = vmatprep.subr.bf16.mxu0 0
        %1506 = vmatpush1.bf16.msra.mxu0 %v1481
        %1507 = vmatprep.subr.bf16.mxu0 0
        %1508 = vmatpush1.bf16.msra.mxu0 %v1480
        %1509 = vmatprep.subr.bf16.mxu0 0
        %1510 = vmatpush1.bf16.msra.mxu0 %v1479
        %1511 = vmatprep.subr.bf16.mxu0 0
        %1512 = vmatpush2.bf16.msra.mxu0 0
        %1513 = vmatprep.subr.bf16.mxu0 0
        %1514 = vmatpush2.bf16.msra.mxu0 0
        %1515 = vmatprep.subr.bf16.mxu0 0
        %1516 = vmatpush2.bf16.msra.mxu0 0
        %1517 = vmatprep.subr.bf16.mxu0 0
        %1518 = vmatpush2.bf16.msra.mxu0 0
        %1519 = vmatprep.subr.bf16.mxu0 0
        %1520 = vmatpush2.bf16.msra.mxu0 0
        %1521 = vmatprep.subr.bf16.mxu0 0
        %1522 = vmatpush2.bf16.msra.mxu0 0
        %1523 = vmatprep.subr.bf16.mxu0 0
        %1524 = vmatpush2.bf16.msra.mxu0 0
        %1525 = vmatprep.subr.bf16.mxu0 0
        %1526 = vmatpush2.bf16.msra.mxu0 0
        %1527 = vmatprep.mubr.bf16.mxu0 0
        %1528 = vmatmul.mubr.bf16.gmra.mxu0 %v1493
        %v1529 = vpop.f32.mrf.mxu0
        %v1530 = vadd.f32 %v1448, %v1529
        %v1531 = vpop.f32.mrf.mxu0
        %v1532 = vpop.f32.mrf.mxu0
        %v1533 = vadd.f32 %v1448, %v1532
        %v1534 = vpop.f32.mrf.mxu0
        %1535 = vdwg.mxu0
        %v1536 = vmax.f32 %v1530, 0.0
        %v1537 = vmax.f32 %v1533, 0.0
        %v1538 = vsel %vm1491, %v1536, 0.0
        %v1539 = vsel %vm1491, %v1537, 0.0
        %v1540 = vadd.f32 %v1538, %v1539
        %v1541 = vrot.slane %v1540, 4
        %v1542 = vadd.f32 %v1540, %v1541
        %v1543 = vrot.slane %v1542, 2
        %v1544 = vadd.f32 %v1542, %v1543
        %v1545 = vrot.slane %v1544, 1
        %v1546 = vadd.f32 %v1544, %v1545
        %v1547 = vmul.f32 %v1536, %v1536
        %v1548 = vmul.f32 %v1537, %v1537
        %v1549 = vsel %vm1491, %v1547, 0.0
        %v1550 = vsel %vm1491, %v1548, 0.0
        %v1551 = vadd.f32 %v1549, %v1550
        %v1552 = vrot.slane %v1551, 4
        %v1553 = vadd.f32 %v1551, %v1552
        %v1554 = vrot.slane %v1553, 2
        %v1555 = vadd.f32 %v1553, %v1554
        %v1556 = vrot.slane %v1555, 1
        %v1557 = vadd.f32 %v1555, %v1556
        %v1558 = vld [vmem:[%s19] sm:$0xff]
        %v1559 = vld [vmem:[%s19 + $0x8] sm:$0xff]
        %v1560 = vld [vmem:[%s19 + $0x10] sm:$0xff]
        %v1561 = vld [vmem:[%s19 + $0x18] sm:$0xff]
        %v1562 = vld [vmem:[%s19 + $0x20] sm:$0xff]
        %v1563 = vld [vmem:[%s19 + $0x28] sm:$0xff]
        %v1564 = vld [vmem:[%s19 + $0x30] sm:$0xff]
        %v1565 = vld [vmem:[%s19 + $0x38] sm:$0xff]
        %v1566 = vld [vmem:[%s19 + $0x40] sm:$0xff]
        %v1567 = vld [vmem:[%s19 + $0x48] sm:$0xff]
        %v1568 = vld [vmem:[%s19 + $0x50] sm:$0xff]
        %v1569 = vld [vmem:[%s19 + $0x58] sm:$0xff]
        %v1571 = vsel %vm1491, %v1546, 0
        %1573 = vmatprep.subr.mxu0 0.0
        %1574 = vmatpush1.msra.mxu0 0.0
        %1575 = vmatprep.subr.mxu0 0.0
        %1576 = vmatpush1.msra.mxu0 0.0
        %1577 = vmatprep.subr.mxu0 0.0
        %1578 = vmatpush1.msra.mxu0 0.0
        %1579 = vmatprep.subr.mxu0 0.0
        %1580 = vmatpush1.msra.mxu0 0.0
        %1581 = vmatprep.subr.mxu0 0.0
        %1582 = vmatpush1.msra.mxu0 %v1569
        %1583 = vmatprep.subr.mxu0 0.0
        %1584 = vmatpush1.msra.mxu0 %v1568
        %1585 = vmatprep.subr.mxu0 0.0
        %1586 = vmatpush1.msra.mxu0 %v1567
        %1587 = vmatprep.subr.mxu0 0.0
        %1588 = vmatpush1.msra.mxu0 %v1566
        %1589 = vmatprep.subr.mxu0 0.0
        %1590 = vmatpush1.msra.mxu0 %v1565
        %1591 = vmatprep.subr.mxu0 0.0
        %1592 = vmatpush1.msra.mxu0 %v1564
        %1593 = vmatprep.subr.mxu0 0.0
        %1594 = vmatpush1.msra.mxu0 %v1563
        %1595 = vmatprep.subr.mxu0 0.0
        %1596 = vmatpush1.msra.mxu0 %v1562
        %1597 = vmatprep.subr.mxu0 0.0
        %1598 = vmatpush1.msra.mxu0 %v1561
        %1599 = vmatprep.subr.mxu0 0.0
        %1600 = vmatpush1.msra.mxu0 %v1560
        %1601 = vmatprep.subr.mxu0 0.0
        %1602 = vmatpush1.msra.mxu0 %v1559
        %1603 = vmatprep.subr.mxu0 0.0
        %1604 = vmatpush1.msra.mxu0 %v1558
        %1605 = vmatprep.subr.mxu0 0.0
        %1606 = vmatpush2.msra.mxu0 0.0
        %1607 = vmatprep.subr.mxu0 0.0
        %1608 = vmatpush2.msra.mxu0 0.0
        %1609 = vmatprep.subr.mxu0 0.0
        %1610 = vmatpush2.msra.mxu0 0.0
        %1611 = vmatprep.subr.mxu0 0.0
        %1612 = vmatpush2.msra.mxu0 0.0
        %1613 = vmatprep.subr.mxu0 0.0
        %1614 = vmatpush2.msra.mxu0 0.0
        %1615 = vmatprep.subr.mxu0 0.0
        %1616 = vmatpush2.msra.mxu0 0.0
        %1617 = vmatprep.subr.mxu0 0.0
        %1618 = vmatpush2.msra.mxu0 0.0
        %1619 = vmatprep.subr.mxu0 0.0
        %1620 = vmatpush2.msra.mxu0 0.0
        %1621 = vmatprep.subr.mxu0 0.0
        %1622 = vmatpush2.msra.mxu0 0.0
        %1623 = vmatprep.subr.mxu0 0.0
        %1624 = vmatpush2.msra.mxu0 0.0
        %1625 = vmatprep.subr.mxu0 0.0
        %1626 = vmatpush2.msra.mxu0 0.0
        %1627 = vmatprep.subr.mxu0 0.0
        %1628 = vmatpush2.msra.mxu0 0.0
        %1629 = vmatprep.subr.mxu0 0.0
        %1630 = vmatpush2.msra.mxu0 0.0
        %1631 = vmatprep.subr.mxu0 0.0
        %1632 = vmatpush2.msra.mxu0 0.0
        %1633 = vmatprep.subr.mxu0 0.0
        %1634 = vmatpush2.msra.mxu0 0.0
        %1635 = vmatprep.subr.mxu0 0.0
        %1636 = vmatpush2.msra.mxu0 0.0
        %1637 = vmatprep.mubr.f32.mxu0 0.0
        %1638 = vmatmul.mubr.f32.gmra.mxu0 %v1571
        %v1639 = vpop.f32.mrf.mxu0
        %v1640 = vadd.f32 0.0, %v1639
        %v1641 = vpop.f32.mrf.mxu0
        %1642 = vdwg.mxu0
        %v1643 = vmul.f32 %v1640, 0.0026041667
        %v1645 = vsel %vm1491, %v1557, 0
        %1647 = vmatprep.subr.mxu0 0.0
        %1648 = vmatpush1.msra.mxu0 0.0
        %1649 = vmatprep.subr.mxu0 0.0
        %1650 = vmatpush1.msra.mxu0 0.0
        %1651 = vmatprep.subr.mxu0 0.0
        %1652 = vmatpush1.msra.mxu0 0.0
        %1653 = vmatprep.subr.mxu0 0.0
        %1654 = vmatpush1.msra.mxu0 0.0
        %1655 = vmatprep.subr.mxu0 0.0
        %1656 = vmatpush1.msra.mxu0 %v1569
        %1657 = vmatprep.subr.mxu0 0.0
        %1658 = vmatpush1.msra.mxu0 %v1568
        %1659 = vmatprep.subr.mxu0 0.0
        %1660 = vmatpush1.msra.mxu0 %v1567
        %1661 = vmatprep.subr.mxu0 0.0
        %1662 = vmatpush1.msra.mxu0 %v1566
        %1663 = vmatprep.subr.mxu0 0.0
        %1664 = vmatpush1.msra.mxu0 %v1565
        %1665 = vmatprep.subr.mxu0 0.0
        %1666 = vmatpush1.msra.mxu0 %v1564
        %1667 = vmatprep.subr.mxu0 0.0
        %1668 = vmatpush1.msra.mxu0 %v1563
        %1669 = vmatprep.subr.mxu0 0.0
        %1670 = vmatpush1.msra.mxu0 %v1562
        %1671 = vmatprep.subr.mxu0 0.0
        %1672 = vmatpush1.msra.mxu0 %v1561
        %1673 = vmatprep.subr.mxu0 0.0
        %1674 = vmatpush1.msra.mxu0 %v1560
        %1675 = vmatprep.subr.mxu0 0.0
        %1676 = vmatpush1.msra.mxu0 %v1559
        %1677 = vmatprep.subr.mxu0 0.0
        %1678 = vmatpush1.msra.mxu0 %v1558
        %1679 = vmatprep.subr.mxu0 0.0
        %1680 = vmatpush2.msra.mxu0 0.0
        %1681 = vmatprep.subr.mxu0 0.0
        %1682 = vmatpush2.msra.mxu0 0.0
        %1683 = vmatprep.subr.mxu0 0.0
        %1684 = vmatpush2.msra.mxu0 0.0
        %1685 = vmatprep.subr.mxu0 0.0
        %1686 = vmatpush2.msra.mxu0 0.0
        %1687 = vmatprep.subr.mxu0 0.0
        %1688 = vmatpush2.msra.mxu0 0.0
        %1689 = vmatprep.subr.mxu0 0.0
        %1690 = vmatpush2.msra.mxu0 0.0
        %1691 = vmatprep.subr.mxu0 0.0
        %1692 = vmatpush2.msra.mxu0 0.0
        %1693 = vmatprep.subr.mxu0 0.0
        %1694 = vmatpush2.msra.mxu0 0.0
        %1695 = vmatprep.subr.mxu0 0.0
        %1696 = vmatpush2.msra.mxu0 0.0
        %1697 = vmatprep.subr.mxu0 0.0
        %1698 = vmatpush2.msra.mxu0 0.0
        %1699 = vmatprep.subr.mxu0 0.0
        %1700 = vmatpush2.msra.mxu0 0.0
        %1701 = vmatprep.subr.mxu0 0.0
        %1702 = vmatpush2.msra.mxu0 0.0
        %1703 = vmatprep.subr.mxu0 0.0
        %1704 = vmatpush2.msra.mxu0 0.0
        %1705 = vmatprep.subr.mxu0 0.0
        %1706 = vmatpush2.msra.mxu0 0.0
        %1707 = vmatprep.subr.mxu0 0.0
        %1708 = vmatpush2.msra.mxu0 0.0
        %1709 = vmatprep.subr.mxu0 0.0
        %1710 = vmatpush2.msra.mxu0 0.0
        %1711 = vmatprep.mubr.f32.mxu0 0.0
        %1712 = vmatmul.mubr.f32.gmra.mxu0 %v1645
        %v1713 = vpop.f32.mrf.mxu0
        %v1714 = vadd.f32 0.0, %v1713
        %v1715 = vpop.f32.mrf.mxu0
        %1716 = vdwg.mxu0
        %v1717 = vmul.f32 %v1714, 0.0026041667
        %v1718 = vmul.f32 %v1643, %v1643
        %v1719 = vsub.f32 %v1717, %v1718
        %v1720 = vadd.f32 %v1719, 1e-05
        %v1721 = vrsqrt.pop %v1720
        %v1722 = vld [vmem:[#allocation14] sm:$0xf]
        %vm1723 = vcmask 31744
        %v1725 = vsel %vm1723, %v1643, 0
        %vm1727 = vcmask 1043456
        %v1729 = vsel %vm1727, %v1722, 0
        %1731 = vmatprep.subr.mxu0 0.0
        %1732 = vmatpush1.msra.mxu0 0.0
        %1733 = vmatprep.subr.mxu0 0.0
        %1734 = vmatpush1.msra.mxu0 0.0
        %1735 = vmatprep.subr.mxu0 0.0
        %1736 = vmatpush1.msra.mxu0 0.0
        %1737 = vmatprep.subr.mxu0 0.0
        %1738 = vmatpush1.msra.mxu0 0.0
        %1739 = vmatprep.subr.mxu0 0.0
        %1740 = vmatpush1.msra.mxu0 0.0
        %1741 = vmatprep.subr.mxu0 0.0
        %1742 = vmatpush1.msra.mxu0 0.0
        %1743 = vmatprep.subr.mxu0 0.0
        %1744 = vmatpush1.msra.mxu0 0.0
        %1745 = vmatprep.subr.mxu0 0.0
        %1746 = vmatpush1.msra.mxu0 0.0
        %1747 = vmatprep.subr.mxu0 0.0
        %1748 = vmatpush1.msra.mxu0 0.0
        %1749 = vmatprep.subr.mxu0 0.0
        %1750 = vmatpush1.msra.mxu0 0.0
        %1751 = vmatprep.subr.mxu0 0.0
        %1752 = vmatpush1.msra.mxu0 0.0
        %1753 = vmatprep.subr.mxu0 0.0
        %1754 = vmatpush1.msra.mxu0 0.0
        %1755 = vmatprep.subr.mxu0 0.0
        %1756 = vmatpush1.msra.mxu0 0.0
        %1757 = vmatprep.subr.mxu0 0.0
        %1758 = vmatpush1.msra.mxu0 0.0
        %1759 = vmatprep.subr.mxu0 0.0
        %1760 = vmatpush1.msra.mxu0 0.0
        %1761 = vmatprep.subr.mxu0 0.0
        %1762 = vmatpush1.msra.mxu0 %v1729
        %1763 = vmatprep.subr.mxu0 0.0
        %1764 = vmatpush2.msra.mxu0 0.0
        %1765 = vmatprep.subr.mxu0 0.0
        %1766 = vmatpush2.msra.mxu0 0.0
        %1767 = vmatprep.subr.mxu0 0.0
        %1768 = vmatpush2.msra.mxu0 0.0
        %1769 = vmatprep.subr.mxu0 0.0
        %1770 = vmatpush2.msra.mxu0 0.0
        %1771 = vmatprep.subr.mxu0 0.0
        %1772 = vmatpush2.msra.mxu0 0.0
        %1773 = vmatprep.subr.mxu0 0.0
        %1774 = vmatpush2.msra.mxu0 0.0
        %1775 = vmatprep.subr.mxu0 0.0
        %1776 = vmatpush2.msra.mxu0 0.0
        %1777 = vmatprep.subr.mxu0 0.0
        %1778 = vmatpush2.msra.mxu0 0.0
        %1779 = vmatprep.subr.mxu0 0.0
        %1780 = vmatpush2.msra.mxu0 0.0
        %1781 = vmatprep.subr.mxu0 0.0
        %1782 = vmatpush2.msra.mxu0 0.0
        %1783 = vmatprep.subr.mxu0 0.0
        %1784 = vmatpush2.msra.mxu0 0.0
        %1785 = vmatprep.subr.mxu0 0.0
        %1786 = vmatpush2.msra.mxu0 0.0
        %1787 = vmatprep.subr.mxu0 0.0
        %1788 = vmatpush2.msra.mxu0 0.0
        %1789 = vmatprep.subr.mxu0 0.0
        %1790 = vmatpush2.msra.mxu0 0.0
        %1791 = vmatprep.subr.mxu0 0.0
        %1792 = vmatpush2.msra.mxu0 0.0
        %1793 = vmatprep.subr.mxu0 0.0
        %1794 = vmatpush2.msra.mxu0 0.0
        %1795 = vmatprep.mubr.f32.mxu0 0.0
        %1796 = vmatmul.mubr.f32.gmra.mxu0 %v1725
        %v1797 = vpop.f32.mrf.mxu0
        %v1798 = vadd.f32 0.0, %v1797
        %v1799 = vpop.f32.mrf.mxu0
        %1800 = vdwg.mxu0
        %v1802 = vsel %vm1723, %v1721, 0
        %1804 = vmatprep.subr.mxu0 0.0
        %1805 = vmatpush1.msra.mxu0 0.0
        %1806 = vmatprep.subr.mxu0 0.0
        %1807 = vmatpush1.msra.mxu0 0.0
        %1808 = vmatprep.subr.mxu0 0.0
        %1809 = vmatpush1.msra.mxu0 0.0
        %1810 = vmatprep.subr.mxu0 0.0
        %1811 = vmatpush1.msra.mxu0 0.0
        %1812 = vmatprep.subr.mxu0 0.0
        %1813 = vmatpush1.msra.mxu0 0.0
        %1814 = vmatprep.subr.mxu0 0.0
        %1815 = vmatpush1.msra.mxu0 0.0
        %1816 = vmatprep.subr.mxu0 0.0
        %1817 = vmatpush1.msra.mxu0 0.0
        %1818 = vmatprep.subr.mxu0 0.0
        %1819 = vmatpush1.msra.mxu0 0.0
        %1820 = vmatprep.subr.mxu0 0.0
        %1821 = vmatpush1.msra.mxu0 0.0
        %1822 = vmatprep.subr.mxu0 0.0
        %1823 = vmatpush1.msra.mxu0 0.0
        %1824 = vmatprep.subr.mxu0 0.0
        %1825 = vmatpush1.msra.mxu0 0.0
        %1826 = vmatprep.subr.mxu0 0.0
        %1827 = vmatpush1.msra.mxu0 0.0
        %1828 = vmatprep.subr.mxu0 0.0
        %1829 = vmatpush1.msra.mxu0 0.0
        %1830 = vmatprep.subr.mxu0 0.0
        %1831 = vmatpush1.msra.mxu0 0.0
        %1832 = vmatprep.subr.mxu0 0.0
        %1833 = vmatpush1.msra.mxu0 0.0
        %1834 = vmatprep.subr.mxu0 0.0
        %1835 = vmatpush1.msra.mxu0 %v1729
        %1836 = vmatprep.subr.mxu0 0.0
        %1837 = vmatpush2.msra.mxu0 0.0
        %1838 = vmatprep.subr.mxu0 0.0
        %1839 = vmatpush2.msra.mxu0 0.0
        %1840 = vmatprep.subr.mxu0 0.0
        %1841 = vmatpush2.msra.mxu0 0.0
        %1842 = vmatprep.subr.mxu0 0.0
        %1843 = vmatpush2.msra.mxu0 0.0
        %1844 = vmatprep.subr.mxu0 0.0
        %1845 = vmatpush2.msra.mxu0 0.0
        %1846 = vmatprep.subr.mxu0 0.0
        %1847 = vmatpush2.msra.mxu0 0.0
        %1848 = vmatprep.subr.mxu0 0.0
        %1849 = vmatpush2.msra.mxu0 0.0
        %1850 = vmatprep.subr.mxu0 0.0
        %1851 = vmatpush2.msra.mxu0 0.0
        %1852 = vmatprep.subr.mxu0 0.0
        %1853 = vmatpush2.msra.mxu0 0.0
        %1854 = vmatprep.subr.mxu0 0.0
        %1855 = vmatpush2.msra.mxu0 0.0
        %1856 = vmatprep.subr.mxu0 0.0
        %1857 = vmatpush2.msra.mxu0 0.0
        %1858 = vmatprep.subr.mxu0 0.0
        %1859 = vmatpush2.msra.mxu0 0.0
        %1860 = vmatprep.subr.mxu0 0.0
        %1861 = vmatpush2.msra.mxu0 0.0
        %1862 = vmatprep.subr.mxu0 0.0
        %1863 = vmatpush2.msra.mxu0 0.0
        %1864 = vmatprep.subr.mxu0 0.0
        %1865 = vmatpush2.msra.mxu0 0.0
        %1866 = vmatprep.subr.mxu0 0.0
        %1867 = vmatpush2.msra.mxu0 0.0
        %1868 = vmatprep.mubr.f32.mxu0 0.0
        %1869 = vmatmul.mubr.f32.gmra.mxu0 %v1802
        %v1870 = vpop.f32.mrf.mxu0
        %v1871 = vadd.f32 0.0, %v1870
        %v1872 = vpop.f32.mrf.mxu0
        %1873 = vdwg.mxu0
        %v1874 = vlaneseq
        %v1875 = vshrl.u32 %v1874, 7
        %v1876 = vsub.s32 0, %v1875
        %v1877 = vrot.slane %v1798, %v1876
        %v1878 = vsub.f32 %v1536, %v1877
        %v1879 = vsub.f32 %v1537, %v1877
        %v1880 = vld [vmem:[#allocation11] sm:$0x1]
        %v1881 = vmul.f32 %v1871, %v1880
        %v1882 = vlaneseq
        %v1883 = vshrl.u32 %v1882, 7
        %v1884 = vsub.s32 0, %v1883
        %v1885 = vrot.slane %v1881, %v1884
        %v1886 = vmul.f32 %v1878, %v1885
        %v1887 = vmul.f32 %v1879, %v1885
        %v1888 = vld [vmem:[#allocation12] sm:$0x1]
        %v1890 = vlaneseq
        %v1891 = vshrl.u32 %v1890, 7
        %v1892 = vsub.s32 0, %v1891
        %v1893 = vrot.slane %v1888, %v1892
        %v1895 = vadd.f32 %v1886, %v1893
        %v1896 = vadd.f32 %v1887, %v1893
        %s1897 = sld [smem:[#allocation27]]
        %s1898 = sld [smem:[#allocation27 + $0x1]]
        %s1899 = sld [smem:[#allocation27 + $0x2]]
        %s1900 = sld [smem:[#allocation27 + $0x3]]
        %v1901 = vpack.c.bf16 %v1896, %v1895
        %v1902 = vld [vmem:[#allocation15] sm:$0xff]
        %v1903 = vld [vmem:[#allocation15 + $0x8] sm:$0xff]
        %v1904 = vld [vmem:[#allocation15 + $0x10] sm:$0xff]
        %v1905 = vld [vmem:[#allocation15 + $0x18] sm:$0xff]
        %v1906 = vld [vmem:[#allocation15 + $0x20] sm:$0xff]
        %v1907 = vld [vmem:[#allocation15 + $0x28] sm:$0xff]
        %v1908 = vld [vmem:[#allocation15 + $0x30] sm:$0xff]
        %v1909 = vld [vmem:[#allocation15 + $0x38] sm:$0xff]
        %v1910 = vld [vmem:[#allocation15 + $0x40] sm:$0xff]
        %v1911 = vld [vmem:[#allocation15 + $0x48] sm:$0xff]
        %v1912 = vld [vmem:[#allocation15 + $0x50] sm:$0xff]
        %v1913 = vld [vmem:[#allocation15 + $0x58] sm:$0xff]
        %v1914 = vld [vmem:[#allocation15 + $0x60] sm:$0xff]
        %v1915 = vld [vmem:[#allocation15 + $0x68] sm:$0xff]
        %v1916 = vld [vmem:[#allocation15 + $0x70] sm:$0xff]
        %v1917 = vld [vmem:[#allocation15 + $0x78] sm:$0xff]
        %v1918 = vld [vmem:[#allocation15 + $0x80] sm:$0xff]
        %v1919 = vld [vmem:[#allocation15 + $0x88] sm:$0xff]
        %v1920 = vld [vmem:[#allocation15 + $0x90] sm:$0xff]
        %v1921 = vld [vmem:[#allocation15 + $0x98] sm:$0xff]
        %v1922 = vld [vmem:[#allocation15 + $0xa0] sm:$0xff]
        %v1923 = vld [vmem:[#allocation15 + $0xa8] sm:$0xff]
        %v1924 = vld [vmem:[#allocation15 + $0xb0] sm:$0xff]
        %v1925 = vld [vmem:[#allocation15 + $0xb8] sm:$0xff]
        %v1926 = vld [vmem:[#allocation15 + $0xc0] sm:$0xff]
        %v1927 = vld [vmem:[#allocation15 + $0xc8] sm:$0xff]
        %v1928 = vld [vmem:[#allocation15 + $0xd0] sm:$0xff]
        %v1929 = vld [vmem:[#allocation15 + $0xd8] sm:$0xff]
        %v1930 = vld [vmem:[#allocation15 + $0xe0] sm:$0xff]
        %v1931 = vld [vmem:[#allocation15 + $0xe8] sm:$0xff]
        %v1932 = vld [vmem:[#allocation15 + $0xf0] sm:$0xff]
        %v1933 = vld [vmem:[#allocation15 + $0xf8] sm:$0xff]
        %v1934 = vld [vmem:[#allocation15 + $0x100] sm:$0xff]
        %v1935 = vld [vmem:[#allocation15 + $0x108] sm:$0xff]
        %v1936 = vld [vmem:[#allocation15 + $0x110] sm:$0xff]
        %v1937 = vld [vmem:[#allocation15 + $0x118] sm:$0xff]
        %v1938 = vld [vmem:[#allocation17] sm:$0x3f]
        %v1940 = vlaneseq
        %v1941 = vshrl.u32 %v1940, 7
        %v1942 = vsub.s32 0, %v1941
        %v1943 = vrot.slane %v1938, %v1942
        %v1944 = vlaneseq
        %v1945 = vshrl.u32 %v1944, 7
        %v1946 = vsub.s32 1, %v1945
        %v1947 = vrot.slane %v1938, %v1946
        %v1948 = vlaneseq
        %v1949 = vshrl.u32 %v1948, 7
        %v1950 = vsub.s32 2, %v1949
        %v1951 = vrot.slane %v1938, %v1950
        %v1952 = vlaneseq
        %v1953 = vshrl.u32 %v1952, 7
        %v1954 = vsub.s32 3, %v1953
        %v1955 = vrot.slane %v1938, %v1954
        %v1956 = vlaneseq
        %v1957 = vshrl.u32 %v1956, 7
        %v1958 = vsub.s32 4, %v1957
        %v1959 = vrot.slane %v1938, %v1958
        %v1960 = vlaneseq
        %v1961 = vshrl.u32 %v1960, 7
        %v1962 = vsub.s32 5, %v1961
        %v1963 = vrot.slane %v1938, %v1962
        %v2006 = vunpack.c.l.b16 %v1902
        %v2007 = vunpack.c.h.b16 %v1902
        %v2008 = vunpack.c.l.b16 %v1903
        %v2009 = vunpack.c.h.b16 %v1903
        %v2010 = vunpack.c.l.b16 %v1904
        %v2011 = vunpack.c.h.b16 %v1904
        %v2012 = vunpack.c.l.b16 %v1905
        %v2013 = vunpack.c.h.b16 %v1905
        %v2014 = vunpack.c.l.b16 %v1906
        %v2015 = vunpack.c.h.b16 %v1906
        %v2016 = vunpack.c.l.b16 %v1907
        %v2017 = vunpack.c.h.b16 %v1907
        %v2018 = vunpack.c.l.b16 %v1908
        %v2019 = vunpack.c.h.b16 %v1908
        %v2020 = vunpack.c.l.b16 %v1909
        %v2021 = vunpack.c.h.b16 %v1909
        %v2022 = vunpack.c.l.b16 %v1910
        %v2023 = vunpack.c.h.b16 %v1910
        %v2024 = vunpack.c.l.b16 %v1911
        %v2025 = vunpack.c.h.b16 %v1911
        %v2026 = vunpack.c.l.b16 %v1912
        %v2027 = vunpack.c.h.b16 %v1912
        %v2028 = vunpack.c.l.b16 %v1913
        %v2029 = vunpack.c.h.b16 %v1913
        %v2030 = vunpack.c.l.b16 %v1914
        %v2031 = vunpack.c.h.b16 %v1914
        %v2032 = vunpack.c.l.b16 %v1915
        %v2033 = vunpack.c.h.b16 %v1915
        %v2034 = vunpack.c.l.b16 %v1916
        %v2035 = vunpack.c.h.b16 %v1916
        %v2036 = vunpack.c.l.b16 %v1917
        %v2037 = vunpack.c.h.b16 %v1917
        %v2038 = vunpack.c.l.b16 %v1918
        %v2039 = vunpack.c.h.b16 %v1918
        %v2040 = vunpack.c.l.b16 %v1919
        %v2041 = vunpack.c.h.b16 %v1919
        %v2042 = vunpack.c.l.b16 %v1920
        %v2043 = vunpack.c.h.b16 %v1920
        %v2044 = vunpack.c.l.b16 %v1921
        %v2045 = vunpack.c.h.b16 %v1921
        %v2046 = vunpack.c.l.b16 %v1922
        %v2047 = vunpack.c.h.b16 %v1922
        %v2048 = vunpack.c.l.b16 %v1923
        %v2049 = vunpack.c.h.b16 %v1923
        %v2050 = vunpack.c.l.b16 %v1924
        %v2051 = vunpack.c.h.b16 %v1924
        %v2052 = vunpack.c.l.b16 %v1925
        %v2053 = vunpack.c.h.b16 %v1925
        %v2054 = vunpack.c.l.b16 %v1926
        %v2055 = vunpack.c.h.b16 %v1926
        %v2056 = vunpack.c.l.b16 %v1927
        %v2057 = vunpack.c.h.b16 %v1927
        %v2058 = vunpack.c.l.b16 %v1928
        %v2059 = vunpack.c.h.b16 %v1928
        %v2060 = vunpack.c.l.b16 %v1929
        %v2061 = vunpack.c.h.b16 %v1929
        %v2062 = vunpack.c.l.b16 %v1930
        %v2063 = vunpack.c.h.b16 %v1930
        %v2064 = vunpack.c.l.b16 %v1931
        %v2065 = vunpack.c.h.b16 %v1931
        %v2066 = vunpack.c.l.b16 %v1932
        %v2067 = vunpack.c.h.b16 %v1932
        %v2068 = vunpack.c.l.b16 %v1933
        %v2069 = vunpack.c.h.b16 %v1933
        %v2070 = vunpack.c.l.b16 %v1934
        %v2071 = vunpack.c.h.b16 %v1934
        %v2072 = vunpack.c.l.b16 %v1935
        %v2073 = vunpack.c.h.b16 %v1935
        %v2074 = vunpack.c.l.b16 %v1936
        %v2075 = vunpack.c.h.b16 %v1936
        %v2076 = vunpack.c.l.b16 %v1937
        %v2077 = vunpack.c.h.b16 %v1937
        %v2078 = vpack.c.b16 %v2012, %v2006
        %v2079 = vpack.c.b16 %v2013, %v2007
        %v2080 = vpack.c.b16 %v2014, %v2008
        %v2081 = vpack.c.b16 %v2015, %v2009
        %v2082 = vpack.c.b16 %v2016, %v2010
        %v2083 = vpack.c.b16 %v2017, %v2011
        %v2084 = vpack.c.b16 %v2024, %v2018
        %v2085 = vpack.c.b16 %v2025, %v2019
        %v2086 = vpack.c.b16 %v2026, %v2020
        %v2087 = vpack.c.b16 %v2027, %v2021
        %v2088 = vpack.c.b16 %v2028, %v2022
        %v2089 = vpack.c.b16 %v2029, %v2023
        %v2090 = vpack.c.b16 %v2036, %v2030
        %v2091 = vpack.c.b16 %v2037, %v2031
        %v2092 = vpack.c.b16 %v2038, %v2032
        %v2093 = vpack.c.b16 %v2039, %v2033
        %v2094 = vpack.c.b16 %v2040, %v2034
        %v2095 = vpack.c.b16 %v2041, %v2035
        %v2096 = vpack.c.b16 %v2048, %v2042
        %v2097 = vpack.c.b16 %v2049, %v2043
        %v2098 = vpack.c.b16 %v2050, %v2044
        %v2099 = vpack.c.b16 %v2051, %v2045
        %v2100 = vpack.c.b16 %v2052, %v2046
        %v2101 = vpack.c.b16 %v2053, %v2047
        %v2102 = vpack.c.b16 %v2060, %v2054
        %v2103 = vpack.c.b16 %v2061, %v2055
        %v2104 = vpack.c.b16 %v2062, %v2056
        %v2105 = vpack.c.b16 %v2063, %v2057
        %v2106 = vpack.c.b16 %v2064, %v2058
        %v2107 = vpack.c.b16 %v2065, %v2059
        %v2108 = vpack.c.b16 %v2072, %v2066
        %v2109 = vpack.c.b16 %v2073, %v2067
        %v2110 = vpack.c.b16 %v2074, %v2068
        %v2111 = vpack.c.b16 %v2075, %v2069
        %v2112 = vpack.c.b16 %v2076, %v2070
        %v2113 = vpack.c.b16 %v2077, %v2071
        %v2151 = vsel %vm1491, %v1901, 0
        %2153 = vmatprep.subr.bf16.mxu0 0
        %2154 = vmatpush1.bf16.msra.mxu0 0
        %2155 = vmatprep.subr.bf16.mxu0 0
        %2156 = vmatpush1.bf16.msra.mxu0 0
        %2157 = vmatprep.subr.bf16.mxu0 %v2109
        %2158 = vmatpush1.bf16.msra.mxu0 %v2108
        %2159 = vmatprep.subr.bf16.mxu0 %v2103
        %2160 = vmatpush1.bf16.msra.mxu0 %v2102
        %2161 = vmatprep.subr.bf16.mxu0 %v2097
        %2162 = vmatpush1.bf16.msra.mxu0 %v2096
        %2163 = vmatprep.subr.bf16.mxu0 %v2091
        %2164 = vmatpush1.bf16.msra.mxu0 %v2090
        %2165 = vmatprep.subr.bf16.mxu0 %v2085
        %2166 = vmatpush1.bf16.msra.mxu0 %v2084
        %2167 = vmatprep.subr.bf16.mxu0 %v2079
        %2168 = vmatpush1.bf16.msra.mxu0 %v2078
        %2169 = vmatprep.subr.bf16.mxu0 0
        %2170 = vmatpush2.bf16.msra.mxu0 0
        %2171 = vmatprep.subr.bf16.mxu0 0
        %2172 = vmatpush2.bf16.msra.mxu0 0
        %2173 = vmatprep.subr.bf16.mxu0 0
        %2174 = vmatpush2.bf16.msra.mxu0 0
        %2175 = vmatprep.subr.bf16.mxu0 0
        %2176 = vmatpush2.bf16.msra.mxu0 0
        %2177 = vmatprep.subr.bf16.mxu0 0
        %2178 = vmatpush2.bf16.msra.mxu0 0
        %2179 = vmatprep.subr.bf16.mxu0 0
        %2180 = vmatpush2.bf16.msra.mxu0 0
        %2181 = vmatprep.subr.bf16.mxu0 0
        %2182 = vmatpush2.bf16.msra.mxu0 0
        %2183 = vmatprep.subr.bf16.mxu0 0
        %2184 = vmatpush2.bf16.msra.mxu0 0
        %2185 = vmatprep.mubr.bf16.mxu0 0
        %2186 = vmatmul.mubr.bf16.gmra.mxu0 %v2151
        %v2187 = vpop.f32.mrf.mxu0
        %v2188 = vadd.f32 %v1943, %v2187
        %v2189 = vpop.f32.mrf.mxu0
        %v2190 = vadd.f32 %v1947, %v2189
        %v2191 = vpop.f32.mrf.mxu0
        %v2192 = vadd.f32 %v1943, %v2191
        %v2193 = vpop.f32.mrf.mxu0
        %v2194 = vadd.f32 %v1947, %v2193
        %2195 = vdwg.mxu0
        %2196 = vmatprep.subr.bf16.mxu0 0
        %2197 = vmatpush1.bf16.msra.mxu0 0
        %2198 = vmatprep.subr.bf16.mxu0 0
        %2199 = vmatpush1.bf16.msra.mxu0 0
        %2200 = vmatprep.subr.bf16.mxu0 %v2111
        %2201 = vmatpush1.bf16.msra.mxu0 %v2110
        %2202 = vmatprep.subr.bf16.mxu0 %v2105
        %2203 = vmatpush1.bf16.msra.mxu0 %v2104
        %2204 = vmatprep.subr.bf16.mxu0 %v2099
        %2205 = vmatpush1.bf16.msra.mxu0 %v2098
        %2206 = vmatprep.subr.bf16.mxu0 %v2093
        %2207 = vmatpush1.bf16.msra.mxu0 %v2092
        %2208 = vmatprep.subr.bf16.mxu0 %v2087
        %2209 = vmatpush1.bf16.msra.mxu0 %v2086
        %2210 = vmatprep.subr.bf16.mxu0 %v2081
        %2211 = vmatpush1.bf16.msra.mxu0 %v2080
        %2212 = vmatprep.subr.bf16.mxu0 0
        %2213 = vmatpush2.bf16.msra.mxu0 0
        %2214 = vmatprep.subr.bf16.mxu0 0
        %2215 = vmatpush2.bf16.msra.mxu0 0
        %2216 = vmatprep.subr.bf16.mxu0 0
        %2217 = vmatpush2.bf16.msra.mxu0 0
        %2218 = vmatprep.subr.bf16.mxu0 0
        %2219 = vmatpush2.bf16.msra.mxu0 0
        %2220 = vmatprep.subr.bf16.mxu0 0
        %2221 = vmatpush2.bf16.msra.mxu0 0
        %2222 = vmatprep.subr.bf16.mxu0 0
        %2223 = vmatpush2.bf16.msra.mxu0 0
        %2224 = vmatprep.subr.bf16.mxu0 0
        %2225 = vmatpush2.bf16.msra.mxu0 0
        %2226 = vmatprep.subr.bf16.mxu0 0
        %2227 = vmatpush2.bf16.msra.mxu0 0
        %2228 = vmatprep.mubr.bf16.mxu0 0
        %2229 = vmatmul.mubr.bf16.gmra.mxu0 %v2151
        %v2230 = vpop.f32.mrf.mxu0
        %v2231 = vadd.f32 %v1951, %v2230
        %v2232 = vpop.f32.mrf.mxu0
        %v2233 = vadd.f32 %v1955, %v2232
        %v2234 = vpop.f32.mrf.mxu0
        %v2235 = vadd.f32 %v1951, %v2234
        %v2236 = vpop.f32.mrf.mxu0
        %v2237 = vadd.f32 %v1955, %v2236
        %2238 = vdwg.mxu0
        %2239 = vmatprep.subr.bf16.mxu0 0
        %2240 = vmatpush1.bf16.msra.mxu0 0
        %2241 = vmatprep.subr.bf16.mxu0 0
        %2242 = vmatpush1.bf16.msra.mxu0 0
        %2243 = vmatprep.subr.bf16.mxu0 %v2113
        %2244 = vmatpush1.bf16.msra.mxu0 %v2112
        %2245 = vmatprep.subr.bf16.mxu0 %v2107
        %2246 = vmatpush1.bf16.msra.mxu0 %v2106
        %2247 = vmatprep.subr.bf16.mxu0 %v2101
        %2248 = vmatpush1.bf16.msra.mxu0 %v2100
        %2249 = vmatprep.subr.bf16.mxu0 %v2095
        %2250 = vmatpush1.bf16.msra.mxu0 %v2094
        %2251 = vmatprep.subr.bf16.mxu0 %v2089
        %2252 = vmatpush1.bf16.msra.mxu0 %v2088
        %2253 = vmatprep.subr.bf16.mxu0 %v2083
        %2254 = vmatpush1.bf16.msra.mxu0 %v2082
        %2255 = vmatprep.subr.bf16.mxu0 0
        %2256 = vmatpush2.bf16.msra.mxu0 0
        %2257 = vmatprep.subr.bf16.mxu0 0
        %2258 = vmatpush2.bf16.msra.mxu0 0
        %2259 = vmatprep.subr.bf16.mxu0 0
        %2260 = vmatpush2.bf16.msra.mxu0 0
        %2261 = vmatprep.subr.bf16.mxu0 0
        %2262 = vmatpush2.bf16.msra.mxu0 0
        %2263 = vmatprep.subr.bf16.mxu0 0
        %2264 = vmatpush2.bf16.msra.mxu0 0
        %2265 = vmatprep.subr.bf16.mxu0 0
        %2266 = vmatpush2.bf16.msra.mxu0 0
        %2267 = vmatprep.subr.bf16.mxu0 0
        %2268 = vmatpush2.bf16.msra.mxu0 0
        %2269 = vmatprep.subr.bf16.mxu0 0
        %2270 = vmatpush2.bf16.msra.mxu0 0
        %2271 = vmatprep.mubr.bf16.mxu0 0
        %2272 = vmatmul.mubr.bf16.gmra.mxu0 %v2151
        %v2273 = vpop.f32.mrf.mxu0
        %v2274 = vadd.f32 %v1959, %v2273
        %v2275 = vpop.f32.mrf.mxu0
        %v2276 = vadd.f32 %v1963, %v2275
        %v2277 = vpop.f32.mrf.mxu0
        %v2278 = vadd.f32 %v1959, %v2277
        %v2279 = vpop.f32.mrf.mxu0
        %v2280 = vadd.f32 %v1963, %v2279
        %2281 = vdwg.mxu0
        %v2282 = vpack.c.bf16 %v2192, %v2188
        %v2283 = vpack.c.bf16 %v2194, %v2190
        %v2284 = vpack.c.bf16 %v2235, %v2231
        %v2285 = vpack.c.bf16 %v2237, %v2233
        %v2286 = vpack.c.bf16 %v2278, %v2274
        %v2287 = vpack.c.bf16 %v2280, %v2276
        %2288 = vmatprep.subr.bf16.mxu0 0
        %2289 = vmatpush1.bf16.xpose.msra.mxu0 0
        %2290 = vmatprep.subr.bf16.mxu0 0
        %2291 = vmatpush1.bf16.xpose.msra.mxu0 0
        %2292 = vmatprep.subr.bf16.mxu0 0
        %2293 = vmatpush1.bf16.xpose.msra.mxu0 0
        %2294 = vmatprep.subr.bf16.mxu0 0
        %2295 = vmatpush1.bf16.xpose.msra.mxu0 0
        %2296 = vmatprep.subr.bf16.mxu0 0
        %2297 = vmatpush1.bf16.xpose.msra.mxu0 0
        %2298 = vmatprep.subr.bf16.mxu0 0
        %2299 = vmatpush1.bf16.xpose.msra.mxu0 0
        %2300 = vmatprep.subr.bf16.mxu0 0
        %2301 = vmatpush1.bf16.xpose.msra.mxu0 0
        %2302 = vmatprep.subr.bf16.mxu0 0
        %2303 = vmatpush1.bf16.xpose.msra.mxu0 %v2284
        %2304 = vmatprep.subr.bf16.mxu0 0
        %2305 = vmatpush2.bf16.xpose.msra.mxu0 0
        %2306 = vmatprep.subr.bf16.mxu0 0
        %2307 = vmatpush2.bf16.xpose.msra.mxu0 0
        %2308 = vmatprep.subr.bf16.mxu0 0
        %2309 = vmatpush2.bf16.xpose.msra.mxu0 0
        %2310 = vmatprep.subr.bf16.mxu0 0
        %2311 = vmatpush2.bf16.xpose.msra.mxu0 0
        %2312 = vmatprep.subr.bf16.mxu0 0
        %2313 = vmatpush2.bf16.xpose.msra.mxu0 0
        %2314 = vmatprep.subr.bf16.mxu0 0
        %2315 = vmatpush2.bf16.xpose.msra.mxu0 0
        %2316 = vmatprep.subr.bf16.mxu0 0
        %2317 = vmatpush2.bf16.xpose.msra.mxu0 0
        %2318 = vmatprep.subr.bf16.mxu0 0
        %2319 = vmatpush2.bf16.xpose.msra.mxu0 0
        %2320 = vmatprep.mubr.bf16.mxu0 0
        %2321 = vmatmul.mubr.bf16.gmra.mxu0 %v2282
        %v2322 = vpop.f32.mrf.mxu0
        %v2323 = vadd.f32 %v1315, %v2322
        %v2324 = vpop.f32.mrf.mxu0
        %v2325 = vpop.f32.mrf.mxu0
        %v2326 = vadd.f32 %v1316, %v2325
        %v2327 = vpop.f32.mrf.mxu0
        %2328 = vdwg.mxu0
        %v2329 = vsel %vm1326, %v2323, -inf
        %2330 = vmax.xlane.f32.xlu0 %v2329
        %v2331 = vpop.xlane.xlu0 %2330
        %v2332 = vsel %vm1326, %v2326, -inf
        %2333 = vmax.xlane.f32.xlu0 %v2332
        %v2334 = vpop.xlane.xlu0 %2333
        %v2335 = vmax.f32 %v2331, 0.0
        %v2336 = vmax.f32 %v2334, 0.0
        %v2337 = vsub.f32 %v2323, %v2335
        %v2338 = vsub.f32 %v2326, %v2336
        %v2339 = vmul.f32 %v2337, 1.442695
        %v2340 = vpow.pop %v2339
        %v2341 = vmul.f32 %v2338, 1.442695
        %v2342 = vpow.pop %v2341
        %v2343 = vsel %vm1326, %v2340, 0.0
        %2344 = vadd.xlane.f32.xlu0 %v2343
        %v2345 = vpop.xlane.xlu0 %2344
        %v2346 = vsel %vm1326, %v2342, 0.0
        %2347 = vadd.xlane.f32.xlu0 %v2346
        %v2348 = vpop.xlane.xlu0 %2347
        %v2349 = vsub.f32 0.0, %v2335
        %v2350 = vsub.f32 0.0, %v2336
        %v2351 = vmul.f32 %v2349, 1.442695
        %v2352 = vpow.pop %v2351
        %v2353 = vmul.f32 %v2350, 1.442695
        %v2354 = vpow.pop %v2353
        %v2355 = vadd.f32 %v2345, %v2352
        %v2356 = vadd.f32 %v2348, %v2354
        %v2357 = vrcp.pop %v2355
        %v2358 = vrcp.pop %v2356
        %v2359 = vmul.f32 %v2340, %v2357
        %v2360 = vmul.f32 %v2342, %v2358
        %v2361 = vpack.c.bf16 %v2360, %v2359
        %2362 = vmatprep.subr.bf16.mxu0 0
        %2363 = vmatpush1.bf16.xpose.msra.mxu0 0
        %2364 = vmatprep.subr.bf16.mxu0 0
        %2365 = vmatpush1.bf16.xpose.msra.mxu0 0
        %2366 = vmatprep.subr.bf16.mxu0 0
        %2367 = vmatpush1.bf16.xpose.msra.mxu0 0
        %2368 = vmatprep.subr.bf16.mxu0 0
        %2369 = vmatpush1.bf16.xpose.msra.mxu0 0
        %2370 = vmatprep.subr.bf16.mxu0 0
        %2371 = vmatpush1.bf16.xpose.msra.mxu0 0
        %2372 = vmatprep.subr.bf16.mxu0 0
        %2373 = vmatpush1.bf16.xpose.msra.mxu0 0
        %2374 = vmatprep.subr.bf16.mxu0 0
        %2375 = vmatpush1.bf16.xpose.msra.mxu0 0
        %2376 = vmatprep.subr.bf16.mxu0 0
        %2377 = vmatpush1.bf16.xpose.msra.mxu0 %v2285
        %2378 = vmatprep.subr.bf16.mxu0 0
        %2379 = vmatpush2.bf16.xpose.msra.mxu0 0
        %2380 = vmatprep.subr.bf16.mxu0 0
        %2381 = vmatpush2.bf16.xpose.msra.mxu0 0
        %2382 = vmatprep.subr.bf16.mxu0 0
        %2383 = vmatpush2.bf16.xpose.msra.mxu0 0
        %2384 = vmatprep.subr.bf16.mxu0 0
        %2385 = vmatpush2.bf16.xpose.msra.mxu0 0
        %2386 = vmatprep.subr.bf16.mxu0 0
        %2387 = vmatpush2.bf16.xpose.msra.mxu0 0
        %2388 = vmatprep.subr.bf16.mxu0 0
        %2389 = vmatpush2.bf16.xpose.msra.mxu0 0
        %2390 = vmatprep.subr.bf16.mxu0 0
        %2391 = vmatpush2.bf16.xpose.msra.mxu0 0
        %2392 = vmatprep.subr.bf16.mxu0 0
        %2393 = vmatpush2.bf16.xpose.msra.mxu0 0
        %2394 = vmatprep.mubr.bf16.mxu0 0
        %2395 = vmatmul.mubr.bf16.gmra.mxu0 %v2283
        %v2396 = vpop.f32.mrf.mxu0
        %v2397 = vadd.f32 %v1427, %v2396
        %v2398 = vpop.f32.mrf.mxu0
        %v2399 = vpop.f32.mrf.mxu0
        %v2400 = vadd.f32 %v1428, %v2399
        %v2401 = vpop.f32.mrf.mxu0
        %2402 = vdwg.mxu0
        %v2403 = vsel %vm1326, %v2397, -inf
        %2404 = vmax.xlane.f32.xlu0 %v2403
        %v2405 = vpop.xlane.xlu0 %2404
        %v2406 = vsel %vm1326, %v2400, -inf
        %2407 = vmax.xlane.f32.xlu0 %v2406
        %v2408 = vpop.xlane.xlu0 %2407
        %v2409 = vmax.f32 %v2405, 0.0
        %v2410 = vmax.f32 %v2408, 0.0
        %v2411 = vsub.f32 %v2397, %v2409
        %v2412 = vsub.f32 %v2400, %v2410
        %v2413 = vmul.f32 %v2411, 1.442695
        %v2414 = vpow.pop %v2413
        %v2415 = vmul.f32 %v2412, 1.442695
        %v2416 = vpow.pop %v2415
        %v2417 = vsel %vm1326, %v2414, 0.0
        %2418 = vadd.xlane.f32.xlu0 %v2417
        %v2419 = vpop.xlane.xlu0 %2418
        %v2420 = vsel %vm1326, %v2416, 0.0
        %2421 = vadd.xlane.f32.xlu0 %v2420
        %v2422 = vpop.xlane.xlu0 %2421
        %v2423 = vsub.f32 0.0, %v2409
        %v2424 = vsub.f32 0.0, %v2410
        %v2425 = vmul.f32 %v2423, 1.442695
        %v2426 = vpow.pop %v2425
        %v2427 = vmul.f32 %v2424, 1.442695
        %v2428 = vpow.pop %v2427
        %v2429 = vadd.f32 %v2419, %v2426
        %v2430 = vadd.f32 %v2422, %v2428
        %v2431 = vrcp.pop %v2429
        %v2432 = vrcp.pop %v2430
        %v2433 = vmul.f32 %v2414, %v2431
        %v2434 = vmul.f32 %v2416, %v2432
        %v2435 = vpack.c.bf16 %v2434, %v2433
        %v2437 = vsel %vm1326, %v2435, 0
        %2439 = vmatprep.subr.bf16.mxu0 0
        %2440 = vmatpush1.bf16.msra.mxu0 0
        %2441 = vmatprep.subr.bf16.mxu0 0
        %2442 = vmatpush1.bf16.msra.mxu0 0
        %2443 = vmatprep.subr.bf16.mxu0 0
        %2444 = vmatpush1.bf16.msra.mxu0 0
        %2445 = vmatprep.subr.bf16.mxu0 0
        %2446 = vmatpush1.bf16.msra.mxu0 0
        %2447 = vmatprep.subr.bf16.mxu0 0
        %2448 = vmatpush1.bf16.msra.mxu0 0
        %2449 = vmatprep.subr.bf16.mxu0 0
        %2450 = vmatpush1.bf16.msra.mxu0 0
        %2451 = vmatprep.subr.bf16.mxu0 0
        %2452 = vmatpush1.bf16.msra.mxu0 0
        %2453 = vmatprep.subr.bf16.mxu0 0
        %2454 = vmatpush1.bf16.msra.mxu0 %v2287
        %2455 = vmatprep.subr.bf16.mxu0 0
        %2456 = vmatpush2.bf16.msra.mxu0 0
        %2457 = vmatprep.subr.bf16.mxu0 0
        %2458 = vmatpush2.bf16.msra.mxu0 0
        %2459 = vmatprep.subr.bf16.mxu0 0
        %2460 = vmatpush2.bf16.msra.mxu0 0
        %2461 = vmatprep.subr.bf16.mxu0 0
        %2462 = vmatpush2.bf16.msra.mxu0 0
        %2463 = vmatprep.subr.bf16.mxu0 0
        %2464 = vmatpush2.bf16.msra.mxu0 0
        %2465 = vmatprep.subr.bf16.mxu0 0
        %2466 = vmatpush2.bf16.msra.mxu0 0
        %2467 = vmatprep.subr.bf16.mxu0 0
        %2468 = vmatpush2.bf16.msra.mxu0 0
        %2469 = vmatprep.subr.bf16.mxu0 0
        %2470 = vmatpush2.bf16.msra.mxu0 0
        %2471 = vmatprep.mubr.bf16.mxu0 0
        %2472 = vmatmul.mubr.bf16.gmra.mxu0 %v2437
        %v2473 = vpop.f32.mrf.mxu0
        %v2474 = vadd.f32 0.0, %v2473
        %v2475 = vpop.f32.mrf.mxu0
        %v2476 = vpop.f32.mrf.mxu0
        %v2477 = vadd.f32 0.0, %v2476
        %v2478 = vpop.f32.mrf.mxu0
        %2479 = vdwg.mxu0
        %v2481 = vsel %vm1326, %v2361, 0
        %2483 = vmatprep.subr.bf16.mxu0 0
        %2484 = vmatpush1.bf16.msra.mxu0 0
        %2485 = vmatprep.subr.bf16.mxu0 0
        %2486 = vmatpush1.bf16.msra.mxu0 0
        %2487 = vmatprep.subr.bf16.mxu0 0
        %2488 = vmatpush1.bf16.msra.mxu0 0
        %2489 = vmatprep.subr.bf16.mxu0 0
        %2490 = vmatpush1.bf16.msra.mxu0 0
        %2491 = vmatprep.subr.bf16.mxu0 0
        %2492 = vmatpush1.bf16.msra.mxu0 0
        %2493 = vmatprep.subr.bf16.mxu0 0
        %2494 = vmatpush1.bf16.msra.mxu0 0
        %2495 = vmatprep.subr.bf16.mxu0 0
        %2496 = vmatpush1.bf16.msra.mxu0 0
        %2497 = vmatprep.subr.bf16.mxu0 0
        %2498 = vmatpush1.bf16.msra.mxu0 %v2286
        %2499 = vmatprep.subr.bf16.mxu0 0
        %2500 = vmatpush2.bf16.msra.mxu0 0
        %2501 = vmatprep.subr.bf16.mxu0 0
        %2502 = vmatpush2.bf16.msra.mxu0 0
        %2503 = vmatprep.subr.bf16.mxu0 0
        %2504 = vmatpush2.bf16.msra.mxu0 0
        %2505 = vmatprep.subr.bf16.mxu0 0
        %2506 = vmatpush2.bf16.msra.mxu0 0
        %2507 = vmatprep.subr.bf16.mxu0 0
        %2508 = vmatpush2.bf16.msra.mxu0 0
        %2509 = vmatprep.subr.bf16.mxu0 0
        %2510 = vmatpush2.bf16.msra.mxu0 0
        %2511 = vmatprep.subr.bf16.mxu0 0
        %2512 = vmatpush2.bf16.msra.mxu0 0
        %2513 = vmatprep.subr.bf16.mxu0 0
        %2514 = vmatpush2.bf16.msra.mxu0 0
        %2515 = vmatprep.mubr.bf16.mxu0 0
        %2516 = vmatmul.mubr.bf16.gmra.mxu0 %v2481
        %v2517 = vpop.f32.mrf.mxu0
        %v2518 = vadd.f32 %v2474, %v2517
        %v2519 = vpop.f32.mrf.mxu0
        %v2520 = vpop.f32.mrf.mxu0
        %v2521 = vadd.f32 %v2477, %v2520
        %v2522 = vpop.f32.mrf.mxu0
        %2523 = vdwg.mxu0
        %v2524 = vld [vmem:[#allocation18] sm:$0x1]
        %v2526 = vlaneseq
        %v2527 = vshrl.u32 %v2526, 7
        %v2528 = vsub.s32 0, %v2527
        %v2529 = vrot.slane %v2524, %v2528
        %v2531 = vadd.f32 %v2518, %v2529
        %v2532 = vadd.f32 %v2521, %v2529
        %v2533 = vstv %s1897
        %v2534 = vmul.f32 %v2533, %v2531
        %v2535 = vmul.f32 %v2533, %v2532
        %v2536 = vadd.f32 %v1895, %v2534
        %v2537 = vadd.f32 %v1896, %v2535
        %v2538 = vpack.c.bf16 %v2537, %v2536
        %v2539 = vld [vmem:[%s35] sm:$0xf]
        %v2540 = vld [vmem:[%s35 + $0x4] sm:$0xf]
        %v2541 = vld [vmem:[%s35 + $0x8] sm:$0xf]
        %v2542 = vld [vmem:[%s35 + $0xc] sm:$0xf]
        %v2543 = vld [vmem:[%s35 + $0x10] sm:$0xf]
        %v2544 = vld [vmem:[%s35 + $0x14] sm:$0xf]
        %v2545 = vld [vmem:[%s35 + $0x18] sm:$0xf]
        %v2546 = vld [vmem:[%s35 + $0x1c] sm:$0xf]
        %v2547 = vld [vmem:[%s35 + $0x20] sm:$0xf]
        %v2548 = vld [vmem:[%s35 + $0x24] sm:$0xf]
        %v2549 = vld [vmem:[%s35 + $0x28] sm:$0xf]
        %v2550 = vld [vmem:[%s35 + $0x2c] sm:$0xf]
        %v2551 = vld [vmem:[#allocation24] sm:$0x1]
        %v2553 = vlaneseq
        %v2554 = vshrl.u32 %v2553, 7
        %v2555 = vsub.s32 0, %v2554
        %v2556 = vrot.slane %v2551, %v2555
        %v2570 = vunpack.c.l.b16 %v2539
        %v2571 = vunpack.c.l.b16 %v2540
        %v2572 = vunpack.c.l.b16 %v2541
        %v2573 = vunpack.c.l.b16 %v2542
        %v2574 = vunpack.c.l.b16 %v2543
        %v2575 = vunpack.c.l.b16 %v2544
        %v2576 = vunpack.c.l.b16 %v2545
        %v2577 = vunpack.c.l.b16 %v2546
        %v2578 = vunpack.c.l.b16 %v2547
        %v2579 = vunpack.c.l.b16 %v2548
        %v2580 = vunpack.c.l.b16 %v2549
        %v2581 = vunpack.c.l.b16 %v2550
        %v2582 = vpack.c.b16 %v2571, %v2570
        %v2583 = vpack.c.b16 %v2573, %v2572
        %v2584 = vpack.c.b16 %v2575, %v2574
        %v2585 = vpack.c.b16 %v2577, %v2576
        %v2586 = vpack.c.b16 %v2579, %v2578
        %v2587 = vpack.c.b16 %v2581, %v2580
        %v2595 = vsel %vm1491, %v2538, 0
        %2597 = vmatprep.subr.bf16.mxu0 0
        %2598 = vmatpush1.bf16.msra.mxu0 0
        %2599 = vmatprep.subr.bf16.mxu0 0
        %2600 = vmatpush1.bf16.msra.mxu0 0
        %2601 = vmatprep.subr.bf16.mxu0 0
        %2602 = vmatpush1.bf16.msra.mxu0 %v2587
        %2603 = vmatprep.subr.bf16.mxu0 0
        %2604 = vmatpush1.bf16.msra.mxu0 %v2586
        %2605 = vmatprep.subr.bf16.mxu0 0
        %2606 = vmatpush1.bf16.msra.mxu0 %v2585
        %2607 = vmatprep.subr.bf16.mxu0 0
        %2608 = vmatpush1.bf16.msra.mxu0 %v2584
        %2609 = vmatprep.subr.bf16.mxu0 0
        %2610 = vmatpush1.bf16.msra.mxu0 %v2583
        %2611 = vmatprep.subr.bf16.mxu0 0
        %2612 = vmatpush1.bf16.msra.mxu0 %v2582
        %2613 = vmatprep.subr.bf16.mxu0 0
        %2614 = vmatpush2.bf16.msra.mxu0 0
        %2615 = vmatprep.subr.bf16.mxu0 0
        %2616 = vmatpush2.bf16.msra.mxu0 0
        %2617 = vmatprep.subr.bf16.mxu0 0
        %2618 = vmatpush2.bf16.msra.mxu0 0
        %2619 = vmatprep.subr.bf16.mxu0 0
        %2620 = vmatpush2.bf16.msra.mxu0 0
        %2621 = vmatprep.subr.bf16.mxu0 0
        %2622 = vmatpush2.bf16.msra.mxu0 0
        %2623 = vmatprep.subr.bf16.mxu0 0
        %2624 = vmatpush2.bf16.msra.mxu0 0
        %2625 = vmatprep.subr.bf16.mxu0 0
        %2626 = vmatpush2.bf16.msra.mxu0 0
        %2627 = vmatprep.subr.bf16.mxu0 0
        %2628 = vmatpush2.bf16.msra.mxu0 0
        %2629 = vmatprep.mubr.bf16.mxu0 0
        %2630 = vmatmul.mubr.bf16.gmra.mxu0 %v2595
        %v2631 = vpop.f32.mrf.mxu0
        %v2632 = vadd.f32 %v2556, %v2631
        %v2633 = vpop.f32.mrf.mxu0
        %v2634 = vpop.f32.mrf.mxu0
        %v2635 = vadd.f32 %v2556, %v2634
        %v2636 = vpop.f32.mrf.mxu0
        %2637 = vdwg.mxu0
        %vm2638 = vcmp.gt.f32.partialorder %v2632, 0.0
        %vm2639 = vcmp.gt.f32.partialorder %v2635, 0.0
        %v2640 = vmul.f32 %v2632, 0.01
        %v2641 = vmul.f32 %v2635, 0.01
        %v2642 = vsel %vm2638, %v2632, %v2640
        %v2643 = vsel %vm2639, %v2635, %v2641
        %v2644 = vpack.c.bf16 %v2643, %v2642
        %v2645 = vld [vmem:[%s39] sm:$0xf]
        %v2646 = vld [vmem:[%s39 + $0x4] sm:$0xf]
        %v2647 = vld [vmem:[%s39 + $0x8] sm:$0xf]
        %v2648 = vld [vmem:[%s39 + $0xc] sm:$0xf]
        %v2649 = vld [vmem:[%s39 + $0x10] sm:$0xf]
        %v2650 = vld [vmem:[%s39 + $0x14] sm:$0xf]
        %v2651 = vld [vmem:[#allocation26] sm:$0x1]
        %v2653 = vlaneseq
        %v2654 = vshrl.u32 %v2653, 7
        %v2655 = vsub.s32 0, %v2654
        %v2656 = vrot.slane %v2651, %v2655
        %v2664 = vunpack.c.l.b16 %v2645
        %v2665 = vunpack.c.l.b16 %v2646
        %v2666 = vunpack.c.l.b16 %v2647
        %v2667 = vunpack.c.l.b16 %v2648
        %v2668 = vunpack.c.l.b16 %v2649
        %v2669 = vunpack.c.l.b16 %v2650
        %v2670 = vpack.c.b16 %v2665, %v2664
        %v2671 = vpack.c.b16 %v2667, %v2666
        %v2672 = vpack.c.b16 %v2669, %v2668
        %vm2676 = vcmask 392192
        %v2678 = vsel %vm2676, %v2644, 0
        %2680 = vmatprep.subr.bf16.mxu0 0
        %2681 = vmatpush1.bf16.msra.mxu0 0
        %2682 = vmatprep.subr.bf16.mxu0 0
        %2683 = vmatpush1.bf16.msra.mxu0 0
        %2684 = vmatprep.subr.bf16.mxu0 0
        %2685 = vmatpush1.bf16.msra.mxu0 0
        %2686 = vmatprep.subr.bf16.mxu0 0
        %2687 = vmatpush1.bf16.msra.mxu0 0
        %2688 = vmatprep.subr.bf16.mxu0 0
        %2689 = vmatpush1.bf16.msra.mxu0 0
        %2690 = vmatprep.subr.bf16.mxu0 0
        %2691 = vmatpush1.bf16.msra.mxu0 %v2672
        %2692 = vmatprep.subr.bf16.mxu0 0
        %2693 = vmatpush1.bf16.msra.mxu0 %v2671
        %2694 = vmatprep.subr.bf16.mxu0 0
        %2695 = vmatpush1.bf16.msra.mxu0 %v2670
        %2696 = vmatprep.subr.bf16.mxu0 0
        %2697 = vmatpush2.bf16.msra.mxu0 0
        %2698 = vmatprep.subr.bf16.mxu0 0
        %2699 = vmatpush2.bf16.msra.mxu0 0
        %2700 = vmatprep.subr.bf16.mxu0 0
        %2701 = vmatpush2.bf16.msra.mxu0 0
        %2702 = vmatprep.subr.bf16.mxu0 0
        %2703 = vmatpush2.bf16.msra.mxu0 0
        %2704 = vmatprep.subr.bf16.mxu0 0
        %2705 = vmatpush2.bf16.msra.mxu0 0
        %2706 = vmatprep.subr.bf16.mxu0 0
        %2707 = vmatpush2.bf16.msra.mxu0 0
        %2708 = vmatprep.subr.bf16.mxu0 0
        %2709 = vmatpush2.bf16.msra.mxu0 0
        %2710 = vmatprep.subr.bf16.mxu0 0
        %2711 = vmatpush2.bf16.msra.mxu0 0
        %2712 = vmatprep.mubr.bf16.mxu0 0
        %2713 = vmatmul.mubr.bf16.gmra.mxu0 %v2678
        %v2714 = vpop.f32.mrf.mxu0
        %v2715 = vadd.f32 %v2656, %v2714
        %v2716 = vpop.f32.mrf.mxu0
        %v2717 = vpop.f32.mrf.mxu0
        %v2718 = vadd.f32 %v2656, %v2717
        %v2719 = vpop.f32.mrf.mxu0
        %2720 = vdwg.mxu0
        %v2721 = vstv %s1898
        %v2722 = vmul.f32 %v2721, %v2715
        %v2723 = vmul.f32 %v2721, %v2718
        %v2724 = vadd.f32 %v2536, %v2722
        %v2725 = vadd.f32 %v2537, %v2723
        %v2726 = vmul.f32 %v1315, 0.2
        %v2727 = vmul.f32 %v1316, 0.2
        %v2728 = vmul.f32 %v1427, 0.2
        %v2729 = vmul.f32 %v1428, 0.2
        %v2730 = vpack.c.bf16 %v2725, %v2724
        %v2731 = vld [vmem:[#allocation20] sm:$0xff]
        %v2732 = vld [vmem:[#allocation20 + $0x8] sm:$0xff]
        %v2733 = vld [vmem:[#allocation20 + $0x10] sm:$0xff]
        %v2734 = vld [vmem:[#allocation20 + $0x18] sm:$0xff]
        %v2735 = vld [vmem:[#allocation20 + $0x20] sm:$0xff]
        %v2736 = vld [vmem:[#allocation20 + $0x28] sm:$0xff]
        %v2737 = vld [vmem:[#allocation20 + $0x30] sm:$0xff]
        %v2738 = vld [vmem:[#allocation20 + $0x38] sm:$0xff]
        %v2739 = vld [vmem:[#allocation20 + $0x40] sm:$0xff]
        %v2740 = vld [vmem:[#allocation20 + $0x48] sm:$0xff]
        %v2741 = vld [vmem:[#allocation20 + $0x50] sm:$0xff]
        %v2742 = vld [vmem:[#allocation20 + $0x58] sm:$0xff]
        %v2743 = vld [vmem:[#allocation20 + $0x60] sm:$0xff]
        %v2744 = vld [vmem:[#allocation20 + $0x68] sm:$0xff]
        %v2745 = vld [vmem:[#allocation20 + $0x70] sm:$0xff]
        %v2746 = vld [vmem:[#allocation20 + $0x78] sm:$0xff]
        %v2747 = vld [vmem:[#allocation20 + $0x80] sm:$0xff]
        %v2748 = vld [vmem:[#allocation20 + $0x88] sm:$0xff]
        %v2749 = vld [vmem:[#allocation20 + $0x90] sm:$0xff]
        %v2750 = vld [vmem:[#allocation20 + $0x98] sm:$0xff]
        %v2751 = vld [vmem:[#allocation20 + $0xa0] sm:$0xff]
        %v2752 = vld [vmem:[#allocation20 + $0xa8] sm:$0xff]
        %v2753 = vld [vmem:[#allocation20 + $0xb0] sm:$0xff]
        %v2754 = vld [vmem:[#allocation20 + $0xb8] sm:$0xff]
        %v2755 = vld [vmem:[#allocation20 + $0xc0] sm:$0xff]
        %v2756 = vld [vmem:[#allocation20 + $0xc8] sm:$0xff]
        %v2757 = vld [vmem:[#allocation20 + $0xd0] sm:$0xff]
        %v2758 = vld [vmem:[#allocation20 + $0xd8] sm:$0xff]
        %v2759 = vld [vmem:[#allocation20 + $0xe0] sm:$0xff]
        %v2760 = vld [vmem:[#allocation20 + $0xe8] sm:$0xff]
        %v2761 = vld [vmem:[#allocation20 + $0xf0] sm:$0xff]
        %v2762 = vld [vmem:[#allocation20 + $0xf8] sm:$0xff]
        %v2763 = vld [vmem:[#allocation20 + $0x100] sm:$0xff]
        %v2764 = vld [vmem:[#allocation20 + $0x108] sm:$0xff]
        %v2765 = vld [vmem:[#allocation20 + $0x110] sm:$0xff]
        %v2766 = vld [vmem:[#allocation20 + $0x118] sm:$0xff]
        %v2767 = vld [vmem:[#allocation21] sm:$0x3f]
        %v2769 = vlaneseq
        %v2770 = vshrl.u32 %v2769, 7
        %v2771 = vsub.s32 0, %v2770
        %v2772 = vrot.slane %v2767, %v2771
        %v2773 = vlaneseq
        %v2774 = vshrl.u32 %v2773, 7
        %v2775 = vsub.s32 1, %v2774
        %v2776 = vrot.slane %v2767, %v2775
        %v2777 = vlaneseq
        %v2778 = vshrl.u32 %v2777, 7
        %v2779 = vsub.s32 2, %v2778
        %v2780 = vrot.slane %v2767, %v2779
        %v2781 = vlaneseq
        %v2782 = vshrl.u32 %v2781, 7
        %v2783 = vsub.s32 3, %v2782
        %v2784 = vrot.slane %v2767, %v2783
        %v2785 = vlaneseq
        %v2786 = vshrl.u32 %v2785, 7
        %v2787 = vsub.s32 4, %v2786
        %v2788 = vrot.slane %v2767, %v2787
        %v2789 = vlaneseq
        %v2790 = vshrl.u32 %v2789, 7
        %v2791 = vsub.s32 5, %v2790
        %v2792 = vrot.slane %v2767, %v2791
        %v2835 = vunpack.c.l.b16 %v2731
        %v2836 = vunpack.c.h.b16 %v2731
        %v2837 = vunpack.c.l.b16 %v2732
        %v2838 = vunpack.c.h.b16 %v2732
        %v2839 = vunpack.c.l.b16 %v2733
        %v2840 = vunpack.c.h.b16 %v2733
        %v2841 = vunpack.c.l.b16 %v2734
        %v2842 = vunpack.c.h.b16 %v2734
        %v2843 = vunpack.c.l.b16 %v2735
        %v2844 = vunpack.c.h.b16 %v2735
        %v2845 = vunpack.c.l.b16 %v2736
        %v2846 = vunpack.c.h.b16 %v2736
        %v2847 = vunpack.c.l.b16 %v2737
        %v2848 = vunpack.c.h.b16 %v2737
        %v2849 = vunpack.c.l.b16 %v2738
        %v2850 = vunpack.c.h.b16 %v2738
        %v2851 = vunpack.c.l.b16 %v2739
        %v2852 = vunpack.c.h.b16 %v2739
        %v2853 = vunpack.c.l.b16 %v2740
        %v2854 = vunpack.c.h.b16 %v2740
        %v2855 = vunpack.c.l.b16 %v2741
        %v2856 = vunpack.c.h.b16 %v2741
        %v2857 = vunpack.c.l.b16 %v2742
        %v2858 = vunpack.c.h.b16 %v2742
        %v2859 = vunpack.c.l.b16 %v2743
        %v2860 = vunpack.c.h.b16 %v2743
        %v2861 = vunpack.c.l.b16 %v2744
        %v2862 = vunpack.c.h.b16 %v2744
        %v2863 = vunpack.c.l.b16 %v2745
        %v2864 = vunpack.c.h.b16 %v2745
        %v2865 = vunpack.c.l.b16 %v2746
        %v2866 = vunpack.c.h.b16 %v2746
        %v2867 = vunpack.c.l.b16 %v2747
        %v2868 = vunpack.c.h.b16 %v2747
        %v2869 = vunpack.c.l.b16 %v2748
        %v2870 = vunpack.c.h.b16 %v2748
        %v2871 = vunpack.c.l.b16 %v2749
        %v2872 = vunpack.c.h.b16 %v2749
        %v2873 = vunpack.c.l.b16 %v2750
        %v2874 = vunpack.c.h.b16 %v2750
        %v2875 = vunpack.c.l.b16 %v2751
        %v2876 = vunpack.c.h.b16 %v2751
        %v2877 = vunpack.c.l.b16 %v2752
        %v2878 = vunpack.c.h.b16 %v2752
        %v2879 = vunpack.c.l.b16 %v2753
        %v2880 = vunpack.c.h.b16 %v2753
        %v2881 = vunpack.c.l.b16 %v2754
        %v2882 = vunpack.c.h.b16 %v2754
        %v2883 = vunpack.c.l.b16 %v2755
        %v2884 = vunpack.c.h.b16 %v2755
        %v2885 = vunpack.c.l.b16 %v2756
        %v2886 = vunpack.c.h.b16 %v2756
        %v2887 = vunpack.c.l.b16 %v2757
        %v2888 = vunpack.c.h.b16 %v2757
        %v2889 = vunpack.c.l.b16 %v2758
        %v2890 = vunpack.c.h.b16 %v2758
        %v2891 = vunpack.c.l.b16 %v2759
        %v2892 = vunpack.c.h.b16 %v2759
        %v2893 = vunpack.c.l.b16 %v2760
        %v2894 = vunpack.c.h.b16 %v2760
        %v2895 = vunpack.c.l.b16 %v2761
        %v2896 = vunpack.c.h.b16 %v2761
        %v2897 = vunpack.c.l.b16 %v2762
        %v2898 = vunpack.c.h.b16 %v2762
        %v2899 = vunpack.c.l.b16 %v2763
        %v2900 = vunpack.c.h.b16 %v2763
        %v2901 = vunpack.c.l.b16 %v2764
        %v2902 = vunpack.c.h.b16 %v2764
        %v2903 = vunpack.c.l.b16 %v2765
        %v2904 = vunpack.c.h.b16 %v2765
        %v2905 = vunpack.c.l.b16 %v2766
        %v2906 = vunpack.c.h.b16 %v2766
        %v2907 = vpack.c.b16 %v2841, %v2835
        %v2908 = vpack.c.b16 %v2842, %v2836
        %v2909 = vpack.c.b16 %v2843, %v2837
        %v2910 = vpack.c.b16 %v2844, %v2838
        %v2911 = vpack.c.b16 %v2845, %v2839
        %v2912 = vpack.c.b16 %v2846, %v2840
        %v2913 = vpack.c.b16 %v2853, %v2847
        %v2914 = vpack.c.b16 %v2854, %v2848
        %v2915 = vpack.c.b16 %v2855, %v2849
        %v2916 = vpack.c.b16 %v2856, %v2850
        %v2917 = vpack.c.b16 %v2857, %v2851
        %v2918 = vpack.c.b16 %v2858, %v2852
        %v2919 = vpack.c.b16 %v2865, %v2859
        %v2920 = vpack.c.b16 %v2866, %v2860
        %v2921 = vpack.c.b16 %v2867, %v2861
        %v2922 = vpack.c.b16 %v2868, %v2862
        %v2923 = vpack.c.b16 %v2869, %v2863
        %v2924 = vpack.c.b16 %v2870, %v2864
        %v2925 = vpack.c.b16 %v2877, %v2871
        %v2926 = vpack.c.b16 %v2878, %v2872
        %v2927 = vpack.c.b16 %v2879, %v2873
        %v2928 = vpack.c.b16 %v2880, %v2874
        %v2929 = vpack.c.b16 %v2881, %v2875
        %v2930 = vpack.c.b16 %v2882, %v2876
        %v2931 = vpack.c.b16 %v2889, %v2883
        %v2932 = vpack.c.b16 %v2890, %v2884
        %v2933 = vpack.c.b16 %v2891, %v2885
        %v2934 = vpack.c.b16 %v2892, %v2886
        %v2935 = vpack.c.b16 %v2893, %v2887
        %v2936 = vpack.c.b16 %v2894, %v2888
        %v2937 = vpack.c.b16 %v2901, %v2895
        %v2938 = vpack.c.b16 %v2902, %v2896
        %v2939 = vpack.c.b16 %v2903, %v2897
        %v2940 = vpack.c.b16 %v2904, %v2898
        %v2941 = vpack.c.b16 %v2905, %v2899
        %v2942 = vpack.c.b16 %v2906, %v2900
        %v2980 = vsel %vm1491, %v2730, 0
        %2982 = vmatprep.subr.bf16.mxu0 0
        %2983 = vmatpush1.bf16.msra.mxu0 0
        %2984 = vmatprep.subr.bf16.mxu0 0
        %2985 = vmatpush1.bf16.msra.mxu0 0
        %2986 = vmatprep.subr.bf16.mxu0 %v2938
        %2987 = vmatpush1.bf16.msra.mxu0 %v2937
        %2988 = vmatprep.subr.bf16.mxu0 %v2932
        %2989 = vmatpush1.bf16.msra.mxu0 %v2931
        %2990 = vmatprep.subr.bf16.mxu0 %v2926
        %2991 = vmatpush1.bf16.msra.mxu0 %v2925
        %2992 = vmatprep.subr.bf16.mxu0 %v2920
        %2993 = vmatpush1.bf16.msra.mxu0 %v2919
        %2994 = vmatprep.subr.bf16.mxu0 %v2914
        %2995 = vmatpush1.bf16.msra.mxu0 %v2913
        %2996 = vmatprep.subr.bf16.mxu0 %v2908
        %2997 = vmatpush1.bf16.msra.mxu0 %v2907
        %2998 = vmatprep.subr.bf16.mxu0 0
        %2999 = vmatpush2.bf16.msra.mxu0 0
        %3000 = vmatprep.subr.bf16.mxu0 0
        %3001 = vmatpush2.bf16.msra.mxu0 0
        %3002 = vmatprep.subr.bf16.mxu0 0
        %3003 = vmatpush2.bf16.msra.mxu0 0
        %3004 = vmatprep.subr.bf16.mxu0 0
        %3005 = vmatpush2.bf16.msra.mxu0 0
        %3006 = vmatprep.subr.bf16.mxu0 0
        %3007 = vmatpush2.bf16.msra.mxu0 0
        %3008 = vmatprep.subr.bf16.mxu0 0
        %3009 = vmatpush2.bf16.msra.mxu0 0
        %3010 = vmatprep.subr.bf16.mxu0 0
        %3011 = vmatpush2.bf16.msra.mxu0 0
        %3012 = vmatprep.subr.bf16.mxu0 0
        %3013 = vmatpush2.bf16.msra.mxu0 0
        %3014 = vmatprep.mubr.bf16.mxu0 0
        %3015 = vmatmul.mubr.bf16.gmra.mxu0 %v2980
        %v3016 = vpop.f32.mrf.mxu0
        %v3017 = vadd.f32 %v2772, %v3016
        %v3018 = vpop.f32.mrf.mxu0
        %v3019 = vadd.f32 %v2776, %v3018
        %v3020 = vpop.f32.mrf.mxu0
        %v3021 = vadd.f32 %v2772, %v3020
        %v3022 = vpop.f32.mrf.mxu0
        %v3023 = vadd.f32 %v2776, %v3022
        %3024 = vdwg.mxu0
        %3025 = vmatprep.subr.bf16.mxu0 0
        %3026 = vmatpush1.bf16.msra.mxu0 0
        %3027 = vmatprep.subr.bf16.mxu0 0
        %3028 = vmatpush1.bf16.msra.mxu0 0
        %3029 = vmatprep.subr.bf16.mxu0 %v2940
        %3030 = vmatpush1.bf16.msra.mxu0 %v2939
        %3031 = vmatprep.subr.bf16.mxu0 %v2934
        %3032 = vmatpush1.bf16.msra.mxu0 %v2933
        %3033 = vmatprep.subr.bf16.mxu0 %v2928
        %3034 = vmatpush1.bf16.msra.mxu0 %v2927
        %3035 = vmatprep.subr.bf16.mxu0 %v2922
        %3036 = vmatpush1.bf16.msra.mxu0 %v2921
        %3037 = vmatprep.subr.bf16.mxu0 %v2916
        %3038 = vmatpush1.bf16.msra.mxu0 %v2915
        %3039 = vmatprep.subr.bf16.mxu0 %v2910
        %3040 = vmatpush1.bf16.msra.mxu0 %v2909
        %3041 = vmatprep.subr.bf16.mxu0 0
        %3042 = vmatpush2.bf16.msra.mxu0 0
        %3043 = vmatprep.subr.bf16.mxu0 0
        %3044 = vmatpush2.bf16.msra.mxu0 0
        %3045 = vmatprep.subr.bf16.mxu0 0
        %3046 = vmatpush2.bf16.msra.mxu0 0
        %3047 = vmatprep.subr.bf16.mxu0 0
        %3048 = vmatpush2.bf16.msra.mxu0 0
        %3049 = vmatprep.subr.bf16.mxu0 0
        %3050 = vmatpush2.bf16.msra.mxu0 0
        %3051 = vmatprep.subr.bf16.mxu0 0
        %3052 = vmatpush2.bf16.msra.mxu0 0
        %3053 = vmatprep.subr.bf16.mxu0 0
        %3054 = vmatpush2.bf16.msra.mxu0 0
        %3055 = vmatprep.subr.bf16.mxu0 0
        %3056 = vmatpush2.bf16.msra.mxu0 0
        %3057 = vmatprep.mubr.bf16.mxu0 0
        %3058 = vmatmul.mubr.bf16.gmra.mxu0 %v2980
        %v3059 = vpop.f32.mrf.mxu0
        %v3060 = vadd.f32 %v2780, %v3059
        %v3061 = vpop.f32.mrf.mxu0
        %v3062 = vadd.f32 %v2784, %v3061
        %v3063 = vpop.f32.mrf.mxu0
        %v3064 = vadd.f32 %v2780, %v3063
        %v3065 = vpop.f32.mrf.mxu0
        %v3066 = vadd.f32 %v2784, %v3065
        %3067 = vdwg.mxu0
        %3068 = vmatprep.subr.bf16.mxu0 0
        %3069 = vmatpush1.bf16.msra.mxu0 0
        %3070 = vmatprep.subr.bf16.mxu0 0
        %3071 = vmatpush1.bf16.msra.mxu0 0
        %3072 = vmatprep.subr.bf16.mxu0 %v2942
        %3073 = vmatpush1.bf16.msra.mxu0 %v2941
        %3074 = vmatprep.subr.bf16.mxu0 %v2936
        %3075 = vmatpush1.bf16.msra.mxu0 %v2935
        %3076 = vmatprep.subr.bf16.mxu0 %v2930
        %3077 = vmatpush1.bf16.msra.mxu0 %v2929
        %3078 = vmatprep.subr.bf16.mxu0 %v2924
        %3079 = vmatpush1.bf16.msra.mxu0 %v2923
        %3080 = vmatprep.subr.bf16.mxu0 %v2918
        %3081 = vmatpush1.bf16.msra.mxu0 %v2917
        %3082 = vmatprep.subr.bf16.mxu0 %v2912
        %3083 = vmatpush1.bf16.msra.mxu0 %v2911
        %3084 = vmatprep.subr.bf16.mxu0 0
        %3085 = vmatpush2.bf16.msra.mxu0 0
        %3086 = vmatprep.subr.bf16.mxu0 0
        %3087 = vmatpush2.bf16.msra.mxu0 0
        %3088 = vmatprep.subr.bf16.mxu0 0
        %3089 = vmatpush2.bf16.msra.mxu0 0
        %3090 = vmatprep.subr.bf16.mxu0 0
        %3091 = vmatpush2.bf16.msra.mxu0 0
        %3092 = vmatprep.subr.bf16.mxu0 0
        %3093 = vmatpush2.bf16.msra.mxu0 0
        %3094 = vmatprep.subr.bf16.mxu0 0
        %3095 = vmatpush2.bf16.msra.mxu0 0
        %3096 = vmatprep.subr.bf16.mxu0 0
        %3097 = vmatpush2.bf16.msra.mxu0 0
        %3098 = vmatprep.subr.bf16.mxu0 0
        %3099 = vmatpush2.bf16.msra.mxu0 0
        %3100 = vmatprep.mubr.bf16.mxu0 0
        %3101 = vmatmul.mubr.bf16.gmra.mxu0 %v2980
        %v3102 = vpop.f32.mrf.mxu0
        %v3103 = vadd.f32 %v2788, %v3102
        %v3104 = vpop.f32.mrf.mxu0
        %v3105 = vadd.f32 %v2792, %v3104
        %v3106 = vpop.f32.mrf.mxu0
        %v3107 = vadd.f32 %v2788, %v3106
        %v3108 = vpop.f32.mrf.mxu0
        %v3109 = vadd.f32 %v2792, %v3108
        %3110 = vdwg.mxu0
        %v3111 = vpack.c.bf16 %v3021, %v3017
        %v3112 = vpack.c.bf16 %v3023, %v3019
        %v3113 = vpack.c.bf16 %v3064, %v3060
        %v3114 = vpack.c.bf16 %v3066, %v3062
        %v3115 = vpack.c.bf16 %v3107, %v3103
        %v3116 = vpack.c.bf16 %v3109, %v3105
        %3117 = vmatprep.subr.bf16.mxu0 0
        %3118 = vmatpush1.bf16.xpose.msra.mxu0 0
        %3119 = vmatprep.subr.bf16.mxu0 0
        %3120 = vmatpush1.bf16.xpose.msra.mxu0 0
        %3121 = vmatprep.subr.bf16.mxu0 0
        %3122 = vmatpush1.bf16.xpose.msra.mxu0 0
        %3123 = vmatprep.subr.bf16.mxu0 0
        %3124 = vmatpush1.bf16.xpose.msra.mxu0 0
        %3125 = vmatprep.subr.bf16.mxu0 0
        %3126 = vmatpush1.bf16.xpose.msra.mxu0 0
        %3127 = vmatprep.subr.bf16.mxu0 0
        %3128 = vmatpush1.bf16.xpose.msra.mxu0 0
        %3129 = vmatprep.subr.bf16.mxu0 0
        %3130 = vmatpush1.bf16.xpose.msra.mxu0 0
        %3131 = vmatprep.subr.bf16.mxu0 0
        %3132 = vmatpush1.bf16.xpose.msra.mxu0 %v3113
        %3133 = vmatprep.subr.bf16.mxu0 0
        %3134 = vmatpush2.bf16.xpose.msra.mxu0 0
        %3135 = vmatprep.subr.bf16.mxu0 0
        %3136 = vmatpush2.bf16.xpose.msra.mxu0 0
        %3137 = vmatprep.subr.bf16.mxu0 0
        %3138 = vmatpush2.bf16.xpose.msra.mxu0 0
        %3139 = vmatprep.subr.bf16.mxu0 0
        %3140 = vmatpush2.bf16.xpose.msra.mxu0 0
        %3141 = vmatprep.subr.bf16.mxu0 0
        %3142 = vmatpush2.bf16.xpose.msra.mxu0 0
        %3143 = vmatprep.subr.bf16.mxu0 0
        %3144 = vmatpush2.bf16.xpose.msra.mxu0 0
        %3145 = vmatprep.subr.bf16.mxu0 0
        %3146 = vmatpush2.bf16.xpose.msra.mxu0 0
        %3147 = vmatprep.subr.bf16.mxu0 0
        %3148 = vmatpush2.bf16.xpose.msra.mxu0 0
        %3149 = vmatprep.mubr.bf16.mxu0 0
        %3150 = vmatmul.mubr.bf16.gmra.mxu0 %v3111
        %v3151 = vpop.f32.mrf.mxu0
        %v3152 = vadd.f32 %v2726, %v3151
        %v3153 = vpop.f32.mrf.mxu0
        %v3154 = vpop.f32.mrf.mxu0
        %v3155 = vadd.f32 %v2727, %v3154
        %v3156 = vpop.f32.mrf.mxu0
        %3157 = vdwg.mxu0
        %v3158 = vsel %vm1326, %v3152, -inf
        %3159 = vmax.xlane.f32.xlu0 %v3158
        %v3160 = vpop.xlane.xlu0 %3159
        %v3161 = vsel %vm1326, %v3155, -inf
        %3162 = vmax.xlane.f32.xlu0 %v3161
        %v3163 = vpop.xlane.xlu0 %3162
        %v3164 = vmax.f32 %v3160, 0.0
        %v3165 = vmax.f32 %v3163, 0.0
        %v3166 = vsub.f32 %v3152, %v3164
        %v3167 = vsub.f32 %v3155, %v3165
        %v3168 = vmul.f32 %v3166, 1.442695
        %v3169 = vpow.pop %v3168
        %v3170 = vmul.f32 %v3167, 1.442695
        %v3171 = vpow.pop %v3170
        %v3172 = vsel %vm1326, %v3169, 0.0
        %3173 = vadd.xlane.f32.xlu0 %v3172
        %v3174 = vpop.xlane.xlu0 %3173
        %v3175 = vsel %vm1326, %v3171, 0.0
        %3176 = vadd.xlane.f32.xlu0 %v3175
        %v3177 = vpop.xlane.xlu0 %3176
        %v3178 = vsub.f32 0.0, %v3164
        %v3179 = vsub.f32 0.0, %v3165
        %v3180 = vmul.f32 %v3178, 1.442695
        %v3181 = vpow.pop %v3180
        %v3182 = vmul.f32 %v3179, 1.442695
        %v3183 = vpow.pop %v3182
        %v3184 = vadd.f32 %v3174, %v3181
        %v3185 = vadd.f32 %v3177, %v3183
        %v3186 = vrcp.pop %v3184
        %v3187 = vrcp.pop %v3185
        %v3188 = vmul.f32 %v3169, %v3186
        %v3189 = vmul.f32 %v3171, %v3187
        %v3190 = vpack.c.bf16 %v3189, %v3188
        %3191 = vmatprep.subr.bf16.mxu0 0
        %3192 = vmatpush1.bf16.xpose.msra.mxu0 0
        %3193 = vmatprep.subr.bf16.mxu0 0
        %3194 = vmatpush1.bf16.xpose.msra.mxu0 0
        %3195 = vmatprep.subr.bf16.mxu0 0
        %3196 = vmatpush1.bf16.xpose.msra.mxu0 0
        %3197 = vmatprep.subr.bf16.mxu0 0
        %3198 = vmatpush1.bf16.xpose.msra.mxu0 0
        %3199 = vmatprep.subr.bf16.mxu0 0
        %3200 = vmatpush1.bf16.xpose.msra.mxu0 0
        %3201 = vmatprep.subr.bf16.mxu0 0
        %3202 = vmatpush1.bf16.xpose.msra.mxu0 0
        %3203 = vmatprep.subr.bf16.mxu0 0
        %3204 = vmatpush1.bf16.xpose.msra.mxu0 0
        %3205 = vmatprep.subr.bf16.mxu0 0
        %3206 = vmatpush1.bf16.xpose.msra.mxu0 %v3114
        %3207 = vmatprep.subr.bf16.mxu0 0
        %3208 = vmatpush2.bf16.xpose.msra.mxu0 0
        %3209 = vmatprep.subr.bf16.mxu0 0
        %3210 = vmatpush2.bf16.xpose.msra.mxu0 0
        %3211 = vmatprep.subr.bf16.mxu0 0
        %3212 = vmatpush2.bf16.xpose.msra.mxu0 0
        %3213 = vmatprep.subr.bf16.mxu0 0
        %3214 = vmatpush2.bf16.xpose.msra.mxu0 0
        %3215 = vmatprep.subr.bf16.mxu0 0
        %3216 = vmatpush2.bf16.xpose.msra.mxu0 0
        %3217 = vmatprep.subr.bf16.mxu0 0
        %3218 = vmatpush2.bf16.xpose.msra.mxu0 0
        %3219 = vmatprep.subr.bf16.mxu0 0
        %3220 = vmatpush2.bf16.xpose.msra.mxu0 0
        %3221 = vmatprep.subr.bf16.mxu0 0
        %3222 = vmatpush2.bf16.xpose.msra.mxu0 0
        %3223 = vmatprep.mubr.bf16.mxu0 0
        %3224 = vmatmul.mubr.bf16.gmra.mxu0 %v3112
        %v3225 = vpop.f32.mrf.mxu0
        %v3226 = vadd.f32 %v2728, %v3225
        %v3227 = vpop.f32.mrf.mxu0
        %v3228 = vpop.f32.mrf.mxu0
        %v3229 = vadd.f32 %v2729, %v3228
        %v3230 = vpop.f32.mrf.mxu0
        %3231 = vdwg.mxu0
        %v3232 = vsel %vm1326, %v3226, -inf
        %3233 = vmax.xlane.f32.xlu0 %v3232
        %v3234 = vpop.xlane.xlu0 %3233
        %v3235 = vsel %vm1326, %v3229, -inf
        %3236 = vmax.xlane.f32.xlu0 %v3235
        %v3237 = vpop.xlane.xlu0 %3236
        %v3238 = vmax.f32 %v3234, 0.0
        %v3239 = vmax.f32 %v3237, 0.0
        %v3240 = vsub.f32 %v3226, %v3238
        %v3241 = vsub.f32 %v3229, %v3239
        %v3242 = vmul.f32 %v3240, 1.442695
        %v3243 = vpow.pop %v3242
        %v3244 = vmul.f32 %v3241, 1.442695
        %v3245 = vpow.pop %v3244
        %v3246 = vsel %vm1326, %v3243, 0.0
        %3247 = vadd.xlane.f32.xlu0 %v3246
        %v3248 = vpop.xlane.xlu0 %3247
        %v3249 = vsel %vm1326, %v3245, 0.0
        %3250 = vadd.xlane.f32.xlu0 %v3249
        %v3251 = vpop.xlane.xlu0 %3250
        %v3252 = vsub.f32 0.0, %v3238
        %v3253 = vsub.f32 0.0, %v3239
        %v3254 = vmul.f32 %v3252, 1.442695
        %v3255 = vpow.pop %v3254
        %v3256 = vmul.f32 %v3253, 1.442695
        %v3257 = vpow.pop %v3256
        %v3258 = vadd.f32 %v3248, %v3255
        %v3259 = vadd.f32 %v3251, %v3257
        %v3260 = vrcp.pop %v3258
        %v3261 = vrcp.pop %v3259
        %v3262 = vmul.f32 %v3243, %v3260
        %v3263 = vmul.f32 %v3245, %v3261
        %v3264 = vpack.c.bf16 %v3263, %v3262
        %v3266 = vsel %vm1326, %v3264, 0
        %3268 = vmatprep.subr.bf16.mxu0 0
        %3269 = vmatpush1.bf16.msra.mxu0 0
        %3270 = vmatprep.subr.bf16.mxu0 0
        %3271 = vmatpush1.bf16.msra.mxu0 0
        %3272 = vmatprep.subr.bf16.mxu0 0
        %3273 = vmatpush1.bf16.msra.mxu0 0
        %3274 = vmatprep.subr.bf16.mxu0 0
        %3275 = vmatpush1.bf16.msra.mxu0 0
        %3276 = vmatprep.subr.bf16.mxu0 0
        %3277 = vmatpush1.bf16.msra.mxu0 0
        %3278 = vmatprep.subr.bf16.mxu0 0
        %3279 = vmatpush1.bf16.msra.mxu0 0
        %3280 = vmatprep.subr.bf16.mxu0 0
        %3281 = vmatpush1.bf16.msra.mxu0 0
        %3282 = vmatprep.subr.bf16.mxu0 0
        %3283 = vmatpush1.bf16.msra.mxu0 %v3116
        %3284 = vmatprep.subr.bf16.mxu0 0
        %3285 = vmatpush2.bf16.msra.mxu0 0
        %3286 = vmatprep.subr.bf16.mxu0 0
        %3287 = vmatpush2.bf16.msra.mxu0 0
        %3288 = vmatprep.subr.bf16.mxu0 0
        %3289 = vmatpush2.bf16.msra.mxu0 0
        %3290 = vmatprep.subr.bf16.mxu0 0
        %3291 = vmatpush2.bf16.msra.mxu0 0
        %3292 = vmatprep.subr.bf16.mxu0 0
        %3293 = vmatpush2.bf16.msra.mxu0 0
        %3294 = vmatprep.subr.bf16.mxu0 0
        %3295 = vmatpush2.bf16.msra.mxu0 0
        %3296 = vmatprep.subr.bf16.mxu0 0
        %3297 = vmatpush2.bf16.msra.mxu0 0
        %3298 = vmatprep.subr.bf16.mxu0 0
        %3299 = vmatpush2.bf16.msra.mxu0 0
        %3300 = vmatprep.mubr.bf16.mxu0 0
        %3301 = vmatmul.mubr.bf16.gmra.mxu0 %v3266
        %v3302 = vpop.f32.mrf.mxu0
        %v3303 = vadd.f32 0.0, %v3302
        %v3304 = vpop.f32.mrf.mxu0
        %v3305 = vpop.f32.mrf.mxu0
        %v3306 = vadd.f32 0.0, %v3305
        %v3307 = vpop.f32.mrf.mxu0
        %3308 = vdwg.mxu0
        %v3310 = vsel %vm1326, %v3190, 0
        %3312 = vmatprep.subr.bf16.mxu0 0
        %3313 = vmatpush1.bf16.msra.mxu0 0
        %3314 = vmatprep.subr.bf16.mxu0 0
        %3315 = vmatpush1.bf16.msra.mxu0 0
        %3316 = vmatprep.subr.bf16.mxu0 0
        %3317 = vmatpush1.bf16.msra.mxu0 0
        %3318 = vmatprep.subr.bf16.mxu0 0
        %3319 = vmatpush1.bf16.msra.mxu0 0
        %3320 = vmatprep.subr.bf16.mxu0 0
        %3321 = vmatpush1.bf16.msra.mxu0 0
        %3322 = vmatprep.subr.bf16.mxu0 0
        %3323 = vmatpush1.bf16.msra.mxu0 0
        %3324 = vmatprep.subr.bf16.mxu0 0
        %3325 = vmatpush1.bf16.msra.mxu0 0
        %3326 = vmatprep.subr.bf16.mxu0 0
        %3327 = vmatpush1.bf16.msra.mxu0 %v3115
        %3328 = vmatprep.subr.bf16.mxu0 0
        %3329 = vmatpush2.bf16.msra.mxu0 0
        %3330 = vmatprep.subr.bf16.mxu0 0
        %3331 = vmatpush2.bf16.msra.mxu0 0
        %3332 = vmatprep.subr.bf16.mxu0 0
        %3333 = vmatpush2.bf16.msra.mxu0 0
        %3334 = vmatprep.subr.bf16.mxu0 0
        %3335 = vmatpush2.bf16.msra.mxu0 0
        %3336 = vmatprep.subr.bf16.mxu0 0
        %3337 = vmatpush2.bf16.msra.mxu0 0
        %3338 = vmatprep.subr.bf16.mxu0 0
        %3339 = vmatpush2.bf16.msra.mxu0 0
        %3340 = vmatprep.subr.bf16.mxu0 0
        %3341 = vmatpush2.bf16.msra.mxu0 0
        %3342 = vmatprep.subr.bf16.mxu0 0
        %3343 = vmatpush2.bf16.msra.mxu0 0
        %3344 = vmatprep.mubr.bf16.mxu0 0
        %3345 = vmatmul.mubr.bf16.gmra.mxu0 %v3310
        %v3346 = vpop.f32.mrf.mxu0
        %v3347 = vadd.f32 %v3303, %v3346
        %v3348 = vpop.f32.mrf.mxu0
        %v3349 = vpop.f32.mrf.mxu0
        %v3350 = vadd.f32 %v3306, %v3349
        %v3351 = vpop.f32.mrf.mxu0
        %3352 = vdwg.mxu0
        %v3353 = vld [vmem:[#allocation23] sm:$0x1]
        %v3355 = vlaneseq
        %v3356 = vshrl.u32 %v3355, 7
        %v3357 = vsub.s32 0, %v3356
        %v3358 = vrot.slane %v3353, %v3357
        %v3360 = vadd.f32 %v3347, %v3358
        %v3361 = vadd.f32 %v3350, %v3358
        %v3362 = vstv %s1899
        %v3363 = vmul.f32 %v3362, %v3360
        %v3364 = vmul.f32 %v3362, %v3361
        %v3365 = vadd.f32 %v2724, %v3363
        %v3366 = vadd.f32 %v2725, %v3364
        %v3367 = vpack.c.bf16 %v3366, %v3365
        %v3368 = vld [vmem:[%s43] sm:$0xf]
        %v3369 = vld [vmem:[%s43 + $0x4] sm:$0xf]
        %v3370 = vld [vmem:[%s43 + $0x8] sm:$0xf]
        %v3371 = vld [vmem:[%s43 + $0xc] sm:$0xf]
        %v3372 = vld [vmem:[%s43 + $0x10] sm:$0xf]
        %v3373 = vld [vmem:[%s43 + $0x14] sm:$0xf]
        %v3374 = vld [vmem:[%s43 + $0x18] sm:$0xf]
        %v3375 = vld [vmem:[%s43 + $0x1c] sm:$0xf]
        %v3376 = vld [vmem:[%s43 + $0x20] sm:$0xf]
        %v3377 = vld [vmem:[%s43 + $0x24] sm:$0xf]
        %v3378 = vld [vmem:[%s43 + $0x28] sm:$0xf]
        %v3379 = vld [vmem:[%s43 + $0x2c] sm:$0xf]
        %v3380 = vld [vmem:[%s45] sm:$0x1]
        %v3382 = vlaneseq
        %v3383 = vshrl.u32 %v3382, 7
        %v3384 = vsub.s32 0, %v3383
        %v3385 = vrot.slane %v3380, %v3384
        %v3399 = vunpack.c.l.b16 %v3368
        %v3400 = vunpack.c.l.b16 %v3369
        %v3401 = vunpack.c.l.b16 %v3370
        %v3402 = vunpack.c.l.b16 %v3371
        %v3403 = vunpack.c.l.b16 %v3372
        %v3404 = vunpack.c.l.b16 %v3373
        %v3405 = vunpack.c.l.b16 %v3374
        %v3406 = vunpack.c.l.b16 %v3375
        %v3407 = vunpack.c.l.b16 %v3376
        %v3408 = vunpack.c.l.b16 %v3377
        %v3409 = vunpack.c.l.b16 %v3378
        %v3410 = vunpack.c.l.b16 %v3379
        %v3411 = vpack.c.b16 %v3400, %v3399
        %v3412 = vpack.c.b16 %v3402, %v3401
        %v3413 = vpack.c.b16 %v3404, %v3403
        %v3414 = vpack.c.b16 %v3406, %v3405
        %v3415 = vpack.c.b16 %v3408, %v3407
        %v3416 = vpack.c.b16 %v3410, %v3409
        %v3424 = vsel %vm1491, %v3367, 0
        %3426 = vmatprep.subr.bf16.mxu0 0
        %3427 = vmatpush1.bf16.msra.mxu0 0
        %3428 = vmatprep.subr.bf16.mxu0 0
        %3429 = vmatpush1.bf16.msra.mxu0 0
        %3430 = vmatprep.subr.bf16.mxu0 0
        %3431 = vmatpush1.bf16.msra.mxu0 %v3416
        %3432 = vmatprep.subr.bf16.mxu0 0
        %3433 = vmatpush1.bf16.msra.mxu0 %v3415
        %3434 = vmatprep.subr.bf16.mxu0 0
        %3435 = vmatpush1.bf16.msra.mxu0 %v3414
        %3436 = vmatprep.subr.bf16.mxu0 0
        %3437 = vmatpush1.bf16.msra.mxu0 %v3413
        %3438 = vmatprep.subr.bf16.mxu0 0
        %3439 = vmatpush1.bf16.msra.mxu0 %v3412
        %3440 = vmatprep.subr.bf16.mxu0 0
        %3441 = vmatpush1.bf16.msra.mxu0 %v3411
        %3442 = vmatprep.subr.bf16.mxu0 0
        %3443 = vmatpush2.bf16.msra.mxu0 0
        %3444 = vmatprep.subr.bf16.mxu0 0
        %3445 = vmatpush2.bf16.msra.mxu0 0
        %3446 = vmatprep.subr.bf16.mxu0 0
        %3447 = vmatpush2.bf16.msra.mxu0 0
        %3448 = vmatprep.subr.bf16.mxu0 0
        %3449 = vmatpush2.bf16.msra.mxu0 0
        %3450 = vmatprep.subr.bf16.mxu0 0
        %3451 = vmatpush2.bf16.msra.mxu0 0
        %3452 = vmatprep.subr.bf16.mxu0 0
        %3453 = vmatpush2.bf16.msra.mxu0 0
        %3454 = vmatprep.subr.bf16.mxu0 0
        %3455 = vmatpush2.bf16.msra.mxu0 0
        %3456 = vmatprep.subr.bf16.mxu0 0
        %3457 = vmatpush2.bf16.msra.mxu0 0
        %3458 = vmatprep.mubr.bf16.mxu0 0
        %3459 = vmatmul.mubr.bf16.gmra.mxu0 %v3424
        %v3460 = vpop.f32.mrf.mxu0
        %v3461 = vadd.f32 %v3385, %v3460
        %v3462 = vpop.f32.mrf.mxu0
        %v3463 = vpop.f32.mrf.mxu0
        %v3464 = vadd.f32 %v3385, %v3463
        %v3465 = vpop.f32.mrf.mxu0
        %3466 = vdwg.mxu0
        %v3467 = vmax.f32 %v3461, 0.0
        %v3468 = vmax.f32 %v3464, 0.0
        %v3469 = vld [vmem:[%s47] sm:$0x1]
        %v3471 = vlaneseq
        %v3472 = vshrl.u32 %v3471, 7
        %v3473 = vsub.s32 0, %v3472
        %v3474 = vrot.slane %v3469, %v3473
        %v3476 = vmul.f32 %v3467, %v3474
        %v3477 = vmul.f32 %v3468, %v3474
        %v3478 = vld [vmem:[%s49] sm:$0x1]
        %v3480 = vlaneseq
        %v3481 = vshrl.u32 %v3480, 7
        %v3482 = vsub.s32 0, %v3481
        %v3483 = vrot.slane %v3478, %v3482
        %v3485 = vadd.f32 %v3476, %v3483
        %v3486 = vadd.f32 %v3477, %v3483
        %v3487 = vpack.c.bf16 %v3486, %v3485
        %v3488 = vld [vmem:[%s51] sm:$0xf]
        %v3489 = vld [vmem:[%s51 + $0x4] sm:$0xf]
        %v3490 = vld [vmem:[%s51 + $0x8] sm:$0xf]
        %v3491 = vld [vmem:[%s51 + $0xc] sm:$0xf]
        %v3492 = vld [vmem:[%s51 + $0x10] sm:$0xf]
        %v3493 = vld [vmem:[%s51 + $0x14] sm:$0xf]
        %v3494 = vld [vmem:[%s51 + $0x18] sm:$0xf]
        %v3495 = vld [vmem:[%s51 + $0x1c] sm:$0xf]
        %v3496 = vld [vmem:[%s51 + $0x20] sm:$0xf]
        %v3497 = vld [vmem:[%s51 + $0x24] sm:$0xf]
        %v3498 = vld [vmem:[%s51 + $0x28] sm:$0xf]
        %v3499 = vld [vmem:[%s51 + $0x2c] sm:$0xf]
        %v3500 = vld [vmem:[%s1146] sm:$0xf]
        %v3501 = vld [vmem:[%s1146 + $0x4] sm:$0xf]
        %v3502 = vld [vmem:[%s53] sm:$0xf]
        %v3503 = vld [vmem:[%s53 + $0x4] sm:$0xf]
        %v3504 = vld [vmem:[%s53 + $0x8] sm:$0x1]
        %v3507 = vunpack.c.l.b16 %v3500
        %v3508 = vunpack.c.l.b16 %v3501
        %v3509 = vpack.c.b16 %v3508, %v3507
        %v3513 = vunpack.c.l.b16 %v3502
        %v3514 = vunpack.c.l.b16 %v3503
        %v3515 = vunpack.c.l.b16 %v3504
        %v3516 = vpack.c.b16 %v3514, %v3513
        %v3517 = vpack.c.b16 %v3515, %v3515
        %vm3519 = vcmask 146432
        %v3521 = vsel %vm3519, %v3509, 0
        %vm3523 = vcmask 1040384
        %v3525 = vsel %vm3523, %v3517, 0
        %3527 = vmatprep.subr.bf16.mxu0 0
        %3528 = vmatpush1.bf16.msra.mxu0 0
        %3529 = vmatprep.subr.bf16.mxu0 0
        %3530 = vmatpush1.bf16.msra.mxu0 0
        %3531 = vmatprep.subr.bf16.mxu0 0
        %3532 = vmatpush1.bf16.msra.mxu0 0
        %3533 = vmatprep.subr.bf16.mxu0 0
        %3534 = vmatpush1.bf16.msra.mxu0 0
        %3535 = vmatprep.subr.bf16.mxu0 0
        %3536 = vmatpush1.bf16.msra.mxu0 0
        %3537 = vmatprep.subr.bf16.mxu0 0
        %3538 = vmatpush1.bf16.msra.mxu0 0
        %3539 = vmatprep.subr.bf16.mxu0 0
        %3540 = vmatpush1.bf16.msra.mxu0 %v3525
        %3541 = vmatprep.subr.bf16.mxu0 0
        %3542 = vmatpush1.bf16.msra.mxu0 %v3516
        %3543 = vmatprep.subr.bf16.mxu0 0
        %3544 = vmatpush2.bf16.msra.mxu0 0
        %3545 = vmatprep.subr.bf16.mxu0 0
        %3546 = vmatpush2.bf16.msra.mxu0 0
        %3547 = vmatprep.subr.bf16.mxu0 0
        %3548 = vmatpush2.bf16.msra.mxu0 0
        %3549 = vmatprep.subr.bf16.mxu0 0
        %3550 = vmatpush2.bf16.msra.mxu0 0
        %3551 = vmatprep.subr.bf16.mxu0 0
        %3552 = vmatpush2.bf16.msra.mxu0 0
        %3553 = vmatprep.subr.bf16.mxu0 0
        %3554 = vmatpush2.bf16.msra.mxu0 0
        %3555 = vmatprep.subr.bf16.mxu0 0
        %3556 = vmatpush2.bf16.msra.mxu0 0
        %3557 = vmatprep.subr.bf16.mxu0 0
        %3558 = vmatpush2.bf16.msra.mxu0 0
        %3559 = vmatprep.mubr.bf16.mxu0 0
        %3560 = vmatmul.mubr.bf16.gmra.mxu0 %v3521
        %v3561 = vpop.f32.mrf.mxu0
        %v3562 = vadd.f32 0.0, %v3561
        %v3563 = vpop.f32.mrf.mxu0
        %v3564 = vpop.f32.mrf.mxu0
        %v3565 = vadd.f32 0.0, %v3564
        %v3566 = vpop.f32.mrf.mxu0
        %3567 = vdwg.mxu0
        %v3580 = vunpack.c.l.b16 %v3488
        %v3581 = vunpack.c.l.b16 %v3489
        %v3582 = vunpack.c.l.b16 %v3490
        %v3583 = vunpack.c.l.b16 %v3491
        %v3584 = vunpack.c.l.b16 %v3492
        %v3585 = vunpack.c.l.b16 %v3493
        %v3586 = vunpack.c.l.b16 %v3494
        %v3587 = vunpack.c.l.b16 %v3495
        %v3588 = vunpack.c.l.b16 %v3496
        %v3589 = vunpack.c.l.b16 %v3497
        %v3590 = vunpack.c.l.b16 %v3498
        %v3591 = vunpack.c.l.b16 %v3499
        %v3592 = vpack.c.b16 %v3581, %v3580
        %v3593 = vpack.c.b16 %v3583, %v3582
        %v3594 = vpack.c.b16 %v3585, %v3584
        %v3595 = vpack.c.b16 %v3587, %v3586
        %v3596 = vpack.c.b16 %v3589, %v3588
        %v3597 = vpack.c.b16 %v3591, %v3590
        %v3605 = vsel %vm1491, %v3487, 0
        %3607 = vmatprep.subr.bf16.mxu0 0
        %3608 = vmatpush1.bf16.msra.mxu0 0
        %3609 = vmatprep.subr.bf16.mxu0 0
        %3610 = vmatpush1.bf16.msra.mxu0 0
        %3611 = vmatprep.subr.bf16.mxu0 0
        %3612 = vmatpush1.bf16.msra.mxu0 %v3597
        %3613 = vmatprep.subr.bf16.mxu0 0
        %3614 = vmatpush1.bf16.msra.mxu0 %v3596
        %3615 = vmatprep.subr.bf16.mxu0 0
        %3616 = vmatpush1.bf16.msra.mxu0 %v3595
        %3617 = vmatprep.subr.bf16.mxu0 0
        %3618 = vmatpush1.bf16.msra.mxu0 %v3594
        %3619 = vmatprep.subr.bf16.mxu0 0
        %3620 = vmatpush1.bf16.msra.mxu0 %v3593
        %3621 = vmatprep.subr.bf16.mxu0 0
        %3622 = vmatpush1.bf16.msra.mxu0 %v3592
        %3623 = vmatprep.subr.bf16.mxu0 0
        %3624 = vmatpush2.bf16.msra.mxu0 0
        %3625 = vmatprep.subr.bf16.mxu0 0
        %3626 = vmatpush2.bf16.msra.mxu0 0
        %3627 = vmatprep.subr.bf16.mxu0 0
        %3628 = vmatpush2.bf16.msra.mxu0 0
        %3629 = vmatprep.subr.bf16.mxu0 0
        %3630 = vmatpush2.bf16.msra.mxu0 0
        %3631 = vmatprep.subr.bf16.mxu0 0
        %3632 = vmatpush2.bf16.msra.mxu0 0
        %3633 = vmatprep.subr.bf16.mxu0 0
        %3634 = vmatpush2.bf16.msra.mxu0 0
        %3635 = vmatprep.subr.bf16.mxu0 0
        %3636 = vmatpush2.bf16.msra.mxu0 0
        %3637 = vmatprep.subr.bf16.mxu0 0
        %3638 = vmatpush2.bf16.msra.mxu0 0
        %3639 = vmatprep.mubr.bf16.mxu0 0
        %3640 = vmatmul.mubr.bf16.gmra.mxu0 %v3605
        %v3641 = vpop.f32.mrf.mxu0
        %v3642 = vadd.f32 %v3562, %v3641
        %v3643 = vpop.f32.mrf.mxu0
        %v3644 = vpop.f32.mrf.mxu0
        %v3645 = vadd.f32 %v3565, %v3644
        %v3646 = vpop.f32.mrf.mxu0
        %3647 = vdwg.mxu0
        %v3648 = vld [vmem:[%s55] sm:$0x1]
        %v3650 = vlaneseq
        %v3651 = vshrl.u32 %v3650, 7
        %v3652 = vsub.s32 0, %v3651
        %v3653 = vrot.slane %v3648, %v3652
        %v3655 = vadd.f32 %v3642, %v3653
        %v3656 = vadd.f32 %v3645, %v3653
        %v3657 = vmax.f32 %v3655, 0.0
        %v3658 = vmax.f32 %v3656, 0.0
        %v3659 = vld [vmem:[%s57] sm:$0x1]
        %v3661 = vlaneseq
        %v3662 = vshrl.u32 %v3661, 7
        %v3663 = vsub.s32 0, %v3662
        %v3664 = vrot.slane %v3659, %v3663
        %v3666 = vmul.f32 %v3657, %v3664
        %v3667 = vmul.f32 %v3658, %v3664
        %v3668 = vld [vmem:[%s59] sm:$0x1]
        %v3670 = vlaneseq
        %v3671 = vshrl.u32 %v3670, 7
        %v3672 = vsub.s32 0, %v3671
        %v3673 = vrot.slane %v3668, %v3672
        %v3675 = vadd.f32 %v3666, %v3673
        %v3676 = vadd.f32 %v3667, %v3673
        %v3677 = vstv %s1900
        %v3678 = vmul.f32 %v3677, %v3675
        %v3679 = vmul.f32 %v3677, %v3676
        %v3680 = vadd.f32 %v3485, %v3678
        %v3681 = vadd.f32 %v3486, %v3679
        %v3682 = vld [vmem:[%s61] sm:$0x7]
        %v3683 = vpack.c.bf16 %v3681, %v3680
        %v3684 = vld [vmem:[%s63] sm:$0x1f]
        %3686 = vset.pattern.permute.xlu0 0
        %3687 = vperm.xlu0 %3686, %v3684
        %v3688 = vpop.permute.xlu0 %3687
        %v3691 = vsel %vm1491, %v3682, 0
        %v3694 = vsel %vm1491, %v3683, 0
        %3696 = vmatprep.subr.bf16.mxu0 0
        %3697 = vmatpush1.bf16.xpose.msra.mxu0 0
        %3698 = vmatprep.subr.bf16.mxu0 0
        %3699 = vmatpush1.bf16.xpose.msra.mxu0 0
        %3700 = vmatprep.subr.bf16.mxu0 0
        %3701 = vmatpush1.bf16.xpose.msra.mxu0 0
        %3702 = vmatprep.subr.bf16.mxu0 0
        %3703 = vmatpush1.bf16.xpose.msra.mxu0 0
        %3704 = vmatprep.subr.bf16.mxu0 0
        %3705 = vmatpush1.bf16.xpose.msra.mxu0 0
        %3706 = vmatprep.subr.bf16.mxu0 0
        %3707 = vmatpush1.bf16.xpose.msra.mxu0 0
        %3708 = vmatprep.subr.bf16.mxu0 0
        %3709 = vmatpush1.bf16.xpose.msra.mxu0 0
        %3710 = vmatprep.subr.bf16.mxu0 0
        %3711 = vmatpush1.bf16.xpose.msra.mxu0 %v3694
        %3712 = vmatprep.subr.bf16.mxu0 0
        %3713 = vmatpush2.bf16.xpose.msra.mxu0 0
        %3714 = vmatprep.subr.bf16.mxu0 0
        %3715 = vmatpush2.bf16.xpose.msra.mxu0 0
        %3716 = vmatprep.subr.bf16.mxu0 0
        %3717 = vmatpush2.bf16.xpose.msra.mxu0 0
        %3718 = vmatprep.subr.bf16.mxu0 0
        %3719 = vmatpush2.bf16.xpose.msra.mxu0 0
        %3720 = vmatprep.subr.bf16.mxu0 0
        %3721 = vmatpush2.bf16.xpose.msra.mxu0 0
        %3722 = vmatprep.subr.bf16.mxu0 0
        %3723 = vmatpush2.bf16.xpose.msra.mxu0 0
        %3724 = vmatprep.subr.bf16.mxu0 0
        %3725 = vmatpush2.bf16.xpose.msra.mxu0 0
        %3726 = vmatprep.subr.bf16.mxu0 0
        %3727 = vmatpush2.bf16.xpose.msra.mxu0 0
        %3728 = vmatprep.mubr.bf16.mxu0 0
        %3729 = vmatmul.mubr.bf16.gmra.mxu0 %v3691
        %v3730 = vpop.f32.mrf.mxu0
        %v3731 = vadd.f32 %v3688, %v3730
        %v3732 = vpop.f32.mrf.mxu0
        %v3733 = vpop.f32.mrf.mxu0
        %v3734 = vpop.f32.mrf.mxu0
        %3735 = vdwg.mxu0
        %vm3736 = vcmask 126976
        %3737 = vst.msk [vmem:[%s1305] sm:$0x1f] %vm3736, %v3731
        %p3738 = scmp.lt.s32.totalorder %s94, 1
        %s3739 = scalar_select %p3738, %s94, 1
        %s3740 = smul.addr %s3739, 8
        %s3741 = scalar_lea.vmem %s69, %s3740
        // Predicated region
        $region221: #{tpu_custom_call.1} parent=155 // pred_check
          %p3742 = pneg %p841
        $region222: #{tpu_custom_call.1} parent=155 // pred_check_branch
          %3744 = sbr.rel (%p3742) target = $region224
        $region223: #{tpu_custom_call.1} parent=155 // pred_region
          _
        $region224: #{tpu_custom_call.1} parent=155 // pred_fallthru
          _
      $region156: #{tpu_custom_call.1} parent=5 // pred_fallthru
        _
      %p3745 = scmp.le.s32.totalorder 2, %s89
      // Predicated region
      $region225: #{tpu_custom_call.1} parent=5 // pred_check
        %p3746 = pneg %p3745
      $region226: #{tpu_custom_call.1} parent=5 // pred_check_branch
        %3748 = sbr.rel (%p3746) target = $region228
      $region227: #{tpu_custom_call.1} parent=5 // pred_region
        %s3749 = ssub.s32 %s89, 2
        // Predicated region
        $region229: #{tpu_custom_call.1} parent=227 // pred_check
          %p3750 = pneg %p847
        $region230: #{tpu_custom_call.1} parent=227 // pred_check_branch
          %3752 = sbr.rel (%p3750) target = $region232
        $region231: #{tpu_custom_call.1} parent=227 // pred_region
          %p3753 = scmp.lt.s32.totalorder %s95, 1
          %s3754 = scalar_select %p3753, %s95, 1
          %s3755 = smul.addr %s3754, 8
          %s3756 = scalar_lea.vmem %s69, %s3755
        $region232: #{tpu_custom_call.1} parent=227 // pred_fallthru
          _
      $region228: #{tpu_custom_call.1} parent=5 // pred_fallthru
        _
    $region6: #{tpu_custom_call.1} parent=1 // loop_footer
      %s93 = sadd.s32 1, %s89
    $region7: #{tpu_custom_call.1} parent=1 // loop_footer_branch
      %88 = sbr.rel target = $region3
    $region8: #{tpu_custom_call.1} parent=1 // loop_exit
      _
    %3757 = vsyncpa [#allocation4], 1
    %s3758 = scalar_lea.sflag [#allocation4], 1
    %3759 = vsyncpa %s3758, 1
    %3760 = vsyncpa [#allocation7], 1
    %s3761 = scalar_lea.sflag [#allocation7], 1
    %3762 = vsyncpa %s3761, 1
    %3763 = vsyncpa [#allocation10], 1
    %3764 = vsyncpa [#allocation13], 1
    %3765 = vsyncpa [#allocation16], 1
    %3766 = vsyncpa [#allocation19], 1
    %3767 = vsyncpa [#allocation22], 1
    %3768 = vsyncpa [#allocation25], 1
    %3769 = vsyncpa [#allocation5], 1
    %s3770 = scalar_lea.sflag [#allocation5], 1
    %3771 = vsyncpa %s3770, 1

</llo_original>
